<compile_context>
chip_gen: v7x
topology: tpu7x:2x2x1
jax: 0.10.0
libtpu: 0.0.40
codegen_flags: <defaults>
</compile_context>

<pallas_src>
import functools

import jax
import jax.numpy as jnp
import numpy as np
from jax.experimental import pallas as pl
from jax.experimental.pallas import tpu as pltpu


def _vision_proj_kernel(feats_ref, w_ref, b_ref, o_ref, *, inv_hw):
    """One grid step over an F-tile: full spatial pool + projection + bias + ReLU.

    Grid = (num_f_splits,); C and HW are NOT tiled (feature map is VMEM-resident).
      feats_ref: [B, C, HW]   (block index constant across the grid -> loaded once)
      w_ref:     [C, tn]      b_ref: [1, tn]      o_ref: [B, tn]
    """
    # Spatial mean over H*W (lane-axis reduce), accumulated in f32, scaled once.
    pooled = jnp.sum(feats_ref[...].astype(jnp.float32), axis=-1) * inv_hw  # [B, C]
    # Feed the MXU in the weight's native (bf16) dtype; accumulate in f32.
    pooled = pooled.astype(w_ref.dtype)
    out = jnp.dot(pooled, w_ref[...], preferred_element_type=jnp.float32)   # [B, tn]
    # Bias + ReLU.  Dropout(p=0.1) is identity at inference time.
    out = jnp.maximum(out + b_ref[...].astype(jnp.float32), 0.0)
    o_ref[...] = out.astype(o_ref.dtype)


def _default_f_splits(F):
    """2-way F split only on dual-TensorCore chips (v7x); single step otherwise."""
    try:
        kind = jax.devices()[0].device_kind.lower()
    except Exception:
        return 1
    if ("v7" in kind or "7x" in kind) and F % 2 == 0:
        return 2
    return 1


def vision_processor_forward(feats_nchw, w, b, *, num_f_splits=None,
                             weight_dtype=jnp.bfloat16, out_dtype=jnp.float32):
    """feats_nchw: [B, C, H, W] backbone feature map (NCHW).
    w: [C, F] projection weight (transposed nn.Linear weight).  b: [F] bias.
    Returns [B, F] visual features in `out_dtype` (ReLU(mean_pool(feats) @ W + b)).
    """
    B, C, H, W = feats_nchw.shape
    Cw, F = w.shape
    assert Cw == C, (Cw, C)
    HW = H * W

    if num_f_splits is None:
        num_f_splits = _default_f_splits(F)
    if F % num_f_splits != 0:
        num_f_splits = 1
    tn = F // num_f_splits

    # Free NCHW -> [B, C, HW] reshape (no transpose / HBM round-trip).
    feats = feats_nchw.reshape(B, C, HW)
    # bf16 weight halves the dominant HBM stream; accumulation stays f32.
    w_cast = w.astype(weight_dtype)
    b2d = b.reshape(1, F).astype(jnp.float32)

    kernel = functools.partial(_vision_proj_kernel, inv_hw=1.0 / float(HW))

    out_itemsize = jnp.dtype(out_dtype).itemsize
    cost = pl.CostEstimate(
        flops=2 * B * C * F + B * C * HW,
        transcendentals=0,
        bytes_accessed=(feats.size * feats.dtype.itemsize
                        + w_cast.size * w_cast.dtype.itemsize
                        + b2d.size * b2d.dtype.itemsize
                        + B * F * out_itemsize),
    )

    # VMEM guard: feats block (single-buffered in practice, constant index) plus
    # double-buffered weight / bias / output tiles; never below the 32 MiB default.
    vmem_needed = (feats.size * feats.dtype.itemsize
                   + 2 * C * tn * w_cast.dtype.itemsize
                   + 2 * tn * 4
                   + 2 * B * tn * out_itemsize
                   + (1 << 20))
    vmem_limit = int(min(64 << 20, max(32 << 20, vmem_needed)))

    return pl.pallas_call(
        kernel,
        out_shape=jax.ShapeDtypeStruct((B, F), out_dtype),
        grid_spec=pltpu.PrefetchScalarGridSpec(
            num_scalar_prefetch=0,
            grid=(num_f_splits,),
            in_specs=[
                # Whole feature map; block index constant across f -> resident.
                pl.BlockSpec((B, C, HW), lambda f: (0, 0, 0)),
                pl.BlockSpec((C, tn), lambda f: (0, f)),   # weight F-tile (bf16)
                pl.BlockSpec((1, tn), lambda f: (0, f)),   # bias F-tile
            ],
            out_specs=pl.BlockSpec((B, tn), lambda f: (0, f)),
        ),
        compiler_params=pltpu.CompilerParams(
            dimension_semantics=("parallel",),  # v7x: split F across both TCs
            vmem_limit_bytes=vmem_limit),
        cost_estimate=cost,
    )(feats, w_cast, b2d)


if __name__ == "__main__":
    # Shapes implied by the module: EfficientNet-b0 extract_features on a
    # 224x224 image -> [B, 1280, 7, 7]; Linear(1280 -> feature_dim=512).
    B, C, Hf, Wf = 2, 1280, 7, 7
    FEATURE_DIM = 512

    key = jax.random.PRNGKey(0)
    k_feat, k_w, k_b = jax.random.split(key, 3)

    # Synthetic (deterministic) backbone feature map stands in for
    # EfficientNet.extract_features output.  # TODO(synk): real EfficientNet-b0 backbone.
    feats = jax.random.normal(k_feat, (B, C, Hf, Wf), dtype=jnp.float32)

    # Deterministic nn.Linear-style init: U(-1/sqrt(C), 1/sqrt(C)).
    bound = 1.0 / np.sqrt(C)
    w = jax.random.uniform(k_w, (C, FEATURE_DIM), minval=-bound, maxval=bound,
                           dtype=jnp.float32)
    b = jax.random.uniform(k_b, (FEATURE_DIM,), minval=-bound, maxval=bound,
                           dtype=jnp.float32)

    out = vision_processor_forward(feats, w, b)
    out = jax.block_until_ready(out)

    # Pure-JAX (f32) reference of the same forward pass.
    pooled_ref = jnp.mean(feats, axis=(2, 3))
    ref = jnp.maximum(pooled_ref @ w + b, 0.0)

    assert out.shape == (B, FEATURE_DIM), out.shape
    # bf16 weight/activation into the MXU (f32 accumulation) -> looser tolerance.
    np.testing.assert_allclose(np.asarray(out), np.asarray(ref), rtol=2e-2, atol=1e-2)

    print("KERNEL_OK")
</pallas_src>

<mosaic_0001>
module attributes {stable_mosaic.version = 11 : i64} {
  func.func @_vision_proj_kernel(%arg0: i32, %arg1: memref<2x1280x49xf32, #tpu.memory_space<vmem>>, %arg2: memref<1280x512xbf16, #tpu.memory_space<vmem>>, %arg3: memref<1x512xf32, #tpu.memory_space<vmem>>, %arg4: memref<2x512xf32, #tpu.memory_space<vmem>>) attributes {dimension_semantics = [#tpu.dimension_semantics<parallel>], iteration_bounds = array<i64: 1>, scalar_prefetch = 0 : i64, scratch_operands = 0 : i64, tpu.core_type = #tpu.core_type<tc>, window_params = [{pipeline_mode = #tpu.pipeline_mode<synchronous>, transform_indices = @transform_0, window_bounds = array<i64: 2, 1280, 49>}, {transform_indices = @transform_1, window_bounds = array<i64: 1280, 512>}, {transform_indices = @transform_2, window_bounds = array<i64: 1, 512>}, {transform_indices = @transform_3, window_bounds = array<i64: 2, 512>}]} {
    %c0 = arith.constant 0 : index
    %c0_0 = arith.constant 0 : index
    %c0_1 = arith.constant 0 : index
    %0 = vector.load %arg1[%c0, %c0_0, %c0_1] : memref<2x1280x49xf32, #tpu.memory_space<vmem>>, vector<2x1280x49xf32>
    %cst = arith.constant dense<0.000000e+00> : vector<2x1280xf32>
    %1 = vector.multi_reduction <add>, %0, %cst [2] : vector<2x1280x49xf32> to vector<2x1280xf32>
    %cst_2 = arith.constant 0.0204081628 : f32
    %2 = vector.broadcast %cst_2 : f32 to vector<2x1280xf32>
    %3 = arith.mulf %1, %2 : vector<2x1280xf32>
    %4 = arith.truncf %3 : vector<2x1280xf32> to vector<2x1280xbf16>
    %c0_3 = arith.constant 0 : index
    %c0_4 = arith.constant 0 : index
    %5 = vector.load %arg2[%c0_3, %c0_4] : memref<1280x512xbf16, #tpu.memory_space<vmem>>, vector<1280x512xbf16>
    %cst_5 = arith.constant dense<0.000000e+00> : vector<2x512xf32>
    %6 = tpu.matmul %4, %5, %cst_5 {dimension_numbers = #tpu.dot_dimension_numbers<[1], [0], [0], [1], [0, 0, 1, 1], [], []>} : vector<2x1280xbf16>, vector<1280x512xbf16>, vector<2x512xf32> -> vector<2x512xf32>
    %c0_6 = arith.constant 0 : index
    %c0_7 = arith.constant 0 : index
    %7 = vector.load %arg3[%c0_6, %c0_7] : memref<1x512xf32, #tpu.memory_space<vmem>>, vector<1x512xf32>
    %8 = vector.broadcast %7 : vector<1x512xf32> to vector<2x512xf32>
    %9 = arith.addf %6, %8 : vector<2x512xf32>
    %cst_8 = arith.constant 0.000000e+00 : f32
    %10 = vector.broadcast %cst_8 : f32 to vector<2x512xf32>
    %11 = arith.maximumf %9, %10 : vector<2x512xf32>
    %c0_9 = arith.constant 0 : index
    %c0_10 = arith.constant 0 : index
    %12 = vector.load %arg4[%c0_9, %c0_10] : memref<2x512xf32, #tpu.memory_space<vmem>>, vector<2x512xf32>
    tpu.vector_store %arg4[%c0_9, %c0_10], %11 {strides = array<i32>} : memref<2x512xf32, #tpu.memory_space<vmem>>, vector<2x512xf32>,
    return
  }
  func.func @transform_0(%arg0: i32) -> (i32, i32, i32) {
    %c0_i32 = arith.constant 0 : i32
    %c0_i32_0 = arith.constant 0 : i32
    %c0_i32_1 = arith.constant 0 : i32
    %c0_i32_2 = arith.constant 0 : i32
    return %c0_i32, %c0_i32_0, %c0_i32_1 : i32, i32, i32
  }
  func.func @transform_1(%arg0: i32) -> (i32, i32) {
    %c0_i32 = arith.constant 0 : i32
    %c0_i32_0 = arith.constant 0 : i32
    return %c0_i32, %arg0 : i32, i32
  }
  func.func @transform_2(%arg0: i32) -> (i32, i32) {
    %c0_i32 = arith.constant 0 : i32
    %c0_i32_0 = arith.constant 0 : i32
    return %c0_i32, %arg0 : i32, i32
  }
  func.func @transform_3(%arg0: i32) -> (i32, i32) {
    %c0_i32 = arith.constant 0 : i32
    %c0_i32_0 = arith.constant 0 : i32
    return %c0_i32, %arg0 : i32, i32
  }
}

</mosaic_0001>

<llo_original>
// kernel: tpu_custom_call.1
$region0: #{tpu_custom_call.1}
  #allocation0 [shape = 'u32[]', space=smem, size = 0x4, offset = 0x4, fixed_abs, tag = 'smem constant byte address 0x4 - core index']
  #allocation1 [shape = 'u32[144,128]{1,0:T(1,128)}', space=vmem, size = 0x12000, scoped, tag = 'internal scratch']
  %s0 = inlined_call_operand.vmem [shape: f32[2,1280,49], index: 0, kind: input, shape index: {}]
  %s1 = inlined_call_operand.vmem [shape: bf16[1280,512], index: 1, kind: input, shape index: {}]
  %s2 = inlined_call_operand.vmem [shape: f32[1,512], index: 2, kind: input, shape index: {}]
  %s3 = inlined_call_operand.hbm [shape: f32[2,512], index: 3, kind: output, shape index: {}]
  %s4 = sld [smem:[#allocation0]]
  $region22: #{tpu_custom_call.1} parent=0
    _
  %s6 = ssub.s32 1, %s4
  %s7 = scalar_select 0, %s6, %s4
  $region1: #{tpu_custom_call.1} parent=0
    #allocation2 [shape = 'u8[4096]{0}', space=vmem, size = 0x1000, scoped, tag = 'output window, operand 0, single buffered']
    #allocation3 [shape = 's32[1]{0}', space=sflag, size = 0x4, scoped, tag = 'scoped memory for tpu_custom_call.1']
    %8 = vsyncpa [#allocation3], 0
    // Predicated region
    $region2: #{tpu_custom_call.1} parent=1 // pred_check
      _
    $region3: #{tpu_custom_call.1} parent=1 // pred_check_branch
      %10 = sbr.rel (0) target = $region5
    $region4: #{tpu_custom_call.1} parent=1 // pred_region
      _
    $region5: #{tpu_custom_call.1} parent=1 // pred_fallthru
      _
    // Predicated region
    $region6: #{tpu_custom_call.1} parent=1 // pred_check
      _
    $region7: #{tpu_custom_call.1} parent=1 // pred_check_branch
      %12 = sbr.rel (0) target = $region9
    $region8: #{tpu_custom_call.1} parent=1 // pred_region
      _
    $region9: #{tpu_custom_call.1} parent=1 // pred_fallthru
      _
    // Predicated region
    $region10: #{tpu_custom_call.1} parent=1 // pred_check
      _
    $region11: #{tpu_custom_call.1} parent=1 // pred_check_branch
      %14 = sbr.rel (0) target = $region13
    $region12: #{tpu_custom_call.1} parent=1 // pred_region
      _
    $region13: #{tpu_custom_call.1} parent=1 // pred_fallthru
      _
    %v15 = vld [vmem:[%s0] sm:$0xff]
    %v16 = vld [vmem:[%s0 + $0x8] sm:$0xff]
    %v17 = vld [vmem:[%s0 + $0x10] sm:$0xff]
    %v18 = vld [vmem:[%s0 + $0x18] sm:$0xff]
    %v19 = vld [vmem:[%s0 + $0x20] sm:$0xff]
    %v20 = vld [vmem:[%s0 + $0x28] sm:$0xff]
    %v21 = vld [vmem:[%s0 + $0x30] sm:$0xff]
    %v22 = vld [vmem:[%s0 + $0x38] sm:$0xff]
    %v23 = vld [vmem:[%s0 + $0x40] sm:$0xff]
    %v24 = vld [vmem:[%s0 + $0x48] sm:$0xff]
    %v25 = vld [vmem:[%s0 + $0x50] sm:$0xff]
    %v26 = vld [vmem:[%s0 + $0x58] sm:$0xff]
    %v27 = vld [vmem:[%s0 + $0x60] sm:$0xff]
    %v28 = vld [vmem:[%s0 + $0x68] sm:$0xff]
    %v29 = vld [vmem:[%s0 + $0x70] sm:$0xff]
    %v30 = vld [vmem:[%s0 + $0x78] sm:$0xff]
    %v31 = vld [vmem:[%s0 + $0x80] sm:$0xff]
    %v32 = vld [vmem:[%s0 + $0x88] sm:$0xff]
    %v33 = vld [vmem:[%s0 + $0x90] sm:$0xff]
    %v34 = vld [vmem:[%s0 + $0x98] sm:$0xff]
    %v35 = vld [vmem:[%s0 + $0xa0] sm:$0xff]
    %v36 = vld [vmem:[%s0 + $0xa8] sm:$0xff]
    %v37 = vld [vmem:[%s0 + $0xb0] sm:$0xff]
    %v38 = vld [vmem:[%s0 + $0xb8] sm:$0xff]
    %v39 = vld [vmem:[%s0 + $0xc0] sm:$0xff]
    %v40 = vld [vmem:[%s0 + $0xc8] sm:$0xff]
    %v41 = vld [vmem:[%s0 + $0xd0] sm:$0xff]
    %v42 = vld [vmem:[%s0 + $0xd8] sm:$0xff]
    %v43 = vld [vmem:[%s0 + $0xe0] sm:$0xff]
    %v44 = vld [vmem:[%s0 + $0xe8] sm:$0xff]
    %v45 = vld [vmem:[%s0 + $0xf0] sm:$0xff]
    %v46 = vld [vmem:[%s0 + $0xf8] sm:$0xff]
    %v47 = vld [vmem:[%s0 + $0x100] sm:$0xff]
    %v48 = vld [vmem:[%s0 + $0x108] sm:$0xff]
    %v49 = vld [vmem:[%s0 + $0x110] sm:$0xff]
    %v50 = vld [vmem:[%s0 + $0x118] sm:$0xff]
    %v51 = vld [vmem:[%s0 + $0x120] sm:$0xff]
    %v52 = vld [vmem:[%s0 + $0x128] sm:$0xff]
    %v53 = vld [vmem:[%s0 + $0x130] sm:$0xff]
    %v54 = vld [vmem:[%s0 + $0x138] sm:$0xff]
    %v55 = vld [vmem:[%s0 + $0x140] sm:$0xff]
    %v56 = vld [vmem:[%s0 + $0x148] sm:$0xff]
    %v57 = vld [vmem:[%s0 + $0x150] sm:$0xff]
    %v58 = vld [vmem:[%s0 + $0x158] sm:$0xff]
    %v59 = vld [vmem:[%s0 + $0x160] sm:$0xff]
    %v60 = vld [vmem:[%s0 + $0x168] sm:$0xff]
    %v61 = vld [vmem:[%s0 + $0x170] sm:$0xff]
    %v62 = vld [vmem:[%s0 + $0x178] sm:$0xff]
    %v63 = vld [vmem:[%s0 + $0x180] sm:$0xff]
    %v64 = vld [vmem:[%s0 + $0x188] sm:$0xff]
    %v65 = vld [vmem:[%s0 + $0x190] sm:$0xff]
    %v66 = vld [vmem:[%s0 + $0x198] sm:$0xff]
    %v67 = vld [vmem:[%s0 + $0x1a0] sm:$0xff]
    %v68 = vld [vmem:[%s0 + $0x1a8] sm:$0xff]
    %v69 = vld [vmem:[%s0 + $0x1b0] sm:$0xff]
    %v70 = vld [vmem:[%s0 + $0x1b8] sm:$0xff]
    %v71 = vld [vmem:[%s0 + $0x1c0] sm:$0xff]
    %v72 = vld [vmem:[%s0 + $0x1c8] sm:$0xff]
    %v73 = vld [vmem:[%s0 + $0x1d0] sm:$0xff]
    %v74 = vld [vmem:[%s0 + $0x1d8] sm:$0xff]
    %v75 = vld [vmem:[%s0 + $0x1e0] sm:$0xff]
    %v76 = vld [vmem:[%s0 + $0x1e8] sm:$0xff]
    %v77 = vld [vmem:[%s0 + $0x1f0] sm:$0xff]
    %v78 = vld [vmem:[%s0 + $0x1f8] sm:$0xff]
    %v79 = vld [vmem:[%s0 + $0x200] sm:$0xff]
    %v80 = vld [vmem:[%s0 + $0x208] sm:$0xff]
    %v81 = vld [vmem:[%s0 + $0x210] sm:$0xff]
    %v82 = vld [vmem:[%s0 + $0x218] sm:$0xff]
    %v83 = vld [vmem:[%s0 + $0x220] sm:$0xff]
    %v84 = vld [vmem:[%s0 + $0x228] sm:$0xff]
    %v85 = vld [vmem:[%s0 + $0x230] sm:$0xff]
    %v86 = vld [vmem:[%s0 + $0x238] sm:$0xff]
    %v87 = vld [vmem:[%s0 + $0x240] sm:$0xff]
    %v88 = vld [vmem:[%s0 + $0x248] sm:$0xff]
    %v89 = vld [vmem:[%s0 + $0x250] sm:$0xff]
    %v90 = vld [vmem:[%s0 + $0x258] sm:$0xff]
    %v91 = vld [vmem:[%s0 + $0x260] sm:$0xff]
    %v92 = vld [vmem:[%s0 + $0x268] sm:$0xff]
    %v93 = vld [vmem:[%s0 + $0x270] sm:$0xff]
    %v94 = vld [vmem:[%s0 + $0x278] sm:$0xff]
    %v95 = vld [vmem:[%s0 + $0x280] sm:$0xff]
    %v96 = vld [vmem:[%s0 + $0x288] sm:$0xff]
    %v97 = vld [vmem:[%s0 + $0x290] sm:$0xff]
    %v98 = vld [vmem:[%s0 + $0x298] sm:$0xff]
    %v99 = vld [vmem:[%s0 + $0x2a0] sm:$0xff]
    %v100 = vld [vmem:[%s0 + $0x2a8] sm:$0xff]
    %v101 = vld [vmem:[%s0 + $0x2b0] sm:$0xff]
    %v102 = vld [vmem:[%s0 + $0x2b8] sm:$0xff]
    %v103 = vld [vmem:[%s0 + $0x2c0] sm:$0xff]
    %v104 = vld [vmem:[%s0 + $0x2c8] sm:$0xff]
    %v105 = vld [vmem:[%s0 + $0x2d0] sm:$0xff]
    %v106 = vld [vmem:[%s0 + $0x2d8] sm:$0xff]
    %v107 = vld [vmem:[%s0 + $0x2e0] sm:$0xff]
    %v108 = vld [vmem:[%s0 + $0x2e8] sm:$0xff]
    %v109 = vld [vmem:[%s0 + $0x2f0] sm:$0xff]
    %v110 = vld [vmem:[%s0 + $0x2f8] sm:$0xff]
    %v111 = vld [vmem:[%s0 + $0x300] sm:$0xff]
    %v112 = vld [vmem:[%s0 + $0x308] sm:$0xff]
    %v113 = vld [vmem:[%s0 + $0x310] sm:$0xff]
    %v114 = vld [vmem:[%s0 + $0x318] sm:$0xff]
    %v115 = vld [vmem:[%s0 + $0x320] sm:$0xff]
    %v116 = vld [vmem:[%s0 + $0x328] sm:$0xff]
    %v117 = vld [vmem:[%s0 + $0x330] sm:$0xff]
    %v118 = vld [vmem:[%s0 + $0x338] sm:$0xff]
    %v119 = vld [vmem:[%s0 + $0x340] sm:$0xff]
    %v120 = vld [vmem:[%s0 + $0x348] sm:$0xff]
    %v121 = vld [vmem:[%s0 + $0x350] sm:$0xff]
    %v122 = vld [vmem:[%s0 + $0x358] sm:$0xff]
    %v123 = vld [vmem:[%s0 + $0x360] sm:$0xff]
    %v124 = vld [vmem:[%s0 + $0x368] sm:$0xff]
    %v125 = vld [vmem:[%s0 + $0x370] sm:$0xff]
    %v126 = vld [vmem:[%s0 + $0x378] sm:$0xff]
    %v127 = vld [vmem:[%s0 + $0x380] sm:$0xff]
    %v128 = vld [vmem:[%s0 + $0x388] sm:$0xff]
    %v129 = vld [vmem:[%s0 + $0x390] sm:$0xff]
    %v130 = vld [vmem:[%s0 + $0x398] sm:$0xff]
    %v131 = vld [vmem:[%s0 + $0x3a0] sm:$0xff]
    %v132 = vld [vmem:[%s0 + $0x3a8] sm:$0xff]
    %v133 = vld [vmem:[%s0 + $0x3b0] sm:$0xff]
    %v134 = vld [vmem:[%s0 + $0x3b8] sm:$0xff]
    %v135 = vld [vmem:[%s0 + $0x3c0] sm:$0xff]
    %v136 = vld [vmem:[%s0 + $0x3c8] sm:$0xff]
    %v137 = vld [vmem:[%s0 + $0x3d0] sm:$0xff]
    %v138 = vld [vmem:[%s0 + $0x3d8] sm:$0xff]
    %v139 = vld [vmem:[%s0 + $0x3e0] sm:$0xff]
    %v140 = vld [vmem:[%s0 + $0x3e8] sm:$0xff]
    %v141 = vld [vmem:[%s0 + $0x3f0] sm:$0xff]
    %v142 = vld [vmem:[%s0 + $0x3f8] sm:$0xff]
    %v143 = vld [vmem:[%s0 + $0x400] sm:$0xff]
    %v144 = vld [vmem:[%s0 + $0x408] sm:$0xff]
    %v145 = vld [vmem:[%s0 + $0x410] sm:$0xff]
    %v146 = vld [vmem:[%s0 + $0x418] sm:$0xff]
    %v147 = vld [vmem:[%s0 + $0x420] sm:$0xff]
    %v148 = vld [vmem:[%s0 + $0x428] sm:$0xff]
    %v149 = vld [vmem:[%s0 + $0x430] sm:$0xff]
    %v150 = vld [vmem:[%s0 + $0x438] sm:$0xff]
    %v151 = vld [vmem:[%s0 + $0x440] sm:$0xff]
    %v152 = vld [vmem:[%s0 + $0x448] sm:$0xff]
    %v153 = vld [vmem:[%s0 + $0x450] sm:$0xff]
    %v154 = vld [vmem:[%s0 + $0x458] sm:$0xff]
    %v155 = vld [vmem:[%s0 + $0x460] sm:$0xff]
    %v156 = vld [vmem:[%s0 + $0x468] sm:$0xff]
    %v157 = vld [vmem:[%s0 + $0x470] sm:$0xff]
    %v158 = vld [vmem:[%s0 + $0x478] sm:$0xff]
    %v159 = vld [vmem:[%s0 + $0x480] sm:$0xff]
    %v160 = vld [vmem:[%s0 + $0x488] sm:$0xff]
    %v161 = vld [vmem:[%s0 + $0x490] sm:$0xff]
    %v162 = vld [vmem:[%s0 + $0x498] sm:$0xff]
    %v163 = vld [vmem:[%s0 + $0x4a0] sm:$0xff]
    %v164 = vld [vmem:[%s0 + $0x4a8] sm:$0xff]
    %v165 = vld [vmem:[%s0 + $0x4b0] sm:$0xff]
    %v166 = vld [vmem:[%s0 + $0x4b8] sm:$0xff]
    %v167 = vld [vmem:[%s0 + $0x4c0] sm:$0xff]
    %v168 = vld [vmem:[%s0 + $0x4c8] sm:$0xff]
    %v169 = vld [vmem:[%s0 + $0x4d0] sm:$0xff]
    %v170 = vld [vmem:[%s0 + $0x4d8] sm:$0xff]
    %v171 = vld [vmem:[%s0 + $0x4e0] sm:$0xff]
    %v172 = vld [vmem:[%s0 + $0x4e8] sm:$0xff]
    %v173 = vld [vmem:[%s0 + $0x4f0] sm:$0xff]
    %v174 = vld [vmem:[%s0 + $0x4f8] sm:$0xff]
    %v175 = vld [vmem:[%s0 + $0x500] sm:$0xff]
    %v176 = vld [vmem:[%s0 + $0x508] sm:$0xff]
    %v177 = vld [vmem:[%s0 + $0x510] sm:$0xff]
    %v178 = vld [vmem:[%s0 + $0x518] sm:$0xff]
    %v179 = vld [vmem:[%s0 + $0x520] sm:$0xff]
    %v180 = vld [vmem:[%s0 + $0x528] sm:$0xff]
    %v181 = vld [vmem:[%s0 + $0x530] sm:$0xff]
    %v182 = vld [vmem:[%s0 + $0x538] sm:$0xff]
    %v183 = vld [vmem:[%s0 + $0x540] sm:$0xff]
    %v184 = vld [vmem:[%s0 + $0x548] sm:$0xff]
    %v185 = vld [vmem:[%s0 + $0x550] sm:$0xff]
    %v186 = vld [vmem:[%s0 + $0x558] sm:$0xff]
    %v187 = vld [vmem:[%s0 + $0x560] sm:$0xff]
    %v188 = vld [vmem:[%s0 + $0x568] sm:$0xff]
    %v189 = vld [vmem:[%s0 + $0x570] sm:$0xff]
    %v190 = vld [vmem:[%s0 + $0x578] sm:$0xff]
    %v191 = vld [vmem:[%s0 + $0x580] sm:$0xff]
    %v192 = vld [vmem:[%s0 + $0x588] sm:$0xff]
    %v193 = vld [vmem:[%s0 + $0x590] sm:$0xff]
    %v194 = vld [vmem:[%s0 + $0x598] sm:$0xff]
    %v195 = vld [vmem:[%s0 + $0x5a0] sm:$0xff]
    %v196 = vld [vmem:[%s0 + $0x5a8] sm:$0xff]
    %v197 = vld [vmem:[%s0 + $0x5b0] sm:$0xff]
    %v198 = vld [vmem:[%s0 + $0x5b8] sm:$0xff]
    %v199 = vld [vmem:[%s0 + $0x5c0] sm:$0xff]
    %v200 = vld [vmem:[%s0 + $0x5c8] sm:$0xff]
    %v201 = vld [vmem:[%s0 + $0x5d0] sm:$0xff]
    %v202 = vld [vmem:[%s0 + $0x5d8] sm:$0xff]
    %v203 = vld [vmem:[%s0 + $0x5e0] sm:$0xff]
    %v204 = vld [vmem:[%s0 + $0x5e8] sm:$0xff]
    %v205 = vld [vmem:[%s0 + $0x5f0] sm:$0xff]
    %v206 = vld [vmem:[%s0 + $0x5f8] sm:$0xff]
    %v207 = vld [vmem:[%s0 + $0x600] sm:$0xff]
    %v208 = vld [vmem:[%s0 + $0x608] sm:$0xff]
    %v209 = vld [vmem:[%s0 + $0x610] sm:$0xff]
    %v210 = vld [vmem:[%s0 + $0x618] sm:$0xff]
    %v211 = vld [vmem:[%s0 + $0x620] sm:$0xff]
    %v212 = vld [vmem:[%s0 + $0x628] sm:$0xff]
    %v213 = vld [vmem:[%s0 + $0x630] sm:$0xff]
    %v214 = vld [vmem:[%s0 + $0x638] sm:$0xff]
    %v215 = vld [vmem:[%s0 + $0x640] sm:$0xff]
    %v216 = vld [vmem:[%s0 + $0x648] sm:$0xff]
    %v217 = vld [vmem:[%s0 + $0x650] sm:$0xff]
    %v218 = vld [vmem:[%s0 + $0x658] sm:$0xff]
    %v219 = vld [vmem:[%s0 + $0x660] sm:$0xff]
    %v220 = vld [vmem:[%s0 + $0x668] sm:$0xff]
    %v221 = vld [vmem:[%s0 + $0x670] sm:$0xff]
    %v222 = vld [vmem:[%s0 + $0x678] sm:$0xff]
    %v223 = vld [vmem:[%s0 + $0x680] sm:$0xff]
    %v224 = vld [vmem:[%s0 + $0x688] sm:$0xff]
    %v225 = vld [vmem:[%s0 + $0x690] sm:$0xff]
    %v226 = vld [vmem:[%s0 + $0x698] sm:$0xff]
    %v227 = vld [vmem:[%s0 + $0x6a0] sm:$0xff]
    %v228 = vld [vmem:[%s0 + $0x6a8] sm:$0xff]
    %v229 = vld [vmem:[%s0 + $0x6b0] sm:$0xff]
    %v230 = vld [vmem:[%s0 + $0x6b8] sm:$0xff]
    %v231 = vld [vmem:[%s0 + $0x6c0] sm:$0xff]
    %v232 = vld [vmem:[%s0 + $0x6c8] sm:$0xff]
    %v233 = vld [vmem:[%s0 + $0x6d0] sm:$0xff]
    %v234 = vld [vmem:[%s0 + $0x6d8] sm:$0xff]
    %v235 = vld [vmem:[%s0 + $0x6e0] sm:$0xff]
    %v236 = vld [vmem:[%s0 + $0x6e8] sm:$0xff]
    %v237 = vld [vmem:[%s0 + $0x6f0] sm:$0xff]
    %v238 = vld [vmem:[%s0 + $0x6f8] sm:$0xff]
    %v239 = vld [vmem:[%s0 + $0x700] sm:$0xff]
    %v240 = vld [vmem:[%s0 + $0x708] sm:$0xff]
    %v241 = vld [vmem:[%s0 + $0x710] sm:$0xff]
    %v242 = vld [vmem:[%s0 + $0x718] sm:$0xff]
    %v243 = vld [vmem:[%s0 + $0x720] sm:$0xff]
    %v244 = vld [vmem:[%s0 + $0x728] sm:$0xff]
    %v245 = vld [vmem:[%s0 + $0x730] sm:$0xff]
    %v246 = vld [vmem:[%s0 + $0x738] sm:$0xff]
    %v247 = vld [vmem:[%s0 + $0x740] sm:$0xff]
    %v248 = vld [vmem:[%s0 + $0x748] sm:$0xff]
    %v249 = vld [vmem:[%s0 + $0x750] sm:$0xff]
    %v250 = vld [vmem:[%s0 + $0x758] sm:$0xff]
    %v251 = vld [vmem:[%s0 + $0x760] sm:$0xff]
    %v252 = vld [vmem:[%s0 + $0x768] sm:$0xff]
    %v253 = vld [vmem:[%s0 + $0x770] sm:$0xff]
    %v254 = vld [vmem:[%s0 + $0x778] sm:$0xff]
    %v255 = vld [vmem:[%s0 + $0x780] sm:$0xff]
    %v256 = vld [vmem:[%s0 + $0x788] sm:$0xff]
    %v257 = vld [vmem:[%s0 + $0x790] sm:$0xff]
    %v258 = vld [vmem:[%s0 + $0x798] sm:$0xff]
    %v259 = vld [vmem:[%s0 + $0x7a0] sm:$0xff]
    %v260 = vld [vmem:[%s0 + $0x7a8] sm:$0xff]
    %v261 = vld [vmem:[%s0 + $0x7b0] sm:$0xff]
    %v262 = vld [vmem:[%s0 + $0x7b8] sm:$0xff]
    %v263 = vld [vmem:[%s0 + $0x7c0] sm:$0xff]
    %v264 = vld [vmem:[%s0 + $0x7c8] sm:$0xff]
    %v265 = vld [vmem:[%s0 + $0x7d0] sm:$0xff]
    %v266 = vld [vmem:[%s0 + $0x7d8] sm:$0xff]
    %v267 = vld [vmem:[%s0 + $0x7e0] sm:$0xff]
    %v268 = vld [vmem:[%s0 + $0x7e8] sm:$0xff]
    %v269 = vld [vmem:[%s0 + $0x7f0] sm:$0xff]
    %v270 = vld [vmem:[%s0 + $0x7f8] sm:$0xff]
    %v271 = vld [vmem:[%s0 + $0x800] sm:$0xff]
    %v272 = vld [vmem:[%s0 + $0x808] sm:$0xff]
    %v273 = vld [vmem:[%s0 + $0x810] sm:$0xff]
    %v274 = vld [vmem:[%s0 + $0x818] sm:$0xff]
    %v275 = vld [vmem:[%s0 + $0x820] sm:$0xff]
    %v276 = vld [vmem:[%s0 + $0x828] sm:$0xff]
    %v277 = vld [vmem:[%s0 + $0x830] sm:$0xff]
    %v278 = vld [vmem:[%s0 + $0x838] sm:$0xff]
    %v279 = vld [vmem:[%s0 + $0x840] sm:$0xff]
    %v280 = vld [vmem:[%s0 + $0x848] sm:$0xff]
    %v281 = vld [vmem:[%s0 + $0x850] sm:$0xff]
    %v282 = vld [vmem:[%s0 + $0x858] sm:$0xff]
    %v283 = vld [vmem:[%s0 + $0x860] sm:$0xff]
    %v284 = vld [vmem:[%s0 + $0x868] sm:$0xff]
    %v285 = vld [vmem:[%s0 + $0x870] sm:$0xff]
    %v286 = vld [vmem:[%s0 + $0x878] sm:$0xff]
    %v287 = vld [vmem:[%s0 + $0x880] sm:$0xff]
    %v288 = vld [vmem:[%s0 + $0x888] sm:$0xff]
    %v289 = vld [vmem:[%s0 + $0x890] sm:$0xff]
    %v290 = vld [vmem:[%s0 + $0x898] sm:$0xff]
    %v291 = vld [vmem:[%s0 + $0x8a0] sm:$0xff]
    %v292 = vld [vmem:[%s0 + $0x8a8] sm:$0xff]
    %v293 = vld [vmem:[%s0 + $0x8b0] sm:$0xff]
    %v294 = vld [vmem:[%s0 + $0x8b8] sm:$0xff]
    %v295 = vld [vmem:[%s0 + $0x8c0] sm:$0xff]
    %v296 = vld [vmem:[%s0 + $0x8c8] sm:$0xff]
    %v297 = vld [vmem:[%s0 + $0x8d0] sm:$0xff]
    %v298 = vld [vmem:[%s0 + $0x8d8] sm:$0xff]
    %v299 = vld [vmem:[%s0 + $0x8e0] sm:$0xff]
    %v300 = vld [vmem:[%s0 + $0x8e8] sm:$0xff]
    %v301 = vld [vmem:[%s0 + $0x8f0] sm:$0xff]
    %v302 = vld [vmem:[%s0 + $0x8f8] sm:$0xff]
    %v303 = vld [vmem:[%s0 + $0x900] sm:$0xff]
    %v304 = vld [vmem:[%s0 + $0x908] sm:$0xff]
    %v305 = vld [vmem:[%s0 + $0x910] sm:$0xff]
    %v306 = vld [vmem:[%s0 + $0x918] sm:$0xff]
    %v307 = vld [vmem:[%s0 + $0x920] sm:$0xff]
    %v308 = vld [vmem:[%s0 + $0x928] sm:$0xff]
    %v309 = vld [vmem:[%s0 + $0x930] sm:$0xff]
    %v310 = vld [vmem:[%s0 + $0x938] sm:$0xff]
    %v311 = vld [vmem:[%s0 + $0x940] sm:$0xff]
    %v312 = vld [vmem:[%s0 + $0x948] sm:$0xff]
    %v313 = vld [vmem:[%s0 + $0x950] sm:$0xff]
    %v314 = vld [vmem:[%s0 + $0x958] sm:$0xff]
    %v315 = vld [vmem:[%s0 + $0x960] sm:$0xff]
    %v316 = vld [vmem:[%s0 + $0x968] sm:$0xff]
    %v317 = vld [vmem:[%s0 + $0x970] sm:$0xff]
    %v318 = vld [vmem:[%s0 + $0x978] sm:$0xff]
    %v319 = vld [vmem:[%s0 + $0x980] sm:$0xff]
    %v320 = vld [vmem:[%s0 + $0x988] sm:$0xff]
    %v321 = vld [vmem:[%s0 + $0x990] sm:$0xff]
    %v322 = vld [vmem:[%s0 + $0x998] sm:$0xff]
    %v323 = vld [vmem:[%s0 + $0x9a0] sm:$0xff]
    %v324 = vld [vmem:[%s0 + $0x9a8] sm:$0xff]
    %v325 = vld [vmem:[%s0 + $0x9b0] sm:$0xff]
    %v326 = vld [vmem:[%s0 + $0x9b8] sm:$0xff]
    %v327 = vld [vmem:[%s0 + $0x9c0] sm:$0xff]
    %v328 = vld [vmem:[%s0 + $0x9c8] sm:$0xff]
    %v329 = vld [vmem:[%s0 + $0x9d0] sm:$0xff]
    %v330 = vld [vmem:[%s0 + $0x9d8] sm:$0xff]
    %v331 = vld [vmem:[%s0 + $0x9e0] sm:$0xff]
    %v332 = vld [vmem:[%s0 + $0x9e8] sm:$0xff]
    %v333 = vld [vmem:[%s0 + $0x9f0] sm:$0xff]
    %v334 = vld [vmem:[%s0 + $0x9f8] sm:$0xff]
    %vm335 = vcmask 400384
    %v336 = vsel %vm335, %v15, 0.0
    %337 = vadd.xlane.f32.xlu0 %v336
    %v338 = vpop.xlane.xlu0 %337
    %v339 = vsel %vm335, %v16, 0.0
    %340 = vadd.xlane.f32.xlu0 %v339
    %v341 = vpop.xlane.xlu0 %340
    %v342 = vsel %vm335, %v17, 0.0
    %343 = vadd.xlane.f32.xlu0 %v342
    %v344 = vpop.xlane.xlu0 %343
    %v345 = vsel %vm335, %v18, 0.0
    %346 = vadd.xlane.f32.xlu0 %v345
    %v347 = vpop.xlane.xlu0 %346
    %v348 = vsel %vm335, %v19, 0.0
    %349 = vadd.xlane.f32.xlu0 %v348
    %v350 = vpop.xlane.xlu0 %349
    %v351 = vsel %vm335, %v20, 0.0
    %352 = vadd.xlane.f32.xlu0 %v351
    %v353 = vpop.xlane.xlu0 %352
    %v354 = vsel %vm335, %v21, 0.0
    %355 = vadd.xlane.f32.xlu0 %v354
    %v356 = vpop.xlane.xlu0 %355
    %v357 = vsel %vm335, %v22, 0.0
    %358 = vadd.xlane.f32.xlu0 %v357
    %v359 = vpop.xlane.xlu0 %358
    %v360 = vsel %vm335, %v23, 0.0
    %361 = vadd.xlane.f32.xlu0 %v360
    %v362 = vpop.xlane.xlu0 %361
    %v363 = vsel %vm335, %v24, 0.0
    %364 = vadd.xlane.f32.xlu0 %v363
    %v365 = vpop.xlane.xlu0 %364
    %v366 = vsel %vm335, %v25, 0.0
    %367 = vadd.xlane.f32.xlu0 %v366
    %v368 = vpop.xlane.xlu0 %367
    %v369 = vsel %vm335, %v26, 0.0
    %370 = vadd.xlane.f32.xlu0 %v369
    %v371 = vpop.xlane.xlu0 %370
    %v372 = vsel %vm335, %v27, 0.0
    %373 = vadd.xlane.f32.xlu0 %v372
    %v374 = vpop.xlane.xlu0 %373
    %v375 = vsel %vm335, %v28, 0.0
    %376 = vadd.xlane.f32.xlu0 %v375
    %v377 = vpop.xlane.xlu0 %376
    %v378 = vsel %vm335, %v29, 0.0
    %379 = vadd.xlane.f32.xlu0 %v378
    %v380 = vpop.xlane.xlu0 %379
    %v381 = vsel %vm335, %v30, 0.0
    %382 = vadd.xlane.f32.xlu0 %v381
    %v383 = vpop.xlane.xlu0 %382
    %v384 = vsel %vm335, %v31, 0.0
    %385 = vadd.xlane.f32.xlu0 %v384
    %v386 = vpop.xlane.xlu0 %385
    %v387 = vsel %vm335, %v32, 0.0
    %388 = vadd.xlane.f32.xlu0 %v387
    %v389 = vpop.xlane.xlu0 %388
    %v390 = vsel %vm335, %v33, 0.0
    %391 = vadd.xlane.f32.xlu0 %v390
    %v392 = vpop.xlane.xlu0 %391
    %v393 = vsel %vm335, %v34, 0.0
    %394 = vadd.xlane.f32.xlu0 %v393
    %v395 = vpop.xlane.xlu0 %394
    %v396 = vsel %vm335, %v35, 0.0
    %397 = vadd.xlane.f32.xlu0 %v396
    %v398 = vpop.xlane.xlu0 %397
    %v399 = vsel %vm335, %v36, 0.0
    %400 = vadd.xlane.f32.xlu0 %v399
    %v401 = vpop.xlane.xlu0 %400
    %v402 = vsel %vm335, %v37, 0.0
    %403 = vadd.xlane.f32.xlu0 %v402
    %v404 = vpop.xlane.xlu0 %403
    %v405 = vsel %vm335, %v38, 0.0
    %406 = vadd.xlane.f32.xlu0 %v405
    %v407 = vpop.xlane.xlu0 %406
    %v408 = vsel %vm335, %v39, 0.0
    %409 = vadd.xlane.f32.xlu0 %v408
    %v410 = vpop.xlane.xlu0 %409
    %v411 = vsel %vm335, %v40, 0.0
    %412 = vadd.xlane.f32.xlu0 %v411
    %v413 = vpop.xlane.xlu0 %412
    %v414 = vsel %vm335, %v41, 0.0
    %415 = vadd.xlane.f32.xlu0 %v414
    %v416 = vpop.xlane.xlu0 %415
    %v417 = vsel %vm335, %v42, 0.0
    %418 = vadd.xlane.f32.xlu0 %v417
    %v419 = vpop.xlane.xlu0 %418
    %v420 = vsel %vm335, %v43, 0.0
    %421 = vadd.xlane.f32.xlu0 %v420
    %v422 = vpop.xlane.xlu0 %421
    %v423 = vsel %vm335, %v44, 0.0
    %424 = vadd.xlane.f32.xlu0 %v423
    %v425 = vpop.xlane.xlu0 %424
    %v426 = vsel %vm335, %v45, 0.0
    %427 = vadd.xlane.f32.xlu0 %v426
    %v428 = vpop.xlane.xlu0 %427
    %v429 = vsel %vm335, %v46, 0.0
    %430 = vadd.xlane.f32.xlu0 %v429
    %v431 = vpop.xlane.xlu0 %430
    %v432 = vsel %vm335, %v47, 0.0
    %433 = vadd.xlane.f32.xlu0 %v432
    %v434 = vpop.xlane.xlu0 %433
    %v435 = vsel %vm335, %v48, 0.0
    %436 = vadd.xlane.f32.xlu0 %v435
    %v437 = vpop.xlane.xlu0 %436
    %v438 = vsel %vm335, %v49, 0.0
    %439 = vadd.xlane.f32.xlu0 %v438
    %v440 = vpop.xlane.xlu0 %439
    %v441 = vsel %vm335, %v50, 0.0
    %442 = vadd.xlane.f32.xlu0 %v441
    %v443 = vpop.xlane.xlu0 %442
    %v444 = vsel %vm335, %v51, 0.0
    %445 = vadd.xlane.f32.xlu0 %v444
    %v446 = vpop.xlane.xlu0 %445
    %v447 = vsel %vm335, %v52, 0.0
    %448 = vadd.xlane.f32.xlu0 %v447
    %v449 = vpop.xlane.xlu0 %448
    %v450 = vsel %vm335, %v53, 0.0
    %451 = vadd.xlane.f32.xlu0 %v450
    %v452 = vpop.xlane.xlu0 %451
    %v453 = vsel %vm335, %v54, 0.0
    %454 = vadd.xlane.f32.xlu0 %v453
    %v455 = vpop.xlane.xlu0 %454
    %v456 = vsel %vm335, %v55, 0.0
    %457 = vadd.xlane.f32.xlu0 %v456
    %v458 = vpop.xlane.xlu0 %457
    %v459 = vsel %vm335, %v56, 0.0
    %460 = vadd.xlane.f32.xlu0 %v459
    %v461 = vpop.xlane.xlu0 %460
    %v462 = vsel %vm335, %v57, 0.0
    %463 = vadd.xlane.f32.xlu0 %v462
    %v464 = vpop.xlane.xlu0 %463
    %v465 = vsel %vm335, %v58, 0.0
    %466 = vadd.xlane.f32.xlu0 %v465
    %v467 = vpop.xlane.xlu0 %466
    %v468 = vsel %vm335, %v59, 0.0
    %469 = vadd.xlane.f32.xlu0 %v468
    %v470 = vpop.xlane.xlu0 %469
    %v471 = vsel %vm335, %v60, 0.0
    %472 = vadd.xlane.f32.xlu0 %v471
    %v473 = vpop.xlane.xlu0 %472
    %v474 = vsel %vm335, %v61, 0.0
    %475 = vadd.xlane.f32.xlu0 %v474
    %v476 = vpop.xlane.xlu0 %475
    %v477 = vsel %vm335, %v62, 0.0
    %478 = vadd.xlane.f32.xlu0 %v477
    %v479 = vpop.xlane.xlu0 %478
    %v480 = vsel %vm335, %v63, 0.0
    %481 = vadd.xlane.f32.xlu0 %v480
    %v482 = vpop.xlane.xlu0 %481
    %v483 = vsel %vm335, %v64, 0.0
    %484 = vadd.xlane.f32.xlu0 %v483
    %v485 = vpop.xlane.xlu0 %484
    %v486 = vsel %vm335, %v65, 0.0
    %487 = vadd.xlane.f32.xlu0 %v486
    %v488 = vpop.xlane.xlu0 %487
    %v489 = vsel %vm335, %v66, 0.0
    %490 = vadd.xlane.f32.xlu0 %v489
    %v491 = vpop.xlane.xlu0 %490
    %v492 = vsel %vm335, %v67, 0.0
    %493 = vadd.xlane.f32.xlu0 %v492
    %v494 = vpop.xlane.xlu0 %493
    %v495 = vsel %vm335, %v68, 0.0
    %496 = vadd.xlane.f32.xlu0 %v495
    %v497 = vpop.xlane.xlu0 %496
    %v498 = vsel %vm335, %v69, 0.0
    %499 = vadd.xlane.f32.xlu0 %v498
    %v500 = vpop.xlane.xlu0 %499
    %v501 = vsel %vm335, %v70, 0.0
    %502 = vadd.xlane.f32.xlu0 %v501
    %v503 = vpop.xlane.xlu0 %502
    %v504 = vsel %vm335, %v71, 0.0
    %505 = vadd.xlane.f32.xlu0 %v504
    %v506 = vpop.xlane.xlu0 %505
    %v507 = vsel %vm335, %v72, 0.0
    %508 = vadd.xlane.f32.xlu0 %v507
    %v509 = vpop.xlane.xlu0 %508
    %v510 = vsel %vm335, %v73, 0.0
    %511 = vadd.xlane.f32.xlu0 %v510
    %v512 = vpop.xlane.xlu0 %511
    %v513 = vsel %vm335, %v74, 0.0
    %514 = vadd.xlane.f32.xlu0 %v513
    %v515 = vpop.xlane.xlu0 %514
    %v516 = vsel %vm335, %v75, 0.0
    %517 = vadd.xlane.f32.xlu0 %v516
    %v518 = vpop.xlane.xlu0 %517
    %v519 = vsel %vm335, %v76, 0.0
    %520 = vadd.xlane.f32.xlu0 %v519
    %v521 = vpop.xlane.xlu0 %520
    %v522 = vsel %vm335, %v77, 0.0
    %523 = vadd.xlane.f32.xlu0 %v522
    %v524 = vpop.xlane.xlu0 %523
    %v525 = vsel %vm335, %v78, 0.0
    %526 = vadd.xlane.f32.xlu0 %v525
    %v527 = vpop.xlane.xlu0 %526
    %v528 = vsel %vm335, %v79, 0.0
    %529 = vadd.xlane.f32.xlu0 %v528
    %v530 = vpop.xlane.xlu0 %529
    %v531 = vsel %vm335, %v80, 0.0
    %532 = vadd.xlane.f32.xlu0 %v531
    %v533 = vpop.xlane.xlu0 %532
    %v534 = vsel %vm335, %v81, 0.0
    %535 = vadd.xlane.f32.xlu0 %v534
    %v536 = vpop.xlane.xlu0 %535
    %v537 = vsel %vm335, %v82, 0.0
    %538 = vadd.xlane.f32.xlu0 %v537
    %v539 = vpop.xlane.xlu0 %538
    %v540 = vsel %vm335, %v83, 0.0
    %541 = vadd.xlane.f32.xlu0 %v540
    %v542 = vpop.xlane.xlu0 %541
    %v543 = vsel %vm335, %v84, 0.0
    %544 = vadd.xlane.f32.xlu0 %v543
    %v545 = vpop.xlane.xlu0 %544
    %v546 = vsel %vm335, %v85, 0.0
    %547 = vadd.xlane.f32.xlu0 %v546
    %v548 = vpop.xlane.xlu0 %547
    %v549 = vsel %vm335, %v86, 0.0
    %550 = vadd.xlane.f32.xlu0 %v549
    %v551 = vpop.xlane.xlu0 %550
    %v552 = vsel %vm335, %v87, 0.0
    %553 = vadd.xlane.f32.xlu0 %v552
    %v554 = vpop.xlane.xlu0 %553
    %v555 = vsel %vm335, %v88, 0.0
    %556 = vadd.xlane.f32.xlu0 %v555
    %v557 = vpop.xlane.xlu0 %556
    %v558 = vsel %vm335, %v89, 0.0
    %559 = vadd.xlane.f32.xlu0 %v558
    %v560 = vpop.xlane.xlu0 %559
    %v561 = vsel %vm335, %v90, 0.0
    %562 = vadd.xlane.f32.xlu0 %v561
    %v563 = vpop.xlane.xlu0 %562
    %v564 = vsel %vm335, %v91, 0.0
    %565 = vadd.xlane.f32.xlu0 %v564
    %v566 = vpop.xlane.xlu0 %565
    %v567 = vsel %vm335, %v92, 0.0
    %568 = vadd.xlane.f32.xlu0 %v567
    %v569 = vpop.xlane.xlu0 %568
    %v570 = vsel %vm335, %v93, 0.0
    %571 = vadd.xlane.f32.xlu0 %v570
    %v572 = vpop.xlane.xlu0 %571
    %v573 = vsel %vm335, %v94, 0.0
    %574 = vadd.xlane.f32.xlu0 %v573
    %v575 = vpop.xlane.xlu0 %574
    %v576 = vsel %vm335, %v95, 0.0
    %577 = vadd.xlane.f32.xlu0 %v576
    %v578 = vpop.xlane.xlu0 %577
    %v579 = vsel %vm335, %v96, 0.0
    %580 = vadd.xlane.f32.xlu0 %v579
    %v581 = vpop.xlane.xlu0 %580
    %v582 = vsel %vm335, %v97, 0.0
    %583 = vadd.xlane.f32.xlu0 %v582
    %v584 = vpop.xlane.xlu0 %583
    %v585 = vsel %vm335, %v98, 0.0
    %586 = vadd.xlane.f32.xlu0 %v585
    %v587 = vpop.xlane.xlu0 %586
    %v588 = vsel %vm335, %v99, 0.0
    %589 = vadd.xlane.f32.xlu0 %v588
    %v590 = vpop.xlane.xlu0 %589
    %v591 = vsel %vm335, %v100, 0.0
    %592 = vadd.xlane.f32.xlu0 %v591
    %v593 = vpop.xlane.xlu0 %592
    %v594 = vsel %vm335, %v101, 0.0
    %595 = vadd.xlane.f32.xlu0 %v594
    %v596 = vpop.xlane.xlu0 %595
    %v597 = vsel %vm335, %v102, 0.0
    %598 = vadd.xlane.f32.xlu0 %v597
    %v599 = vpop.xlane.xlu0 %598
    %v600 = vsel %vm335, %v103, 0.0
    %601 = vadd.xlane.f32.xlu0 %v600
    %v602 = vpop.xlane.xlu0 %601
    %v603 = vsel %vm335, %v104, 0.0
    %604 = vadd.xlane.f32.xlu0 %v603
    %v605 = vpop.xlane.xlu0 %604
    %v606 = vsel %vm335, %v105, 0.0
    %607 = vadd.xlane.f32.xlu0 %v606
    %v608 = vpop.xlane.xlu0 %607
    %v609 = vsel %vm335, %v106, 0.0
    %610 = vadd.xlane.f32.xlu0 %v609
    %v611 = vpop.xlane.xlu0 %610
    %v612 = vsel %vm335, %v107, 0.0
    %613 = vadd.xlane.f32.xlu0 %v612
    %v614 = vpop.xlane.xlu0 %613
    %v615 = vsel %vm335, %v108, 0.0
    %616 = vadd.xlane.f32.xlu0 %v615
    %v617 = vpop.xlane.xlu0 %616
    %v618 = vsel %vm335, %v109, 0.0
    %619 = vadd.xlane.f32.xlu0 %v618
    %v620 = vpop.xlane.xlu0 %619
    %v621 = vsel %vm335, %v110, 0.0
    %622 = vadd.xlane.f32.xlu0 %v621
    %v623 = vpop.xlane.xlu0 %622
    %v624 = vsel %vm335, %v111, 0.0
    %625 = vadd.xlane.f32.xlu0 %v624
    %v626 = vpop.xlane.xlu0 %625
    %v627 = vsel %vm335, %v112, 0.0
    %628 = vadd.xlane.f32.xlu0 %v627
    %v629 = vpop.xlane.xlu0 %628
    %v630 = vsel %vm335, %v113, 0.0
    %631 = vadd.xlane.f32.xlu0 %v630
    %v632 = vpop.xlane.xlu0 %631
    %v633 = vsel %vm335, %v114, 0.0
    %634 = vadd.xlane.f32.xlu0 %v633
    %v635 = vpop.xlane.xlu0 %634
    %v636 = vsel %vm335, %v115, 0.0
    %637 = vadd.xlane.f32.xlu0 %v636
    %v638 = vpop.xlane.xlu0 %637
    %v639 = vsel %vm335, %v116, 0.0
    %640 = vadd.xlane.f32.xlu0 %v639
    %v641 = vpop.xlane.xlu0 %640
    %v642 = vsel %vm335, %v117, 0.0
    %643 = vadd.xlane.f32.xlu0 %v642
    %v644 = vpop.xlane.xlu0 %643
    %v645 = vsel %vm335, %v118, 0.0
    %646 = vadd.xlane.f32.xlu0 %v645
    %v647 = vpop.xlane.xlu0 %646
    %v648 = vsel %vm335, %v119, 0.0
    %649 = vadd.xlane.f32.xlu0 %v648
    %v650 = vpop.xlane.xlu0 %649
    %v651 = vsel %vm335, %v120, 0.0
    %652 = vadd.xlane.f32.xlu0 %v651
    %v653 = vpop.xlane.xlu0 %652
    %v654 = vsel %vm335, %v121, 0.0
    %655 = vadd.xlane.f32.xlu0 %v654
    %v656 = vpop.xlane.xlu0 %655
    %v657 = vsel %vm335, %v122, 0.0
    %658 = vadd.xlane.f32.xlu0 %v657
    %v659 = vpop.xlane.xlu0 %658
    %v660 = vsel %vm335, %v123, 0.0
    %661 = vadd.xlane.f32.xlu0 %v660
    %v662 = vpop.xlane.xlu0 %661
    %v663 = vsel %vm335, %v124, 0.0
    %664 = vadd.xlane.f32.xlu0 %v663
    %v665 = vpop.xlane.xlu0 %664
    %v666 = vsel %vm335, %v125, 0.0
    %667 = vadd.xlane.f32.xlu0 %v666
    %v668 = vpop.xlane.xlu0 %667
    %v669 = vsel %vm335, %v126, 0.0
    %670 = vadd.xlane.f32.xlu0 %v669
    %v671 = vpop.xlane.xlu0 %670
    %v672 = vsel %vm335, %v127, 0.0
    %673 = vadd.xlane.f32.xlu0 %v672
    %v674 = vpop.xlane.xlu0 %673
    %v675 = vsel %vm335, %v128, 0.0
    %676 = vadd.xlane.f32.xlu0 %v675
    %v677 = vpop.xlane.xlu0 %676
    %v678 = vsel %vm335, %v129, 0.0
    %679 = vadd.xlane.f32.xlu0 %v678
    %v680 = vpop.xlane.xlu0 %679
    %v681 = vsel %vm335, %v130, 0.0
    %682 = vadd.xlane.f32.xlu0 %v681
    %v683 = vpop.xlane.xlu0 %682
    %v684 = vsel %vm335, %v131, 0.0
    %685 = vadd.xlane.f32.xlu0 %v684
    %v686 = vpop.xlane.xlu0 %685
    %v687 = vsel %vm335, %v132, 0.0
    %688 = vadd.xlane.f32.xlu0 %v687
    %v689 = vpop.xlane.xlu0 %688
    %v690 = vsel %vm335, %v133, 0.0
    %691 = vadd.xlane.f32.xlu0 %v690
    %v692 = vpop.xlane.xlu0 %691
    %v693 = vsel %vm335, %v134, 0.0
    %694 = vadd.xlane.f32.xlu0 %v693
    %v695 = vpop.xlane.xlu0 %694
    %v696 = vsel %vm335, %v135, 0.0
    %697 = vadd.xlane.f32.xlu0 %v696
    %v698 = vpop.xlane.xlu0 %697
    %v699 = vsel %vm335, %v136, 0.0
    %700 = vadd.xlane.f32.xlu0 %v699
    %v701 = vpop.xlane.xlu0 %700
    %v702 = vsel %vm335, %v137, 0.0
    %703 = vadd.xlane.f32.xlu0 %v702
    %v704 = vpop.xlane.xlu0 %703
    %v705 = vsel %vm335, %v138, 0.0
    %706 = vadd.xlane.f32.xlu0 %v705
    %v707 = vpop.xlane.xlu0 %706
    %v708 = vsel %vm335, %v139, 0.0
    %709 = vadd.xlane.f32.xlu0 %v708
    %v710 = vpop.xlane.xlu0 %709
    %v711 = vsel %vm335, %v140, 0.0
    %712 = vadd.xlane.f32.xlu0 %v711
    %v713 = vpop.xlane.xlu0 %712
    %v714 = vsel %vm335, %v141, 0.0
    %715 = vadd.xlane.f32.xlu0 %v714
    %v716 = vpop.xlane.xlu0 %715
    %v717 = vsel %vm335, %v142, 0.0
    %718 = vadd.xlane.f32.xlu0 %v717
    %v719 = vpop.xlane.xlu0 %718
    %v720 = vsel %vm335, %v143, 0.0
    %721 = vadd.xlane.f32.xlu0 %v720
    %v722 = vpop.xlane.xlu0 %721
    %v723 = vsel %vm335, %v144, 0.0
    %724 = vadd.xlane.f32.xlu0 %v723
    %v725 = vpop.xlane.xlu0 %724
    %v726 = vsel %vm335, %v145, 0.0
    %727 = vadd.xlane.f32.xlu0 %v726
    %v728 = vpop.xlane.xlu0 %727
    %v729 = vsel %vm335, %v146, 0.0
    %730 = vadd.xlane.f32.xlu0 %v729
    %v731 = vpop.xlane.xlu0 %730
    %v732 = vsel %vm335, %v147, 0.0
    %733 = vadd.xlane.f32.xlu0 %v732
    %v734 = vpop.xlane.xlu0 %733
    %v735 = vsel %vm335, %v148, 0.0
    %736 = vadd.xlane.f32.xlu0 %v735
    %v737 = vpop.xlane.xlu0 %736
    %v738 = vsel %vm335, %v149, 0.0
    %739 = vadd.xlane.f32.xlu0 %v738
    %v740 = vpop.xlane.xlu0 %739
    %v741 = vsel %vm335, %v150, 0.0
    %742 = vadd.xlane.f32.xlu0 %v741
    %v743 = vpop.xlane.xlu0 %742
    %v744 = vsel %vm335, %v151, 0.0
    %745 = vadd.xlane.f32.xlu0 %v744
    %v746 = vpop.xlane.xlu0 %745
    %v747 = vsel %vm335, %v152, 0.0
    %748 = vadd.xlane.f32.xlu0 %v747
    %v749 = vpop.xlane.xlu0 %748
    %v750 = vsel %vm335, %v153, 0.0
    %751 = vadd.xlane.f32.xlu0 %v750
    %v752 = vpop.xlane.xlu0 %751
    %v753 = vsel %vm335, %v154, 0.0
    %754 = vadd.xlane.f32.xlu0 %v753
    %v755 = vpop.xlane.xlu0 %754
    %v756 = vsel %vm335, %v155, 0.0
    %757 = vadd.xlane.f32.xlu0 %v756
    %v758 = vpop.xlane.xlu0 %757
    %v759 = vsel %vm335, %v156, 0.0
    %760 = vadd.xlane.f32.xlu0 %v759
    %v761 = vpop.xlane.xlu0 %760
    %v762 = vsel %vm335, %v157, 0.0
    %763 = vadd.xlane.f32.xlu0 %v762
    %v764 = vpop.xlane.xlu0 %763
    %v765 = vsel %vm335, %v158, 0.0
    %766 = vadd.xlane.f32.xlu0 %v765
    %v767 = vpop.xlane.xlu0 %766
    %v768 = vsel %vm335, %v159, 0.0
    %769 = vadd.xlane.f32.xlu0 %v768
    %v770 = vpop.xlane.xlu0 %769
    %v771 = vsel %vm335, %v160, 0.0
    %772 = vadd.xlane.f32.xlu0 %v771
    %v773 = vpop.xlane.xlu0 %772
    %v774 = vsel %vm335, %v161, 0.0
    %775 = vadd.xlane.f32.xlu0 %v774
    %v776 = vpop.xlane.xlu0 %775
    %v777 = vsel %vm335, %v162, 0.0
    %778 = vadd.xlane.f32.xlu0 %v777
    %v779 = vpop.xlane.xlu0 %778
    %v780 = vsel %vm335, %v163, 0.0
    %781 = vadd.xlane.f32.xlu0 %v780
    %v782 = vpop.xlane.xlu0 %781
    %v783 = vsel %vm335, %v164, 0.0
    %784 = vadd.xlane.f32.xlu0 %v783
    %v785 = vpop.xlane.xlu0 %784
    %v786 = vsel %vm335, %v165, 0.0
    %787 = vadd.xlane.f32.xlu0 %v786
    %v788 = vpop.xlane.xlu0 %787
    %v789 = vsel %vm335, %v166, 0.0
    %790 = vadd.xlane.f32.xlu0 %v789
    %v791 = vpop.xlane.xlu0 %790
    %v792 = vsel %vm335, %v167, 0.0
    %793 = vadd.xlane.f32.xlu0 %v792
    %v794 = vpop.xlane.xlu0 %793
    %v795 = vsel %vm335, %v168, 0.0
    %796 = vadd.xlane.f32.xlu0 %v795
    %v797 = vpop.xlane.xlu0 %796
    %v798 = vsel %vm335, %v169, 0.0
    %799 = vadd.xlane.f32.xlu0 %v798
    %v800 = vpop.xlane.xlu0 %799
    %v801 = vsel %vm335, %v170, 0.0
    %802 = vadd.xlane.f32.xlu0 %v801
    %v803 = vpop.xlane.xlu0 %802
    %v804 = vsel %vm335, %v171, 0.0
    %805 = vadd.xlane.f32.xlu0 %v804
    %v806 = vpop.xlane.xlu0 %805
    %v807 = vsel %vm335, %v172, 0.0
    %808 = vadd.xlane.f32.xlu0 %v807
    %v809 = vpop.xlane.xlu0 %808
    %v810 = vsel %vm335, %v173, 0.0
    %811 = vadd.xlane.f32.xlu0 %v810
    %v812 = vpop.xlane.xlu0 %811
    %v813 = vsel %vm335, %v174, 0.0
    %814 = vadd.xlane.f32.xlu0 %v813
    %v815 = vpop.xlane.xlu0 %814
    %v816 = vsel %vm335, %v175, 0.0
    %817 = vadd.xlane.f32.xlu0 %v816
    %v818 = vpop.xlane.xlu0 %817
    %v819 = vsel %vm335, %v176, 0.0
    %820 = vadd.xlane.f32.xlu0 %v819
    %v821 = vpop.xlane.xlu0 %820
    %v822 = vsel %vm335, %v177, 0.0
    %823 = vadd.xlane.f32.xlu0 %v822
    %v824 = vpop.xlane.xlu0 %823
    %v825 = vsel %vm335, %v178, 0.0
    %826 = vadd.xlane.f32.xlu0 %v825
    %v827 = vpop.xlane.xlu0 %826
    %v828 = vsel %vm335, %v179, 0.0
    %829 = vadd.xlane.f32.xlu0 %v828
    %v830 = vpop.xlane.xlu0 %829
    %v831 = vsel %vm335, %v180, 0.0
    %832 = vadd.xlane.f32.xlu0 %v831
    %v833 = vpop.xlane.xlu0 %832
    %v834 = vsel %vm335, %v181, 0.0
    %835 = vadd.xlane.f32.xlu0 %v834
    %v836 = vpop.xlane.xlu0 %835
    %v837 = vsel %vm335, %v182, 0.0
    %838 = vadd.xlane.f32.xlu0 %v837
    %v839 = vpop.xlane.xlu0 %838
    %v840 = vsel %vm335, %v183, 0.0
    %841 = vadd.xlane.f32.xlu0 %v840
    %v842 = vpop.xlane.xlu0 %841
    %v843 = vsel %vm335, %v184, 0.0
    %844 = vadd.xlane.f32.xlu0 %v843
    %v845 = vpop.xlane.xlu0 %844
    %v846 = vsel %vm335, %v185, 0.0
    %847 = vadd.xlane.f32.xlu0 %v846
    %v848 = vpop.xlane.xlu0 %847
    %v849 = vsel %vm335, %v186, 0.0
    %850 = vadd.xlane.f32.xlu0 %v849
    %v851 = vpop.xlane.xlu0 %850
    %v852 = vsel %vm335, %v187, 0.0
    %853 = vadd.xlane.f32.xlu0 %v852
    %v854 = vpop.xlane.xlu0 %853
    %v855 = vsel %vm335, %v188, 0.0
    %856 = vadd.xlane.f32.xlu0 %v855
    %v857 = vpop.xlane.xlu0 %856
    %v858 = vsel %vm335, %v189, 0.0
    %859 = vadd.xlane.f32.xlu0 %v858
    %v860 = vpop.xlane.xlu0 %859
    %v861 = vsel %vm335, %v190, 0.0
    %862 = vadd.xlane.f32.xlu0 %v861
    %v863 = vpop.xlane.xlu0 %862
    %v864 = vsel %vm335, %v191, 0.0
    %865 = vadd.xlane.f32.xlu0 %v864
    %v866 = vpop.xlane.xlu0 %865
    %v867 = vsel %vm335, %v192, 0.0
    %868 = vadd.xlane.f32.xlu0 %v867
    %v869 = vpop.xlane.xlu0 %868
    %v870 = vsel %vm335, %v193, 0.0
    %871 = vadd.xlane.f32.xlu0 %v870
    %v872 = vpop.xlane.xlu0 %871
    %v873 = vsel %vm335, %v194, 0.0
    %874 = vadd.xlane.f32.xlu0 %v873
    %v875 = vpop.xlane.xlu0 %874
    %v876 = vsel %vm335, %v195, 0.0
    %877 = vadd.xlane.f32.xlu0 %v876
    %v878 = vpop.xlane.xlu0 %877
    %v879 = vsel %vm335, %v196, 0.0
    %880 = vadd.xlane.f32.xlu0 %v879
    %v881 = vpop.xlane.xlu0 %880
    %v882 = vsel %vm335, %v197, 0.0
    %883 = vadd.xlane.f32.xlu0 %v882
    %v884 = vpop.xlane.xlu0 %883
    %v885 = vsel %vm335, %v198, 0.0
    %886 = vadd.xlane.f32.xlu0 %v885
    %v887 = vpop.xlane.xlu0 %886
    %v888 = vsel %vm335, %v199, 0.0
    %889 = vadd.xlane.f32.xlu0 %v888
    %v890 = vpop.xlane.xlu0 %889
    %v891 = vsel %vm335, %v200, 0.0
    %892 = vadd.xlane.f32.xlu0 %v891
    %v893 = vpop.xlane.xlu0 %892
    %v894 = vsel %vm335, %v201, 0.0
    %895 = vadd.xlane.f32.xlu0 %v894
    %v896 = vpop.xlane.xlu0 %895
    %v897 = vsel %vm335, %v202, 0.0
    %898 = vadd.xlane.f32.xlu0 %v897
    %v899 = vpop.xlane.xlu0 %898
    %v900 = vsel %vm335, %v203, 0.0
    %901 = vadd.xlane.f32.xlu0 %v900
    %v902 = vpop.xlane.xlu0 %901
    %v903 = vsel %vm335, %v204, 0.0
    %904 = vadd.xlane.f32.xlu0 %v903
    %v905 = vpop.xlane.xlu0 %904
    %v906 = vsel %vm335, %v205, 0.0
    %907 = vadd.xlane.f32.xlu0 %v906
    %v908 = vpop.xlane.xlu0 %907
    %v909 = vsel %vm335, %v206, 0.0
    %910 = vadd.xlane.f32.xlu0 %v909
    %v911 = vpop.xlane.xlu0 %910
    %v912 = vsel %vm335, %v207, 0.0
    %913 = vadd.xlane.f32.xlu0 %v912
    %v914 = vpop.xlane.xlu0 %913
    %v915 = vsel %vm335, %v208, 0.0
    %916 = vadd.xlane.f32.xlu0 %v915
    %v917 = vpop.xlane.xlu0 %916
    %v918 = vsel %vm335, %v209, 0.0
    %919 = vadd.xlane.f32.xlu0 %v918
    %v920 = vpop.xlane.xlu0 %919
    %v921 = vsel %vm335, %v210, 0.0
    %922 = vadd.xlane.f32.xlu0 %v921
    %v923 = vpop.xlane.xlu0 %922
    %v924 = vsel %vm335, %v211, 0.0
    %925 = vadd.xlane.f32.xlu0 %v924
    %v926 = vpop.xlane.xlu0 %925
    %v927 = vsel %vm335, %v212, 0.0
    %928 = vadd.xlane.f32.xlu0 %v927
    %v929 = vpop.xlane.xlu0 %928
    %v930 = vsel %vm335, %v213, 0.0
    %931 = vadd.xlane.f32.xlu0 %v930
    %v932 = vpop.xlane.xlu0 %931
    %v933 = vsel %vm335, %v214, 0.0
    %934 = vadd.xlane.f32.xlu0 %v933
    %v935 = vpop.xlane.xlu0 %934
    %v936 = vsel %vm335, %v215, 0.0
    %937 = vadd.xlane.f32.xlu0 %v936
    %v938 = vpop.xlane.xlu0 %937
    %v939 = vsel %vm335, %v216, 0.0
    %940 = vadd.xlane.f32.xlu0 %v939
    %v941 = vpop.xlane.xlu0 %940
    %v942 = vsel %vm335, %v217, 0.0
    %943 = vadd.xlane.f32.xlu0 %v942
    %v944 = vpop.xlane.xlu0 %943
    %v945 = vsel %vm335, %v218, 0.0
    %946 = vadd.xlane.f32.xlu0 %v945
    %v947 = vpop.xlane.xlu0 %946
    %v948 = vsel %vm335, %v219, 0.0
    %949 = vadd.xlane.f32.xlu0 %v948
    %v950 = vpop.xlane.xlu0 %949
    %v951 = vsel %vm335, %v220, 0.0
    %952 = vadd.xlane.f32.xlu0 %v951
    %v953 = vpop.xlane.xlu0 %952
    %v954 = vsel %vm335, %v221, 0.0
    %955 = vadd.xlane.f32.xlu0 %v954
    %v956 = vpop.xlane.xlu0 %955
    %v957 = vsel %vm335, %v222, 0.0
    %958 = vadd.xlane.f32.xlu0 %v957
    %v959 = vpop.xlane.xlu0 %958
    %v960 = vsel %vm335, %v223, 0.0
    %961 = vadd.xlane.f32.xlu0 %v960
    %v962 = vpop.xlane.xlu0 %961
    %v963 = vsel %vm335, %v224, 0.0
    %964 = vadd.xlane.f32.xlu0 %v963
    %v965 = vpop.xlane.xlu0 %964
    %v966 = vsel %vm335, %v225, 0.0
    %967 = vadd.xlane.f32.xlu0 %v966
    %v968 = vpop.xlane.xlu0 %967
    %v969 = vsel %vm335, %v226, 0.0
    %970 = vadd.xlane.f32.xlu0 %v969
    %v971 = vpop.xlane.xlu0 %970
    %v972 = vsel %vm335, %v227, 0.0
    %973 = vadd.xlane.f32.xlu0 %v972
    %v974 = vpop.xlane.xlu0 %973
    %v975 = vsel %vm335, %v228, 0.0
    %976 = vadd.xlane.f32.xlu0 %v975
    %v977 = vpop.xlane.xlu0 %976
    %v978 = vsel %vm335, %v229, 0.0
    %979 = vadd.xlane.f32.xlu0 %v978
    %v980 = vpop.xlane.xlu0 %979
    %v981 = vsel %vm335, %v230, 0.0
    %982 = vadd.xlane.f32.xlu0 %v981
    %v983 = vpop.xlane.xlu0 %982
    %v984 = vsel %vm335, %v231, 0.0
    %985 = vadd.xlane.f32.xlu0 %v984
    %v986 = vpop.xlane.xlu0 %985
    %v987 = vsel %vm335, %v232, 0.0
    %988 = vadd.xlane.f32.xlu0 %v987
    %v989 = vpop.xlane.xlu0 %988
    %v990 = vsel %vm335, %v233, 0.0
    %991 = vadd.xlane.f32.xlu0 %v990
    %v992 = vpop.xlane.xlu0 %991
    %v993 = vsel %vm335, %v234, 0.0
    %994 = vadd.xlane.f32.xlu0 %v993
    %v995 = vpop.xlane.xlu0 %994
    %v996 = vsel %vm335, %v235, 0.0
    %997 = vadd.xlane.f32.xlu0 %v996
    %v998 = vpop.xlane.xlu0 %997
    %v999 = vsel %vm335, %v236, 0.0
    %1000 = vadd.xlane.f32.xlu0 %v999
    %v1001 = vpop.xlane.xlu0 %1000
    %v1002 = vsel %vm335, %v237, 0.0
    %1003 = vadd.xlane.f32.xlu0 %v1002
    %v1004 = vpop.xlane.xlu0 %1003
    %v1005 = vsel %vm335, %v238, 0.0
    %1006 = vadd.xlane.f32.xlu0 %v1005
    %v1007 = vpop.xlane.xlu0 %1006
    %v1008 = vsel %vm335, %v239, 0.0
    %1009 = vadd.xlane.f32.xlu0 %v1008
    %v1010 = vpop.xlane.xlu0 %1009
    %v1011 = vsel %vm335, %v240, 0.0
    %1012 = vadd.xlane.f32.xlu0 %v1011
    %v1013 = vpop.xlane.xlu0 %1012
    %v1014 = vsel %vm335, %v241, 0.0
    %1015 = vadd.xlane.f32.xlu0 %v1014
    %v1016 = vpop.xlane.xlu0 %1015
    %v1017 = vsel %vm335, %v242, 0.0
    %1018 = vadd.xlane.f32.xlu0 %v1017
    %v1019 = vpop.xlane.xlu0 %1018
    %v1020 = vsel %vm335, %v243, 0.0
    %1021 = vadd.xlane.f32.xlu0 %v1020
    %v1022 = vpop.xlane.xlu0 %1021
    %v1023 = vsel %vm335, %v244, 0.0
    %1024 = vadd.xlane.f32.xlu0 %v1023
    %v1025 = vpop.xlane.xlu0 %1024
    %v1026 = vsel %vm335, %v245, 0.0
    %1027 = vadd.xlane.f32.xlu0 %v1026
    %v1028 = vpop.xlane.xlu0 %1027
    %v1029 = vsel %vm335, %v246, 0.0
    %1030 = vadd.xlane.f32.xlu0 %v1029
    %v1031 = vpop.xlane.xlu0 %1030
    %v1032 = vsel %vm335, %v247, 0.0
    %1033 = vadd.xlane.f32.xlu0 %v1032
    %v1034 = vpop.xlane.xlu0 %1033
    %v1035 = vsel %vm335, %v248, 0.0
    %1036 = vadd.xlane.f32.xlu0 %v1035
    %v1037 = vpop.xlane.xlu0 %1036
    %v1038 = vsel %vm335, %v249, 0.0
    %1039 = vadd.xlane.f32.xlu0 %v1038
    %v1040 = vpop.xlane.xlu0 %1039
    %v1041 = vsel %vm335, %v250, 0.0
    %1042 = vadd.xlane.f32.xlu0 %v1041
    %v1043 = vpop.xlane.xlu0 %1042
    %v1044 = vsel %vm335, %v251, 0.0
    %1045 = vadd.xlane.f32.xlu0 %v1044
    %v1046 = vpop.xlane.xlu0 %1045
    %v1047 = vsel %vm335, %v252, 0.0
    %1048 = vadd.xlane.f32.xlu0 %v1047
    %v1049 = vpop.xlane.xlu0 %1048
    %v1050 = vsel %vm335, %v253, 0.0
    %1051 = vadd.xlane.f32.xlu0 %v1050
    %v1052 = vpop.xlane.xlu0 %1051
    %v1053 = vsel %vm335, %v254, 0.0
    %1054 = vadd.xlane.f32.xlu0 %v1053
    %v1055 = vpop.xlane.xlu0 %1054
    %v1056 = vsel %vm335, %v255, 0.0
    %1057 = vadd.xlane.f32.xlu0 %v1056
    %v1058 = vpop.xlane.xlu0 %1057
    %v1059 = vsel %vm335, %v256, 0.0
    %1060 = vadd.xlane.f32.xlu0 %v1059
    %v1061 = vpop.xlane.xlu0 %1060
    %v1062 = vsel %vm335, %v257, 0.0
    %1063 = vadd.xlane.f32.xlu0 %v1062
    %v1064 = vpop.xlane.xlu0 %1063
    %v1065 = vsel %vm335, %v258, 0.0
    %1066 = vadd.xlane.f32.xlu0 %v1065
    %v1067 = vpop.xlane.xlu0 %1066
    %v1068 = vsel %vm335, %v259, 0.0
    %1069 = vadd.xlane.f32.xlu0 %v1068
    %v1070 = vpop.xlane.xlu0 %1069
    %v1071 = vsel %vm335, %v260, 0.0
    %1072 = vadd.xlane.f32.xlu0 %v1071
    %v1073 = vpop.xlane.xlu0 %1072
    %v1074 = vsel %vm335, %v261, 0.0
    %1075 = vadd.xlane.f32.xlu0 %v1074
    %v1076 = vpop.xlane.xlu0 %1075
    %v1077 = vsel %vm335, %v262, 0.0
    %1078 = vadd.xlane.f32.xlu0 %v1077
    %v1079 = vpop.xlane.xlu0 %1078
    %v1080 = vsel %vm335, %v263, 0.0
    %1081 = vadd.xlane.f32.xlu0 %v1080
    %v1082 = vpop.xlane.xlu0 %1081
    %v1083 = vsel %vm335, %v264, 0.0
    %1084 = vadd.xlane.f32.xlu0 %v1083
    %v1085 = vpop.xlane.xlu0 %1084
    %v1086 = vsel %vm335, %v265, 0.0
    %1087 = vadd.xlane.f32.xlu0 %v1086
    %v1088 = vpop.xlane.xlu0 %1087
    %v1089 = vsel %vm335, %v266, 0.0
    %1090 = vadd.xlane.f32.xlu0 %v1089
    %v1091 = vpop.xlane.xlu0 %1090
    %v1092 = vsel %vm335, %v267, 0.0
    %1093 = vadd.xlane.f32.xlu0 %v1092
    %v1094 = vpop.xlane.xlu0 %1093
    %v1095 = vsel %vm335, %v268, 0.0
    %1096 = vadd.xlane.f32.xlu0 %v1095
    %v1097 = vpop.xlane.xlu0 %1096
    %v1098 = vsel %vm335, %v269, 0.0
    %1099 = vadd.xlane.f32.xlu0 %v1098
    %v1100 = vpop.xlane.xlu0 %1099
    %v1101 = vsel %vm335, %v270, 0.0
    %1102 = vadd.xlane.f32.xlu0 %v1101
    %v1103 = vpop.xlane.xlu0 %1102
    %v1104 = vsel %vm335, %v271, 0.0
    %1105 = vadd.xlane.f32.xlu0 %v1104
    %v1106 = vpop.xlane.xlu0 %1105
    %v1107 = vsel %vm335, %v272, 0.0
    %1108 = vadd.xlane.f32.xlu0 %v1107
    %v1109 = vpop.xlane.xlu0 %1108
    %v1110 = vsel %vm335, %v273, 0.0
    %1111 = vadd.xlane.f32.xlu0 %v1110
    %v1112 = vpop.xlane.xlu0 %1111
    %v1113 = vsel %vm335, %v274, 0.0
    %1114 = vadd.xlane.f32.xlu0 %v1113
    %v1115 = vpop.xlane.xlu0 %1114
    %v1116 = vsel %vm335, %v275, 0.0
    %1117 = vadd.xlane.f32.xlu0 %v1116
    %v1118 = vpop.xlane.xlu0 %1117
    %v1119 = vsel %vm335, %v276, 0.0
    %1120 = vadd.xlane.f32.xlu0 %v1119
    %v1121 = vpop.xlane.xlu0 %1120
    %v1122 = vsel %vm335, %v277, 0.0
    %1123 = vadd.xlane.f32.xlu0 %v1122
    %v1124 = vpop.xlane.xlu0 %1123
    %v1125 = vsel %vm335, %v278, 0.0
    %1126 = vadd.xlane.f32.xlu0 %v1125
    %v1127 = vpop.xlane.xlu0 %1126
    %v1128 = vsel %vm335, %v279, 0.0
    %1129 = vadd.xlane.f32.xlu0 %v1128
    %v1130 = vpop.xlane.xlu0 %1129
    %v1131 = vsel %vm335, %v280, 0.0
    %1132 = vadd.xlane.f32.xlu0 %v1131
    %v1133 = vpop.xlane.xlu0 %1132
    %v1134 = vsel %vm335, %v281, 0.0
    %1135 = vadd.xlane.f32.xlu0 %v1134
    %v1136 = vpop.xlane.xlu0 %1135
    %v1137 = vsel %vm335, %v282, 0.0
    %1138 = vadd.xlane.f32.xlu0 %v1137
    %v1139 = vpop.xlane.xlu0 %1138
    %v1140 = vsel %vm335, %v283, 0.0
    %1141 = vadd.xlane.f32.xlu0 %v1140
    %v1142 = vpop.xlane.xlu0 %1141
    %v1143 = vsel %vm335, %v284, 0.0
    %1144 = vadd.xlane.f32.xlu0 %v1143
    %v1145 = vpop.xlane.xlu0 %1144
    %v1146 = vsel %vm335, %v285, 0.0
    %1147 = vadd.xlane.f32.xlu0 %v1146
    %v1148 = vpop.xlane.xlu0 %1147
    %v1149 = vsel %vm335, %v286, 0.0
    %1150 = vadd.xlane.f32.xlu0 %v1149
    %v1151 = vpop.xlane.xlu0 %1150
    %v1152 = vsel %vm335, %v287, 0.0
    %1153 = vadd.xlane.f32.xlu0 %v1152
    %v1154 = vpop.xlane.xlu0 %1153
    %v1155 = vsel %vm335, %v288, 0.0
    %1156 = vadd.xlane.f32.xlu0 %v1155
    %v1157 = vpop.xlane.xlu0 %1156
    %v1158 = vsel %vm335, %v289, 0.0
    %1159 = vadd.xlane.f32.xlu0 %v1158
    %v1160 = vpop.xlane.xlu0 %1159
    %v1161 = vsel %vm335, %v290, 0.0
    %1162 = vadd.xlane.f32.xlu0 %v1161
    %v1163 = vpop.xlane.xlu0 %1162
    %v1164 = vsel %vm335, %v291, 0.0
    %1165 = vadd.xlane.f32.xlu0 %v1164
    %v1166 = vpop.xlane.xlu0 %1165
    %v1167 = vsel %vm335, %v292, 0.0
    %1168 = vadd.xlane.f32.xlu0 %v1167
    %v1169 = vpop.xlane.xlu0 %1168
    %v1170 = vsel %vm335, %v293, 0.0
    %1171 = vadd.xlane.f32.xlu0 %v1170
    %v1172 = vpop.xlane.xlu0 %1171
    %v1173 = vsel %vm335, %v294, 0.0
    %1174 = vadd.xlane.f32.xlu0 %v1173
    %v1175 = vpop.xlane.xlu0 %1174
    %v1176 = vsel %vm335, %v295, 0.0
    %1177 = vadd.xlane.f32.xlu0 %v1176
    %v1178 = vpop.xlane.xlu0 %1177
    %v1179 = vsel %vm335, %v296, 0.0
    %1180 = vadd.xlane.f32.xlu0 %v1179
    %v1181 = vpop.xlane.xlu0 %1180
    %v1182 = vsel %vm335, %v297, 0.0
    %1183 = vadd.xlane.f32.xlu0 %v1182
    %v1184 = vpop.xlane.xlu0 %1183
    %v1185 = vsel %vm335, %v298, 0.0
    %1186 = vadd.xlane.f32.xlu0 %v1185
    %v1187 = vpop.xlane.xlu0 %1186
    %v1188 = vsel %vm335, %v299, 0.0
    %1189 = vadd.xlane.f32.xlu0 %v1188
    %v1190 = vpop.xlane.xlu0 %1189
    %v1191 = vsel %vm335, %v300, 0.0
    %1192 = vadd.xlane.f32.xlu0 %v1191
    %v1193 = vpop.xlane.xlu0 %1192
    %v1194 = vsel %vm335, %v301, 0.0
    %1195 = vadd.xlane.f32.xlu0 %v1194
    %v1196 = vpop.xlane.xlu0 %1195
    %v1197 = vsel %vm335, %v302, 0.0
    %1198 = vadd.xlane.f32.xlu0 %v1197
    %v1199 = vpop.xlane.xlu0 %1198
    %v1200 = vsel %vm335, %v303, 0.0
    %1201 = vadd.xlane.f32.xlu0 %v1200
    %v1202 = vpop.xlane.xlu0 %1201
    %v1203 = vsel %vm335, %v304, 0.0
    %1204 = vadd.xlane.f32.xlu0 %v1203
    %v1205 = vpop.xlane.xlu0 %1204
    %v1206 = vsel %vm335, %v305, 0.0
    %1207 = vadd.xlane.f32.xlu0 %v1206
    %v1208 = vpop.xlane.xlu0 %1207
    %v1209 = vsel %vm335, %v306, 0.0
    %1210 = vadd.xlane.f32.xlu0 %v1209
    %v1211 = vpop.xlane.xlu0 %1210
    %v1212 = vsel %vm335, %v307, 0.0
    %1213 = vadd.xlane.f32.xlu0 %v1212
    %v1214 = vpop.xlane.xlu0 %1213
    %v1215 = vsel %vm335, %v308, 0.0
    %1216 = vadd.xlane.f32.xlu0 %v1215
    %v1217 = vpop.xlane.xlu0 %1216
    %v1218 = vsel %vm335, %v309, 0.0
    %1219 = vadd.xlane.f32.xlu0 %v1218
    %v1220 = vpop.xlane.xlu0 %1219
    %v1221 = vsel %vm335, %v310, 0.0
    %1222 = vadd.xlane.f32.xlu0 %v1221
    %v1223 = vpop.xlane.xlu0 %1222
    %v1224 = vsel %vm335, %v311, 0.0
    %1225 = vadd.xlane.f32.xlu0 %v1224
    %v1226 = vpop.xlane.xlu0 %1225
    %v1227 = vsel %vm335, %v312, 0.0
    %1228 = vadd.xlane.f32.xlu0 %v1227
    %v1229 = vpop.xlane.xlu0 %1228
    %v1230 = vsel %vm335, %v313, 0.0
    %1231 = vadd.xlane.f32.xlu0 %v1230
    %v1232 = vpop.xlane.xlu0 %1231
    %v1233 = vsel %vm335, %v314, 0.0
    %1234 = vadd.xlane.f32.xlu0 %v1233
    %v1235 = vpop.xlane.xlu0 %1234
    %v1236 = vsel %vm335, %v315, 0.0
    %1237 = vadd.xlane.f32.xlu0 %v1236
    %v1238 = vpop.xlane.xlu0 %1237
    %v1239 = vsel %vm335, %v316, 0.0
    %1240 = vadd.xlane.f32.xlu0 %v1239
    %v1241 = vpop.xlane.xlu0 %1240
    %v1242 = vsel %vm335, %v317, 0.0
    %1243 = vadd.xlane.f32.xlu0 %v1242
    %v1244 = vpop.xlane.xlu0 %1243
    %v1245 = vsel %vm335, %v318, 0.0
    %1246 = vadd.xlane.f32.xlu0 %v1245
    %v1247 = vpop.xlane.xlu0 %1246
    %v1248 = vsel %vm335, %v319, 0.0
    %1249 = vadd.xlane.f32.xlu0 %v1248
    %v1250 = vpop.xlane.xlu0 %1249
    %v1251 = vsel %vm335, %v320, 0.0
    %1252 = vadd.xlane.f32.xlu0 %v1251
    %v1253 = vpop.xlane.xlu0 %1252
    %v1254 = vsel %vm335, %v321, 0.0
    %1255 = vadd.xlane.f32.xlu0 %v1254
    %v1256 = vpop.xlane.xlu0 %1255
    %v1257 = vsel %vm335, %v322, 0.0
    %1258 = vadd.xlane.f32.xlu0 %v1257
    %v1259 = vpop.xlane.xlu0 %1258
    %v1260 = vsel %vm335, %v323, 0.0
    %1261 = vadd.xlane.f32.xlu0 %v1260
    %v1262 = vpop.xlane.xlu0 %1261
    %v1263 = vsel %vm335, %v324, 0.0
    %1264 = vadd.xlane.f32.xlu0 %v1263
    %v1265 = vpop.xlane.xlu0 %1264
    %v1266 = vsel %vm335, %v325, 0.0
    %1267 = vadd.xlane.f32.xlu0 %v1266
    %v1268 = vpop.xlane.xlu0 %1267
    %v1269 = vsel %vm335, %v326, 0.0
    %1270 = vadd.xlane.f32.xlu0 %v1269
    %v1271 = vpop.xlane.xlu0 %1270
    %v1272 = vsel %vm335, %v327, 0.0
    %1273 = vadd.xlane.f32.xlu0 %v1272
    %v1274 = vpop.xlane.xlu0 %1273
    %v1275 = vsel %vm335, %v328, 0.0
    %1276 = vadd.xlane.f32.xlu0 %v1275
    %v1277 = vpop.xlane.xlu0 %1276
    %v1278 = vsel %vm335, %v329, 0.0
    %1279 = vadd.xlane.f32.xlu0 %v1278
    %v1280 = vpop.xlane.xlu0 %1279
    %v1281 = vsel %vm335, %v330, 0.0
    %1282 = vadd.xlane.f32.xlu0 %v1281
    %v1283 = vpop.xlane.xlu0 %1282
    %v1284 = vsel %vm335, %v331, 0.0
    %1285 = vadd.xlane.f32.xlu0 %v1284
    %v1286 = vpop.xlane.xlu0 %1285
    %v1287 = vsel %vm335, %v332, 0.0
    %1288 = vadd.xlane.f32.xlu0 %v1287
    %v1289 = vpop.xlane.xlu0 %1288
    %v1290 = vsel %vm335, %v333, 0.0
    %1291 = vadd.xlane.f32.xlu0 %v1290
    %v1292 = vpop.xlane.xlu0 %1291
    %v1293 = vsel %vm335, %v334, 0.0
    %1294 = vadd.xlane.f32.xlu0 %v1293
    %v1295 = vpop.xlane.xlu0 %1294
    %v1296 = vmul.f32 %v338, 0.020408163
    %v1297 = vmul.f32 %v341, 0.020408163
    %v1298 = vmul.f32 %v344, 0.020408163
    %v1299 = vmul.f32 %v347, 0.020408163
    %v1300 = vmul.f32 %v350, 0.020408163
    %v1301 = vmul.f32 %v353, 0.020408163
    %v1302 = vmul.f32 %v356, 0.020408163
    %v1303 = vmul.f32 %v359, 0.020408163
    %v1304 = vmul.f32 %v362, 0.020408163
    %v1305 = vmul.f32 %v365, 0.020408163
    %v1306 = vmul.f32 %v368, 0.020408163
    %v1307 = vmul.f32 %v371, 0.020408163
    %v1308 = vmul.f32 %v374, 0.020408163
    %v1309 = vmul.f32 %v377, 0.020408163
    %v1310 = vmul.f32 %v380, 0.020408163
    %v1311 = vmul.f32 %v383, 0.020408163
    %v1312 = vmul.f32 %v386, 0.020408163
    %v1313 = vmul.f32 %v389, 0.020408163
    %v1314 = vmul.f32 %v392, 0.020408163
    %v1315 = vmul.f32 %v395, 0.020408163
    %v1316 = vmul.f32 %v398, 0.020408163
    %v1317 = vmul.f32 %v401, 0.020408163
    %v1318 = vmul.f32 %v404, 0.020408163
    %v1319 = vmul.f32 %v407, 0.020408163
    %v1320 = vmul.f32 %v410, 0.020408163
    %v1321 = vmul.f32 %v413, 0.020408163
    %v1322 = vmul.f32 %v416, 0.020408163
    %v1323 = vmul.f32 %v419, 0.020408163
    %v1324 = vmul.f32 %v422, 0.020408163
    %v1325 = vmul.f32 %v425, 0.020408163
    %v1326 = vmul.f32 %v428, 0.020408163
    %v1327 = vmul.f32 %v431, 0.020408163
    %v1328 = vmul.f32 %v434, 0.020408163
    %v1329 = vmul.f32 %v437, 0.020408163
    %v1330 = vmul.f32 %v440, 0.020408163
    %v1331 = vmul.f32 %v443, 0.020408163
    %v1332 = vmul.f32 %v446, 0.020408163
    %v1333 = vmul.f32 %v449, 0.020408163
    %v1334 = vmul.f32 %v452, 0.020408163
    %v1335 = vmul.f32 %v455, 0.020408163
    %v1336 = vmul.f32 %v458, 0.020408163
    %v1337 = vmul.f32 %v461, 0.020408163
    %v1338 = vmul.f32 %v464, 0.020408163
    %v1339 = vmul.f32 %v467, 0.020408163
    %v1340 = vmul.f32 %v470, 0.020408163
    %v1341 = vmul.f32 %v473, 0.020408163
    %v1342 = vmul.f32 %v476, 0.020408163
    %v1343 = vmul.f32 %v479, 0.020408163
    %v1344 = vmul.f32 %v482, 0.020408163
    %v1345 = vmul.f32 %v485, 0.020408163
    %v1346 = vmul.f32 %v488, 0.020408163
    %v1347 = vmul.f32 %v491, 0.020408163
    %v1348 = vmul.f32 %v494, 0.020408163
    %v1349 = vmul.f32 %v497, 0.020408163
    %v1350 = vmul.f32 %v500, 0.020408163
    %v1351 = vmul.f32 %v503, 0.020408163
    %v1352 = vmul.f32 %v506, 0.020408163
    %v1353 = vmul.f32 %v509, 0.020408163
    %v1354 = vmul.f32 %v512, 0.020408163
    %v1355 = vmul.f32 %v515, 0.020408163
    %v1356 = vmul.f32 %v518, 0.020408163
    %v1357 = vmul.f32 %v521, 0.020408163
    %v1358 = vmul.f32 %v524, 0.020408163
    %v1359 = vmul.f32 %v527, 0.020408163
    %v1360 = vmul.f32 %v530, 0.020408163
    %v1361 = vmul.f32 %v533, 0.020408163
    %v1362 = vmul.f32 %v536, 0.020408163
    %v1363 = vmul.f32 %v539, 0.020408163
    %v1364 = vmul.f32 %v542, 0.020408163
    %v1365 = vmul.f32 %v545, 0.020408163
    %v1366 = vmul.f32 %v548, 0.020408163
    %v1367 = vmul.f32 %v551, 0.020408163
    %v1368 = vmul.f32 %v554, 0.020408163
    %v1369 = vmul.f32 %v557, 0.020408163
    %v1370 = vmul.f32 %v560, 0.020408163
    %v1371 = vmul.f32 %v563, 0.020408163
    %v1372 = vmul.f32 %v566, 0.020408163
    %v1373 = vmul.f32 %v569, 0.020408163
    %v1374 = vmul.f32 %v572, 0.020408163
    %v1375 = vmul.f32 %v575, 0.020408163
    %v1376 = vmul.f32 %v578, 0.020408163
    %v1377 = vmul.f32 %v581, 0.020408163
    %v1378 = vmul.f32 %v584, 0.020408163
    %v1379 = vmul.f32 %v587, 0.020408163
    %v1380 = vmul.f32 %v590, 0.020408163
    %v1381 = vmul.f32 %v593, 0.020408163
    %v1382 = vmul.f32 %v596, 0.020408163
    %v1383 = vmul.f32 %v599, 0.020408163
    %v1384 = vmul.f32 %v602, 0.020408163
    %v1385 = vmul.f32 %v605, 0.020408163
    %v1386 = vmul.f32 %v608, 0.020408163
    %v1387 = vmul.f32 %v611, 0.020408163
    %v1388 = vmul.f32 %v614, 0.020408163
    %v1389 = vmul.f32 %v617, 0.020408163
    %v1390 = vmul.f32 %v620, 0.020408163
    %v1391 = vmul.f32 %v623, 0.020408163
    %v1392 = vmul.f32 %v626, 0.020408163
    %v1393 = vmul.f32 %v629, 0.020408163
    %v1394 = vmul.f32 %v632, 0.020408163
    %v1395 = vmul.f32 %v635, 0.020408163
    %v1396 = vmul.f32 %v638, 0.020408163
    %v1397 = vmul.f32 %v641, 0.020408163
    %v1398 = vmul.f32 %v644, 0.020408163
    %v1399 = vmul.f32 %v647, 0.020408163
    %v1400 = vmul.f32 %v650, 0.020408163
    %v1401 = vmul.f32 %v653, 0.020408163
    %v1402 = vmul.f32 %v656, 0.020408163
    %v1403 = vmul.f32 %v659, 0.020408163
    %v1404 = vmul.f32 %v662, 0.020408163
    %v1405 = vmul.f32 %v665, 0.020408163
    %v1406 = vmul.f32 %v668, 0.020408163
    %v1407 = vmul.f32 %v671, 0.020408163
    %v1408 = vmul.f32 %v674, 0.020408163
    %v1409 = vmul.f32 %v677, 0.020408163
    %v1410 = vmul.f32 %v680, 0.020408163
    %v1411 = vmul.f32 %v683, 0.020408163
    %v1412 = vmul.f32 %v686, 0.020408163
    %v1413 = vmul.f32 %v689, 0.020408163
    %v1414 = vmul.f32 %v692, 0.020408163
    %v1415 = vmul.f32 %v695, 0.020408163
    %v1416 = vmul.f32 %v698, 0.020408163
    %v1417 = vmul.f32 %v701, 0.020408163
    %v1418 = vmul.f32 %v704, 0.020408163
    %v1419 = vmul.f32 %v707, 0.020408163
    %v1420 = vmul.f32 %v710, 0.020408163
    %v1421 = vmul.f32 %v713, 0.020408163
    %v1422 = vmul.f32 %v716, 0.020408163
    %v1423 = vmul.f32 %v719, 0.020408163
    %v1424 = vmul.f32 %v722, 0.020408163
    %v1425 = vmul.f32 %v725, 0.020408163
    %v1426 = vmul.f32 %v728, 0.020408163
    %v1427 = vmul.f32 %v731, 0.020408163
    %v1428 = vmul.f32 %v734, 0.020408163
    %v1429 = vmul.f32 %v737, 0.020408163
    %v1430 = vmul.f32 %v740, 0.020408163
    %v1431 = vmul.f32 %v743, 0.020408163
    %v1432 = vmul.f32 %v746, 0.020408163
    %v1433 = vmul.f32 %v749, 0.020408163
    %v1434 = vmul.f32 %v752, 0.020408163
    %v1435 = vmul.f32 %v755, 0.020408163
    %v1436 = vmul.f32 %v758, 0.020408163
    %v1437 = vmul.f32 %v761, 0.020408163
    %v1438 = vmul.f32 %v764, 0.020408163
    %v1439 = vmul.f32 %v767, 0.020408163
    %v1440 = vmul.f32 %v770, 0.020408163
    %v1441 = vmul.f32 %v773, 0.020408163
    %v1442 = vmul.f32 %v776, 0.020408163
    %v1443 = vmul.f32 %v779, 0.020408163
    %v1444 = vmul.f32 %v782, 0.020408163
    %v1445 = vmul.f32 %v785, 0.020408163
    %v1446 = vmul.f32 %v788, 0.020408163
    %v1447 = vmul.f32 %v791, 0.020408163
    %v1448 = vmul.f32 %v794, 0.020408163
    %v1449 = vmul.f32 %v797, 0.020408163
    %v1450 = vmul.f32 %v800, 0.020408163
    %v1451 = vmul.f32 %v803, 0.020408163
    %v1452 = vmul.f32 %v806, 0.020408163
    %v1453 = vmul.f32 %v809, 0.020408163
    %v1454 = vmul.f32 %v812, 0.020408163
    %v1455 = vmul.f32 %v815, 0.020408163
    %v1456 = vmul.f32 %v818, 0.020408163
    %v1457 = vmul.f32 %v821, 0.020408163
    %v1458 = vmul.f32 %v824, 0.020408163
    %v1459 = vmul.f32 %v827, 0.020408163
    %v1460 = vmul.f32 %v830, 0.020408163
    %v1461 = vmul.f32 %v833, 0.020408163
    %v1462 = vmul.f32 %v836, 0.020408163
    %v1463 = vmul.f32 %v839, 0.020408163
    %v1464 = vmul.f32 %v842, 0.020408163
    %v1465 = vmul.f32 %v845, 0.020408163
    %v1466 = vmul.f32 %v848, 0.020408163
    %v1467 = vmul.f32 %v851, 0.020408163
    %v1468 = vmul.f32 %v854, 0.020408163
    %v1469 = vmul.f32 %v857, 0.020408163
    %v1470 = vmul.f32 %v860, 0.020408163
    %v1471 = vmul.f32 %v863, 0.020408163
    %v1472 = vmul.f32 %v866, 0.020408163
    %v1473 = vmul.f32 %v869, 0.020408163
    %v1474 = vmul.f32 %v872, 0.020408163
    %v1475 = vmul.f32 %v875, 0.020408163
    %v1476 = vmul.f32 %v878, 0.020408163
    %v1477 = vmul.f32 %v881, 0.020408163
    %v1478 = vmul.f32 %v884, 0.020408163
    %v1479 = vmul.f32 %v887, 0.020408163
    %v1480 = vmul.f32 %v890, 0.020408163
    %v1481 = vmul.f32 %v893, 0.020408163
    %v1482 = vmul.f32 %v896, 0.020408163
    %v1483 = vmul.f32 %v899, 0.020408163
    %v1484 = vmul.f32 %v902, 0.020408163
    %v1485 = vmul.f32 %v905, 0.020408163
    %v1486 = vmul.f32 %v908, 0.020408163
    %v1487 = vmul.f32 %v911, 0.020408163
    %v1488 = vmul.f32 %v914, 0.020408163
    %v1489 = vmul.f32 %v917, 0.020408163
    %v1490 = vmul.f32 %v920, 0.020408163
    %v1491 = vmul.f32 %v923, 0.020408163
    %v1492 = vmul.f32 %v926, 0.020408163
    %v1493 = vmul.f32 %v929, 0.020408163
    %v1494 = vmul.f32 %v932, 0.020408163
    %v1495 = vmul.f32 %v935, 0.020408163
    %v1496 = vmul.f32 %v938, 0.020408163
    %v1497 = vmul.f32 %v941, 0.020408163
    %v1498 = vmul.f32 %v944, 0.020408163
    %v1499 = vmul.f32 %v947, 0.020408163
    %v1500 = vmul.f32 %v950, 0.020408163
    %v1501 = vmul.f32 %v953, 0.020408163
    %v1502 = vmul.f32 %v956, 0.020408163
    %v1503 = vmul.f32 %v959, 0.020408163
    %v1504 = vmul.f32 %v962, 0.020408163
    %v1505 = vmul.f32 %v965, 0.020408163
    %v1506 = vmul.f32 %v968, 0.020408163
    %v1507 = vmul.f32 %v971, 0.020408163
    %v1508 = vmul.f32 %v974, 0.020408163
    %v1509 = vmul.f32 %v977, 0.020408163
    %v1510 = vmul.f32 %v980, 0.020408163
    %v1511 = vmul.f32 %v983, 0.020408163
    %v1512 = vmul.f32 %v986, 0.020408163
    %v1513 = vmul.f32 %v989, 0.020408163
    %v1514 = vmul.f32 %v992, 0.020408163
    %v1515 = vmul.f32 %v995, 0.020408163
    %v1516 = vmul.f32 %v998, 0.020408163
    %v1517 = vmul.f32 %v1001, 0.020408163
    %v1518 = vmul.f32 %v1004, 0.020408163
    %v1519 = vmul.f32 %v1007, 0.020408163
    %v1520 = vmul.f32 %v1010, 0.020408163
    %v1521 = vmul.f32 %v1013, 0.020408163
    %v1522 = vmul.f32 %v1016, 0.020408163
    %v1523 = vmul.f32 %v1019, 0.020408163
    %v1524 = vmul.f32 %v1022, 0.020408163
    %v1525 = vmul.f32 %v1025, 0.020408163
    %v1526 = vmul.f32 %v1028, 0.020408163
    %v1527 = vmul.f32 %v1031, 0.020408163
    %v1528 = vmul.f32 %v1034, 0.020408163
    %v1529 = vmul.f32 %v1037, 0.020408163
    %v1530 = vmul.f32 %v1040, 0.020408163
    %v1531 = vmul.f32 %v1043, 0.020408163
    %v1532 = vmul.f32 %v1046, 0.020408163
    %v1533 = vmul.f32 %v1049, 0.020408163
    %v1534 = vmul.f32 %v1052, 0.020408163
    %v1535 = vmul.f32 %v1055, 0.020408163
    %v1536 = vmul.f32 %v1058, 0.020408163
    %v1537 = vmul.f32 %v1061, 0.020408163
    %v1538 = vmul.f32 %v1064, 0.020408163
    %v1539 = vmul.f32 %v1067, 0.020408163
    %v1540 = vmul.f32 %v1070, 0.020408163
    %v1541 = vmul.f32 %v1073, 0.020408163
    %v1542 = vmul.f32 %v1076, 0.020408163
    %v1543 = vmul.f32 %v1079, 0.020408163
    %v1544 = vmul.f32 %v1082, 0.020408163
    %v1545 = vmul.f32 %v1085, 0.020408163
    %v1546 = vmul.f32 %v1088, 0.020408163
    %v1547 = vmul.f32 %v1091, 0.020408163
    %v1548 = vmul.f32 %v1094, 0.020408163
    %v1549 = vmul.f32 %v1097, 0.020408163
    %v1550 = vmul.f32 %v1100, 0.020408163
    %v1551 = vmul.f32 %v1103, 0.020408163
    %v1552 = vmul.f32 %v1106, 0.020408163
    %v1553 = vmul.f32 %v1109, 0.020408163
    %v1554 = vmul.f32 %v1112, 0.020408163
    %v1555 = vmul.f32 %v1115, 0.020408163
    %v1556 = vmul.f32 %v1118, 0.020408163
    %v1557 = vmul.f32 %v1121, 0.020408163
    %v1558 = vmul.f32 %v1124, 0.020408163
    %v1559 = vmul.f32 %v1127, 0.020408163
    %v1560 = vmul.f32 %v1130, 0.020408163
    %v1561 = vmul.f32 %v1133, 0.020408163
    %v1562 = vmul.f32 %v1136, 0.020408163
    %v1563 = vmul.f32 %v1139, 0.020408163
    %v1564 = vmul.f32 %v1142, 0.020408163
    %v1565 = vmul.f32 %v1145, 0.020408163
    %v1566 = vmul.f32 %v1148, 0.020408163
    %v1567 = vmul.f32 %v1151, 0.020408163
    %v1568 = vmul.f32 %v1154, 0.020408163
    %v1569 = vmul.f32 %v1157, 0.020408163
    %v1570 = vmul.f32 %v1160, 0.020408163
    %v1571 = vmul.f32 %v1163, 0.020408163
    %v1572 = vmul.f32 %v1166, 0.020408163
    %v1573 = vmul.f32 %v1169, 0.020408163
    %v1574 = vmul.f32 %v1172, 0.020408163
    %v1575 = vmul.f32 %v1175, 0.020408163
    %v1576 = vmul.f32 %v1178, 0.020408163
    %v1577 = vmul.f32 %v1181, 0.020408163
    %v1578 = vmul.f32 %v1184, 0.020408163
    %v1579 = vmul.f32 %v1187, 0.020408163
    %v1580 = vmul.f32 %v1190, 0.020408163
    %v1581 = vmul.f32 %v1193, 0.020408163
    %v1582 = vmul.f32 %v1196, 0.020408163
    %v1583 = vmul.f32 %v1199, 0.020408163
    %v1584 = vmul.f32 %v1202, 0.020408163
    %v1585 = vmul.f32 %v1205, 0.020408163
    %v1586 = vmul.f32 %v1208, 0.020408163
    %v1587 = vmul.f32 %v1211, 0.020408163
    %v1588 = vmul.f32 %v1214, 0.020408163
    %v1589 = vmul.f32 %v1217, 0.020408163
    %v1590 = vmul.f32 %v1220, 0.020408163
    %v1591 = vmul.f32 %v1223, 0.020408163
    %v1592 = vmul.f32 %v1226, 0.020408163
    %v1593 = vmul.f32 %v1229, 0.020408163
    %v1594 = vmul.f32 %v1232, 0.020408163
    %v1595 = vmul.f32 %v1235, 0.020408163
    %v1596 = vmul.f32 %v1238, 0.020408163
    %v1597 = vmul.f32 %v1241, 0.020408163
    %v1598 = vmul.f32 %v1244, 0.020408163
    %v1599 = vmul.f32 %v1247, 0.020408163
    %v1600 = vmul.f32 %v1250, 0.020408163
    %v1601 = vmul.f32 %v1253, 0.020408163
    %v1602 = vmul.f32 %v1256, 0.020408163
    %v1603 = vmul.f32 %v1259, 0.020408163
    %v1604 = vmul.f32 %v1262, 0.020408163
    %v1605 = vmul.f32 %v1265, 0.020408163
    %v1606 = vmul.f32 %v1268, 0.020408163
    %v1607 = vmul.f32 %v1271, 0.020408163
    %v1608 = vmul.f32 %v1274, 0.020408163
    %v1609 = vmul.f32 %v1277, 0.020408163
    %v1610 = vmul.f32 %v1280, 0.020408163
    %v1611 = vmul.f32 %v1283, 0.020408163
    %v1612 = vmul.f32 %v1286, 0.020408163
    %v1613 = vmul.f32 %v1289, 0.020408163
    %v1614 = vmul.f32 %v1292, 0.020408163
    %v1615 = vmul.f32 %v1295, 0.020408163
    %v1616 = vpack.c.bf16 %v1297, %v1296
    %v1617 = vpack.c.bf16 %v1299, %v1298
    %v1618 = vpack.c.bf16 %v1301, %v1300
    %v1619 = vpack.c.bf16 %v1303, %v1302
    %v1620 = vpack.c.bf16 %v1305, %v1304
    %v1621 = vpack.c.bf16 %v1307, %v1306
    %v1622 = vpack.c.bf16 %v1309, %v1308
    %v1623 = vpack.c.bf16 %v1311, %v1310
    %v1624 = vpack.c.bf16 %v1313, %v1312
    %v1625 = vpack.c.bf16 %v1315, %v1314
    %v1626 = vpack.c.bf16 %v1317, %v1316
    %v1627 = vpack.c.bf16 %v1319, %v1318
    %v1628 = vpack.c.bf16 %v1321, %v1320
    %v1629 = vpack.c.bf16 %v1323, %v1322
    %v1630 = vpack.c.bf16 %v1325, %v1324
    %v1631 = vpack.c.bf16 %v1327, %v1326
    %v1632 = vpack.c.bf16 %v1329, %v1328
    %v1633 = vpack.c.bf16 %v1331, %v1330
    %v1634 = vpack.c.bf16 %v1333, %v1332
    %v1635 = vpack.c.bf16 %v1335, %v1334
    %v1636 = vpack.c.bf16 %v1337, %v1336
    %v1637 = vpack.c.bf16 %v1339, %v1338
    %v1638 = vpack.c.bf16 %v1341, %v1340
    %v1639 = vpack.c.bf16 %v1343, %v1342
    %v1640 = vpack.c.bf16 %v1345, %v1344
    %v1641 = vpack.c.bf16 %v1347, %v1346
    %v1642 = vpack.c.bf16 %v1349, %v1348
    %v1643 = vpack.c.bf16 %v1351, %v1350
    %v1644 = vpack.c.bf16 %v1353, %v1352
    %v1645 = vpack.c.bf16 %v1355, %v1354
    %v1646 = vpack.c.bf16 %v1357, %v1356
    %v1647 = vpack.c.bf16 %v1359, %v1358
    %v1648 = vpack.c.bf16 %v1361, %v1360
    %v1649 = vpack.c.bf16 %v1363, %v1362
    %v1650 = vpack.c.bf16 %v1365, %v1364
    %v1651 = vpack.c.bf16 %v1367, %v1366
    %v1652 = vpack.c.bf16 %v1369, %v1368
    %v1653 = vpack.c.bf16 %v1371, %v1370
    %v1654 = vpack.c.bf16 %v1373, %v1372
    %v1655 = vpack.c.bf16 %v1375, %v1374
    %v1656 = vpack.c.bf16 %v1377, %v1376
    %v1657 = vpack.c.bf16 %v1379, %v1378
    %v1658 = vpack.c.bf16 %v1381, %v1380
    %v1659 = vpack.c.bf16 %v1383, %v1382
    %v1660 = vpack.c.bf16 %v1385, %v1384
    %v1661 = vpack.c.bf16 %v1387, %v1386
    %v1662 = vpack.c.bf16 %v1389, %v1388
    %v1663 = vpack.c.bf16 %v1391, %v1390
    %v1664 = vpack.c.bf16 %v1393, %v1392
    %v1665 = vpack.c.bf16 %v1395, %v1394
    %v1666 = vpack.c.bf16 %v1397, %v1396
    %v1667 = vpack.c.bf16 %v1399, %v1398
    %v1668 = vpack.c.bf16 %v1401, %v1400
    %v1669 = vpack.c.bf16 %v1403, %v1402
    %v1670 = vpack.c.bf16 %v1405, %v1404
    %v1671 = vpack.c.bf16 %v1407, %v1406
    %v1672 = vpack.c.bf16 %v1409, %v1408
    %v1673 = vpack.c.bf16 %v1411, %v1410
    %v1674 = vpack.c.bf16 %v1413, %v1412
    %v1675 = vpack.c.bf16 %v1415, %v1414
    %v1676 = vpack.c.bf16 %v1417, %v1416
    %v1677 = vpack.c.bf16 %v1419, %v1418
    %v1678 = vpack.c.bf16 %v1421, %v1420
    %v1679 = vpack.c.bf16 %v1423, %v1422
    %v1680 = vpack.c.bf16 %v1425, %v1424
    %v1681 = vpack.c.bf16 %v1427, %v1426
    %v1682 = vpack.c.bf16 %v1429, %v1428
    %v1683 = vpack.c.bf16 %v1431, %v1430
    %v1684 = vpack.c.bf16 %v1433, %v1432
    %v1685 = vpack.c.bf16 %v1435, %v1434
    %v1686 = vpack.c.bf16 %v1437, %v1436
    %v1687 = vpack.c.bf16 %v1439, %v1438
    %v1688 = vpack.c.bf16 %v1441, %v1440
    %v1689 = vpack.c.bf16 %v1443, %v1442
    %v1690 = vpack.c.bf16 %v1445, %v1444
    %v1691 = vpack.c.bf16 %v1447, %v1446
    %v1692 = vpack.c.bf16 %v1449, %v1448
    %v1693 = vpack.c.bf16 %v1451, %v1450
    %v1694 = vpack.c.bf16 %v1453, %v1452
    %v1695 = vpack.c.bf16 %v1455, %v1454
    %v1696 = vpack.c.bf16 %v1457, %v1456
    %v1697 = vpack.c.bf16 %v1459, %v1458
    %v1698 = vpack.c.bf16 %v1461, %v1460
    %v1699 = vpack.c.bf16 %v1463, %v1462
    %v1700 = vpack.c.bf16 %v1465, %v1464
    %v1701 = vpack.c.bf16 %v1467, %v1466
    %v1702 = vpack.c.bf16 %v1469, %v1468
    %v1703 = vpack.c.bf16 %v1471, %v1470
    %v1704 = vpack.c.bf16 %v1473, %v1472
    %v1705 = vpack.c.bf16 %v1475, %v1474
    %v1706 = vpack.c.bf16 %v1477, %v1476
    %v1707 = vpack.c.bf16 %v1479, %v1478
    %v1708 = vpack.c.bf16 %v1481, %v1480
    %v1709 = vpack.c.bf16 %v1483, %v1482
    %v1710 = vpack.c.bf16 %v1485, %v1484
    %v1711 = vpack.c.bf16 %v1487, %v1486
    %v1712 = vpack.c.bf16 %v1489, %v1488
    %v1713 = vpack.c.bf16 %v1491, %v1490
    %v1714 = vpack.c.bf16 %v1493, %v1492
    %v1715 = vpack.c.bf16 %v1495, %v1494
    %v1716 = vpack.c.bf16 %v1497, %v1496
    %v1717 = vpack.c.bf16 %v1499, %v1498
    %v1718 = vpack.c.bf16 %v1501, %v1500
    %v1719 = vpack.c.bf16 %v1503, %v1502
    %v1720 = vpack.c.bf16 %v1505, %v1504
    %v1721 = vpack.c.bf16 %v1507, %v1506
    %v1722 = vpack.c.bf16 %v1509, %v1508
    %v1723 = vpack.c.bf16 %v1511, %v1510
    %v1724 = vpack.c.bf16 %v1513, %v1512
    %v1725 = vpack.c.bf16 %v1515, %v1514
    %v1726 = vpack.c.bf16 %v1517, %v1516
    %v1727 = vpack.c.bf16 %v1519, %v1518
    %v1728 = vpack.c.bf16 %v1521, %v1520
    %v1729 = vpack.c.bf16 %v1523, %v1522
    %v1730 = vpack.c.bf16 %v1525, %v1524
    %v1731 = vpack.c.bf16 %v1527, %v1526
    %v1732 = vpack.c.bf16 %v1529, %v1528
    %v1733 = vpack.c.bf16 %v1531, %v1530
    %v1734 = vpack.c.bf16 %v1533, %v1532
    %v1735 = vpack.c.bf16 %v1535, %v1534
    %v1736 = vpack.c.bf16 %v1537, %v1536
    %v1737 = vpack.c.bf16 %v1539, %v1538
    %v1738 = vpack.c.bf16 %v1541, %v1540
    %v1739 = vpack.c.bf16 %v1543, %v1542
    %v1740 = vpack.c.bf16 %v1545, %v1544
    %v1741 = vpack.c.bf16 %v1547, %v1546
    %v1742 = vpack.c.bf16 %v1549, %v1548
    %v1743 = vpack.c.bf16 %v1551, %v1550
    %v1744 = vpack.c.bf16 %v1553, %v1552
    %v1745 = vpack.c.bf16 %v1555, %v1554
    %v1746 = vpack.c.bf16 %v1557, %v1556
    %v1747 = vpack.c.bf16 %v1559, %v1558
    %v1748 = vpack.c.bf16 %v1561, %v1560
    %v1749 = vpack.c.bf16 %v1563, %v1562
    %v1750 = vpack.c.bf16 %v1565, %v1564
    %v1751 = vpack.c.bf16 %v1567, %v1566
    %v1752 = vpack.c.bf16 %v1569, %v1568
    %v1753 = vpack.c.bf16 %v1571, %v1570
    %v1754 = vpack.c.bf16 %v1573, %v1572
    %v1755 = vpack.c.bf16 %v1575, %v1574
    %v1756 = vpack.c.bf16 %v1577, %v1576
    %v1757 = vpack.c.bf16 %v1579, %v1578
    %v1758 = vpack.c.bf16 %v1581, %v1580
    %v1759 = vpack.c.bf16 %v1583, %v1582
    %v1760 = vpack.c.bf16 %v1585, %v1584
    %v1761 = vpack.c.bf16 %v1587, %v1586
    %v1762 = vpack.c.bf16 %v1589, %v1588
    %v1763 = vpack.c.bf16 %v1591, %v1590
    %v1764 = vpack.c.bf16 %v1593, %v1592
    %v1765 = vpack.c.bf16 %v1595, %v1594
    %v1766 = vpack.c.bf16 %v1597, %v1596
    %v1767 = vpack.c.bf16 %v1599, %v1598
    %v1768 = vpack.c.bf16 %v1601, %v1600
    %v1769 = vpack.c.bf16 %v1603, %v1602
    %v1770 = vpack.c.bf16 %v1605, %v1604
    %v1771 = vpack.c.bf16 %v1607, %v1606
    %v1772 = vpack.c.bf16 %v1609, %v1608
    %v1773 = vpack.c.bf16 %v1611, %v1610
    %v1774 = vpack.c.bf16 %v1613, %v1612
    %v1775 = vpack.c.bf16 %v1615, %v1614
    %v1776 = vld [vmem:[%s1] sm:$0xff]
    %v1777 = vld [vmem:[%s1 + $0x8] sm:$0xff]
    %v1778 = vld [vmem:[%s1 + $0x10] sm:$0xff]
    %v1779 = vld [vmem:[%s1 + $0x18] sm:$0xff]
    %v1780 = vld [vmem:[%s1 + $0x20] sm:$0xff]
    %v1781 = vld [vmem:[%s1 + $0x28] sm:$0xff]
    %v1782 = vld [vmem:[%s1 + $0x30] sm:$0xff]
    %v1783 = vld [vmem:[%s1 + $0x38] sm:$0xff]
    %v1784 = vld [vmem:[%s1 + $0x40] sm:$0xff]
    %v1785 = vld [vmem:[%s1 + $0x48] sm:$0xff]
    %v1786 = vld [vmem:[%s1 + $0x50] sm:$0xff]
    %v1787 = vld [vmem:[%s1 + $0x58] sm:$0xff]
    %v1788 = vld [vmem:[%s1 + $0x60] sm:$0xff]
    %v1789 = vld [vmem:[%s1 + $0x68] sm:$0xff]
    %v1790 = vld [vmem:[%s1 + $0x70] sm:$0xff]
    %v1791 = vld [vmem:[%s1 + $0x78] sm:$0xff]
    %v1792 = vld [vmem:[%s1 + $0x80] sm:$0xff]
    %v1793 = vld [vmem:[%s1 + $0x88] sm:$0xff]
    %v1794 = vld [vmem:[%s1 + $0x90] sm:$0xff]
    %v1795 = vld [vmem:[%s1 + $0x98] sm:$0xff]
    %v1796 = vld [vmem:[%s1 + $0xa0] sm:$0xff]
    %v1797 = vld [vmem:[%s1 + $0xa8] sm:$0xff]
    %v1798 = vld [vmem:[%s1 + $0xb0] sm:$0xff]
    %v1799 = vld [vmem:[%s1 + $0xb8] sm:$0xff]
    %v1800 = vld [vmem:[%s1 + $0xc0] sm:$0xff]
    %v1801 = vld [vmem:[%s1 + $0xc8] sm:$0xff]
    %v1802 = vld [vmem:[%s1 + $0xd0] sm:$0xff]
    %v1803 = vld [vmem:[%s1 + $0xd8] sm:$0xff]
    %v1804 = vld [vmem:[%s1 + $0xe0] sm:$0xff]
    %v1805 = vld [vmem:[%s1 + $0xe8] sm:$0xff]
    %v1806 = vld [vmem:[%s1 + $0xf0] sm:$0xff]
    %v1807 = vld [vmem:[%s1 + $0xf8] sm:$0xff]
    %v1808 = vld [vmem:[%s1 + $0x100] sm:$0xff]
    %v1809 = vld [vmem:[%s1 + $0x108] sm:$0xff]
    %v1810 = vld [vmem:[%s1 + $0x110] sm:$0xff]
    %v1811 = vld [vmem:[%s1 + $0x118] sm:$0xff]
    %v1812 = vld [vmem:[%s1 + $0x120] sm:$0xff]
    %v1813 = vld [vmem:[%s1 + $0x128] sm:$0xff]
    %v1814 = vld [vmem:[%s1 + $0x130] sm:$0xff]
    %v1815 = vld [vmem:[%s1 + $0x138] sm:$0xff]
    %v1816 = vld [vmem:[%s1 + $0x140] sm:$0xff]
    %v1817 = vld [vmem:[%s1 + $0x148] sm:$0xff]
    %v1818 = vld [vmem:[%s1 + $0x150] sm:$0xff]
    %v1819 = vld [vmem:[%s1 + $0x158] sm:$0xff]
    %v1820 = vld [vmem:[%s1 + $0x160] sm:$0xff]
    %v1821 = vld [vmem:[%s1 + $0x168] sm:$0xff]
    %v1822 = vld [vmem:[%s1 + $0x170] sm:$0xff]
    %v1823 = vld [vmem:[%s1 + $0x178] sm:$0xff]
    %v1824 = vld [vmem:[%s1 + $0x180] sm:$0xff]
    %v1825 = vld [vmem:[%s1 + $0x188] sm:$0xff]
    %v1826 = vld [vmem:[%s1 + $0x190] sm:$0xff]
    %v1827 = vld [vmem:[%s1 + $0x198] sm:$0xff]
    %v1828 = vld [vmem:[%s1 + $0x1a0] sm:$0xff]
    %v1829 = vld [vmem:[%s1 + $0x1a8] sm:$0xff]
    %v1830 = vld [vmem:[%s1 + $0x1b0] sm:$0xff]
    %v1831 = vld [vmem:[%s1 + $0x1b8] sm:$0xff]
    %v1832 = vld [vmem:[%s1 + $0x1c0] sm:$0xff]
    %v1833 = vld [vmem:[%s1 + $0x1c8] sm:$0xff]
    %v1834 = vld [vmem:[%s1 + $0x1d0] sm:$0xff]
    %v1835 = vld [vmem:[%s1 + $0x1d8] sm:$0xff]
    %v1836 = vld [vmem:[%s1 + $0x1e0] sm:$0xff]
    %v1837 = vld [vmem:[%s1 + $0x1e8] sm:$0xff]
    %v1838 = vld [vmem:[%s1 + $0x1f0] sm:$0xff]
    %v1839 = vld [vmem:[%s1 + $0x1f8] sm:$0xff]
    %v1840 = vld [vmem:[%s1 + $0x200] sm:$0xff]
    %v1841 = vld [vmem:[%s1 + $0x208] sm:$0xff]
    %v1842 = vld [vmem:[%s1 + $0x210] sm:$0xff]
    %v1843 = vld [vmem:[%s1 + $0x218] sm:$0xff]
    %v1844 = vld [vmem:[%s1 + $0x220] sm:$0xff]
    %v1845 = vld [vmem:[%s1 + $0x228] sm:$0xff]
    %v1846 = vld [vmem:[%s1 + $0x230] sm:$0xff]
    %v1847 = vld [vmem:[%s1 + $0x238] sm:$0xff]
    %v1848 = vld [vmem:[%s1 + $0x240] sm:$0xff]
    %v1849 = vld [vmem:[%s1 + $0x248] sm:$0xff]
    %v1850 = vld [vmem:[%s1 + $0x250] sm:$0xff]
    %v1851 = vld [vmem:[%s1 + $0x258] sm:$0xff]
    %v1852 = vld [vmem:[%s1 + $0x260] sm:$0xff]
    %v1853 = vld [vmem:[%s1 + $0x268] sm:$0xff]
    %v1854 = vld [vmem:[%s1 + $0x270] sm:$0xff]
    %v1855 = vld [vmem:[%s1 + $0x278] sm:$0xff]
    %v1856 = vld [vmem:[%s1 + $0x280] sm:$0xff]
    %v1857 = vld [vmem:[%s1 + $0x288] sm:$0xff]
    %v1858 = vld [vmem:[%s1 + $0x290] sm:$0xff]
    %v1859 = vld [vmem:[%s1 + $0x298] sm:$0xff]
    %v1860 = vld [vmem:[%s1 + $0x2a0] sm:$0xff]
    %v1861 = vld [vmem:[%s1 + $0x2a8] sm:$0xff]
    %v1862 = vld [vmem:[%s1 + $0x2b0] sm:$0xff]
    %v1863 = vld [vmem:[%s1 + $0x2b8] sm:$0xff]
    %v1864 = vld [vmem:[%s1 + $0x2c0] sm:$0xff]
    %v1865 = vld [vmem:[%s1 + $0x2c8] sm:$0xff]
    %v1866 = vld [vmem:[%s1 + $0x2d0] sm:$0xff]
    %v1867 = vld [vmem:[%s1 + $0x2d8] sm:$0xff]
    %v1868 = vld [vmem:[%s1 + $0x2e0] sm:$0xff]
    %v1869 = vld [vmem:[%s1 + $0x2e8] sm:$0xff]
    %v1870 = vld [vmem:[%s1 + $0x2f0] sm:$0xff]
    %v1871 = vld [vmem:[%s1 + $0x2f8] sm:$0xff]
    %v1872 = vld [vmem:[%s1 + $0x300] sm:$0xff]
    %v1873 = vld [vmem:[%s1 + $0x308] sm:$0xff]
    %v1874 = vld [vmem:[%s1 + $0x310] sm:$0xff]
    %v1875 = vld [vmem:[%s1 + $0x318] sm:$0xff]
    %v1876 = vld [vmem:[%s1 + $0x320] sm:$0xff]
    %v1877 = vld [vmem:[%s1 + $0x328] sm:$0xff]
    %v1878 = vld [vmem:[%s1 + $0x330] sm:$0xff]
    %v1879 = vld [vmem:[%s1 + $0x338] sm:$0xff]
    %v1880 = vld [vmem:[%s1 + $0x340] sm:$0xff]
    %v1881 = vld [vmem:[%s1 + $0x348] sm:$0xff]
    %v1882 = vld [vmem:[%s1 + $0x350] sm:$0xff]
    %v1883 = vld [vmem:[%s1 + $0x358] sm:$0xff]
    %v1884 = vld [vmem:[%s1 + $0x360] sm:$0xff]
    %v1885 = vld [vmem:[%s1 + $0x368] sm:$0xff]
    %v1886 = vld [vmem:[%s1 + $0x370] sm:$0xff]
    %v1887 = vld [vmem:[%s1 + $0x378] sm:$0xff]
    %v1888 = vld [vmem:[%s1 + $0x380] sm:$0xff]
    %v1889 = vld [vmem:[%s1 + $0x388] sm:$0xff]
    %v1890 = vld [vmem:[%s1 + $0x390] sm:$0xff]
    %v1891 = vld [vmem:[%s1 + $0x398] sm:$0xff]
    %v1892 = vld [vmem:[%s1 + $0x3a0] sm:$0xff]
    %v1893 = vld [vmem:[%s1 + $0x3a8] sm:$0xff]
    %v1894 = vld [vmem:[%s1 + $0x3b0] sm:$0xff]
    %v1895 = vld [vmem:[%s1 + $0x3b8] sm:$0xff]
    %v1896 = vld [vmem:[%s1 + $0x3c0] sm:$0xff]
    %v1897 = vld [vmem:[%s1 + $0x3c8] sm:$0xff]
    %v1898 = vld [vmem:[%s1 + $0x3d0] sm:$0xff]
    %v1899 = vld [vmem:[%s1 + $0x3d8] sm:$0xff]
    %v1900 = vld [vmem:[%s1 + $0x3e0] sm:$0xff]
    %v1901 = vld [vmem:[%s1 + $0x3e8] sm:$0xff]
    %v1902 = vld [vmem:[%s1 + $0x3f0] sm:$0xff]
    %v1903 = vld [vmem:[%s1 + $0x3f8] sm:$0xff]
    %v1904 = vld [vmem:[%s1 + $0x400] sm:$0xff]
    %v1905 = vld [vmem:[%s1 + $0x408] sm:$0xff]
    %v1906 = vld [vmem:[%s1 + $0x410] sm:$0xff]
    %v1907 = vld [vmem:[%s1 + $0x418] sm:$0xff]
    %v1908 = vld [vmem:[%s1 + $0x420] sm:$0xff]
    %v1909 = vld [vmem:[%s1 + $0x428] sm:$0xff]
    %v1910 = vld [vmem:[%s1 + $0x430] sm:$0xff]
    %v1911 = vld [vmem:[%s1 + $0x438] sm:$0xff]
    %v1912 = vld [vmem:[%s1 + $0x440] sm:$0xff]
    %v1913 = vld [vmem:[%s1 + $0x448] sm:$0xff]
    %v1914 = vld [vmem:[%s1 + $0x450] sm:$0xff]
    %v1915 = vld [vmem:[%s1 + $0x458] sm:$0xff]
    %v1916 = vld [vmem:[%s1 + $0x460] sm:$0xff]
    %v1917 = vld [vmem:[%s1 + $0x468] sm:$0xff]
    %v1918 = vld [vmem:[%s1 + $0x470] sm:$0xff]
    %v1919 = vld [vmem:[%s1 + $0x478] sm:$0xff]
    %v1920 = vld [vmem:[%s1 + $0x480] sm:$0xff]
    %v1921 = vld [vmem:[%s1 + $0x488] sm:$0xff]
    %v1922 = vld [vmem:[%s1 + $0x490] sm:$0xff]
    %v1923 = vld [vmem:[%s1 + $0x498] sm:$0xff]
    %v1924 = vld [vmem:[%s1 + $0x4a0] sm:$0xff]
    %v1925 = vld [vmem:[%s1 + $0x4a8] sm:$0xff]
    %v1926 = vld [vmem:[%s1 + $0x4b0] sm:$0xff]
    %v1927 = vld [vmem:[%s1 + $0x4b8] sm:$0xff]
    %v1928 = vld [vmem:[%s1 + $0x4c0] sm:$0xff]
    %v1929 = vld [vmem:[%s1 + $0x4c8] sm:$0xff]
    %v1930 = vld [vmem:[%s1 + $0x4d0] sm:$0xff]
    %v1931 = vld [vmem:[%s1 + $0x4d8] sm:$0xff]
    %v1932 = vld [vmem:[%s1 + $0x4e0] sm:$0xff]
    %v1933 = vld [vmem:[%s1 + $0x4e8] sm:$0xff]
    %v1934 = vld [vmem:[%s1 + $0x4f0] sm:$0xff]
    %v1935 = vld [vmem:[%s1 + $0x4f8] sm:$0xff]
    %v1936 = vld [vmem:[%s1 + $0x500] sm:$0xff]
    %v1937 = vld [vmem:[%s1 + $0x508] sm:$0xff]
    %v1938 = vld [vmem:[%s1 + $0x510] sm:$0xff]
    %v1939 = vld [vmem:[%s1 + $0x518] sm:$0xff]
    %v1940 = vld [vmem:[%s1 + $0x520] sm:$0xff]
    %v1941 = vld [vmem:[%s1 + $0x528] sm:$0xff]
    %v1942 = vld [vmem:[%s1 + $0x530] sm:$0xff]
    %v1943 = vld [vmem:[%s1 + $0x538] sm:$0xff]
    %v1944 = vld [vmem:[%s1 + $0x540] sm:$0xff]
    %v1945 = vld [vmem:[%s1 + $0x548] sm:$0xff]
    %v1946 = vld [vmem:[%s1 + $0x550] sm:$0xff]
    %v1947 = vld [vmem:[%s1 + $0x558] sm:$0xff]
    %v1948 = vld [vmem:[%s1 + $0x560] sm:$0xff]
    %v1949 = vld [vmem:[%s1 + $0x568] sm:$0xff]
    %v1950 = vld [vmem:[%s1 + $0x570] sm:$0xff]
    %v1951 = vld [vmem:[%s1 + $0x578] sm:$0xff]
    %v1952 = vld [vmem:[%s1 + $0x580] sm:$0xff]
    %v1953 = vld [vmem:[%s1 + $0x588] sm:$0xff]
    %v1954 = vld [vmem:[%s1 + $0x590] sm:$0xff]
    %v1955 = vld [vmem:[%s1 + $0x598] sm:$0xff]
    %v1956 = vld [vmem:[%s1 + $0x5a0] sm:$0xff]
    %v1957 = vld [vmem:[%s1 + $0x5a8] sm:$0xff]
    %v1958 = vld [vmem:[%s1 + $0x5b0] sm:$0xff]
    %v1959 = vld [vmem:[%s1 + $0x5b8] sm:$0xff]
    %v1960 = vld [vmem:[%s1 + $0x5c0] sm:$0xff]
    %v1961 = vld [vmem:[%s1 + $0x5c8] sm:$0xff]
    %v1962 = vld [vmem:[%s1 + $0x5d0] sm:$0xff]
    %v1963 = vld [vmem:[%s1 + $0x5d8] sm:$0xff]
    %v1964 = vld [vmem:[%s1 + $0x5e0] sm:$0xff]
    %v1965 = vld [vmem:[%s1 + $0x5e8] sm:$0xff]
    %v1966 = vld [vmem:[%s1 + $0x5f0] sm:$0xff]
    %v1967 = vld [vmem:[%s1 + $0x5f8] sm:$0xff]
    %v1968 = vld [vmem:[%s1 + $0x600] sm:$0xff]
    %v1969 = vld [vmem:[%s1 + $0x608] sm:$0xff]
    %v1970 = vld [vmem:[%s1 + $0x610] sm:$0xff]
    %v1971 = vld [vmem:[%s1 + $0x618] sm:$0xff]
    %v1972 = vld [vmem:[%s1 + $0x620] sm:$0xff]
    %v1973 = vld [vmem:[%s1 + $0x628] sm:$0xff]
    %v1974 = vld [vmem:[%s1 + $0x630] sm:$0xff]
    %v1975 = vld [vmem:[%s1 + $0x638] sm:$0xff]
    %v1976 = vld [vmem:[%s1 + $0x640] sm:$0xff]
    %v1977 = vld [vmem:[%s1 + $0x648] sm:$0xff]
    %v1978 = vld [vmem:[%s1 + $0x650] sm:$0xff]
    %v1979 = vld [vmem:[%s1 + $0x658] sm:$0xff]
    %v1980 = vld [vmem:[%s1 + $0x660] sm:$0xff]
    %v1981 = vld [vmem:[%s1 + $0x668] sm:$0xff]
    %v1982 = vld [vmem:[%s1 + $0x670] sm:$0xff]
    %v1983 = vld [vmem:[%s1 + $0x678] sm:$0xff]
    %v1984 = vld [vmem:[%s1 + $0x680] sm:$0xff]
    %v1985 = vld [vmem:[%s1 + $0x688] sm:$0xff]
    %v1986 = vld [vmem:[%s1 + $0x690] sm:$0xff]
    %v1987 = vld [vmem:[%s1 + $0x698] sm:$0xff]
    %v1988 = vld [vmem:[%s1 + $0x6a0] sm:$0xff]
    %v1989 = vld [vmem:[%s1 + $0x6a8] sm:$0xff]
    %v1990 = vld [vmem:[%s1 + $0x6b0] sm:$0xff]
    %v1991 = vld [vmem:[%s1 + $0x6b8] sm:$0xff]
    %v1992 = vld [vmem:[%s1 + $0x6c0] sm:$0xff]
    %v1993 = vld [vmem:[%s1 + $0x6c8] sm:$0xff]
    %v1994 = vld [vmem:[%s1 + $0x6d0] sm:$0xff]
    %v1995 = vld [vmem:[%s1 + $0x6d8] sm:$0xff]
    %v1996 = vld [vmem:[%s1 + $0x6e0] sm:$0xff]
    %v1997 = vld [vmem:[%s1 + $0x6e8] sm:$0xff]
    %v1998 = vld [vmem:[%s1 + $0x6f0] sm:$0xff]
    %v1999 = vld [vmem:[%s1 + $0x6f8] sm:$0xff]
    %v2000 = vld [vmem:[%s1 + $0x700] sm:$0xff]
    %v2001 = vld [vmem:[%s1 + $0x708] sm:$0xff]
    %v2002 = vld [vmem:[%s1 + $0x710] sm:$0xff]
    %v2003 = vld [vmem:[%s1 + $0x718] sm:$0xff]
    %v2004 = vld [vmem:[%s1 + $0x720] sm:$0xff]
    %v2005 = vld [vmem:[%s1 + $0x728] sm:$0xff]
    %v2006 = vld [vmem:[%s1 + $0x730] sm:$0xff]
    %v2007 = vld [vmem:[%s1 + $0x738] sm:$0xff]
    %v2008 = vld [vmem:[%s1 + $0x740] sm:$0xff]
    %v2009 = vld [vmem:[%s1 + $0x748] sm:$0xff]
    %v2010 = vld [vmem:[%s1 + $0x750] sm:$0xff]
    %v2011 = vld [vmem:[%s1 + $0x758] sm:$0xff]
    %v2012 = vld [vmem:[%s1 + $0x760] sm:$0xff]
    %v2013 = vld [vmem:[%s1 + $0x768] sm:$0xff]
    %v2014 = vld [vmem:[%s1 + $0x770] sm:$0xff]
    %v2015 = vld [vmem:[%s1 + $0x778] sm:$0xff]
    %v2016 = vld [vmem:[%s1 + $0x780] sm:$0xff]
    %v2017 = vld [vmem:[%s1 + $0x788] sm:$0xff]
    %v2018 = vld [vmem:[%s1 + $0x790] sm:$0xff]
    %v2019 = vld [vmem:[%s1 + $0x798] sm:$0xff]
    %v2020 = vld [vmem:[%s1 + $0x7a0] sm:$0xff]
    %v2021 = vld [vmem:[%s1 + $0x7a8] sm:$0xff]
    %v2022 = vld [vmem:[%s1 + $0x7b0] sm:$0xff]
    %v2023 = vld [vmem:[%s1 + $0x7b8] sm:$0xff]
    %v2024 = vld [vmem:[%s1 + $0x7c0] sm:$0xff]
    %v2025 = vld [vmem:[%s1 + $0x7c8] sm:$0xff]
    %v2026 = vld [vmem:[%s1 + $0x7d0] sm:$0xff]
    %v2027 = vld [vmem:[%s1 + $0x7d8] sm:$0xff]
    %v2028 = vld [vmem:[%s1 + $0x7e0] sm:$0xff]
    %v2029 = vld [vmem:[%s1 + $0x7e8] sm:$0xff]
    %v2030 = vld [vmem:[%s1 + $0x7f0] sm:$0xff]
    %v2031 = vld [vmem:[%s1 + $0x7f8] sm:$0xff]
    %v2032 = vld [vmem:[%s1 + $0x800] sm:$0xff]
    %v2033 = vld [vmem:[%s1 + $0x808] sm:$0xff]
    %v2034 = vld [vmem:[%s1 + $0x810] sm:$0xff]
    %v2035 = vld [vmem:[%s1 + $0x818] sm:$0xff]
    %v2036 = vld [vmem:[%s1 + $0x820] sm:$0xff]
    %v2037 = vld [vmem:[%s1 + $0x828] sm:$0xff]
    %v2038 = vld [vmem:[%s1 + $0x830] sm:$0xff]
    %v2039 = vld [vmem:[%s1 + $0x838] sm:$0xff]
    %v2040 = vld [vmem:[%s1 + $0x840] sm:$0xff]
    %v2041 = vld [vmem:[%s1 + $0x848] sm:$0xff]
    %v2042 = vld [vmem:[%s1 + $0x850] sm:$0xff]
    %v2043 = vld [vmem:[%s1 + $0x858] sm:$0xff]
    %v2044 = vld [vmem:[%s1 + $0x860] sm:$0xff]
    %v2045 = vld [vmem:[%s1 + $0x868] sm:$0xff]
    %v2046 = vld [vmem:[%s1 + $0x870] sm:$0xff]
    %v2047 = vld [vmem:[%s1 + $0x878] sm:$0xff]
    %v2048 = vld [vmem:[%s1 + $0x880] sm:$0xff]
    %v2049 = vld [vmem:[%s1 + $0x888] sm:$0xff]
    %v2050 = vld [vmem:[%s1 + $0x890] sm:$0xff]
    %v2051 = vld [vmem:[%s1 + $0x898] sm:$0xff]
    %v2052 = vld [vmem:[%s1 + $0x8a0] sm:$0xff]
    %v2053 = vld [vmem:[%s1 + $0x8a8] sm:$0xff]
    %v2054 = vld [vmem:[%s1 + $0x8b0] sm:$0xff]
    %v2055 = vld [vmem:[%s1 + $0x8b8] sm:$0xff]
    %v2056 = vld [vmem:[%s1 + $0x8c0] sm:$0xff]
    %v2057 = vld [vmem:[%s1 + $0x8c8] sm:$0xff]
    %v2058 = vld [vmem:[%s1 + $0x8d0] sm:$0xff]
    %v2059 = vld [vmem:[%s1 + $0x8d8] sm:$0xff]
    %v2060 = vld [vmem:[%s1 + $0x8e0] sm:$0xff]
    %v2061 = vld [vmem:[%s1 + $0x8e8] sm:$0xff]
    %v2062 = vld [vmem:[%s1 + $0x8f0] sm:$0xff]
    %v2063 = vld [vmem:[%s1 + $0x8f8] sm:$0xff]
    %v2064 = vld [vmem:[%s1 + $0x900] sm:$0xff]
    %v2065 = vld [vmem:[%s1 + $0x908] sm:$0xff]
    %v2066 = vld [vmem:[%s1 + $0x910] sm:$0xff]
    %v2067 = vld [vmem:[%s1 + $0x918] sm:$0xff]
    %v2068 = vld [vmem:[%s1 + $0x920] sm:$0xff]
    %v2069 = vld [vmem:[%s1 + $0x928] sm:$0xff]
    %v2070 = vld [vmem:[%s1 + $0x930] sm:$0xff]
    %v2071 = vld [vmem:[%s1 + $0x938] sm:$0xff]
    %v2072 = vld [vmem:[%s1 + $0x940] sm:$0xff]
    %v2073 = vld [vmem:[%s1 + $0x948] sm:$0xff]
    %v2074 = vld [vmem:[%s1 + $0x950] sm:$0xff]
    %v2075 = vld [vmem:[%s1 + $0x958] sm:$0xff]
    %v2076 = vld [vmem:[%s1 + $0x960] sm:$0xff]
    %v2077 = vld [vmem:[%s1 + $0x968] sm:$0xff]
    %v2078 = vld [vmem:[%s1 + $0x970] sm:$0xff]
    %v2079 = vld [vmem:[%s1 + $0x978] sm:$0xff]
    %v2080 = vld [vmem:[%s1 + $0x980] sm:$0xff]
    %v2081 = vld [vmem:[%s1 + $0x988] sm:$0xff]
    %v2082 = vld [vmem:[%s1 + $0x990] sm:$0xff]
    %v2083 = vld [vmem:[%s1 + $0x998] sm:$0xff]
    %v2084 = vld [vmem:[%s1 + $0x9a0] sm:$0xff]
    %v2085 = vld [vmem:[%s1 + $0x9a8] sm:$0xff]
    %v2086 = vld [vmem:[%s1 + $0x9b0] sm:$0xff]
    %v2087 = vld [vmem:[%s1 + $0x9b8] sm:$0xff]
    %v2088 = vld [vmem:[%s1 + $0x9c0] sm:$0xff]
    %v2089 = vld [vmem:[%s1 + $0x9c8] sm:$0xff]
    %v2090 = vld [vmem:[%s1 + $0x9d0] sm:$0xff]
    %v2091 = vld [vmem:[%s1 + $0x9d8] sm:$0xff]
    %v2092 = vld [vmem:[%s1 + $0x9e0] sm:$0xff]
    %v2093 = vld [vmem:[%s1 + $0x9e8] sm:$0xff]
    %v2094 = vld [vmem:[%s1 + $0x9f0] sm:$0xff]
    %v2095 = vld [vmem:[%s1 + $0x9f8] sm:$0xff]
    %v2096 = vld [vmem:[%s2] sm:$0xf]
    %v2098 = vlaneseq
    %v2099 = vshrl.u32 %v2098, 7
    %v2100 = vsub.s32 0, %v2099
    %v2101 = vrot.slane %v2096, %v2100
    %v2102 = vlaneseq
    %v2103 = vshrl.u32 %v2102, 7
    %v2104 = vsub.s32 1, %v2103
    %v2105 = vrot.slane %v2096, %v2104
    %v2106 = vlaneseq
    %v2107 = vshrl.u32 %v2106, 7
    %v2108 = vsub.s32 2, %v2107
    %v2109 = vrot.slane %v2096, %v2108
    %v2110 = vlaneseq
    %v2111 = vshrl.u32 %v2110, 7
    %v2112 = vsub.s32 3, %v2111
    %v2113 = vrot.slane %v2096, %v2112
    %v2278 = vunpack.c.l.b16 %v1616
    %v2279 = vunpack.c.h.b16 %v1616
    %v2280 = vunpack.c.l.b16 %v1617
    %v2281 = vunpack.c.h.b16 %v1617
    %v2282 = vunpack.c.l.b16 %v1618
    %v2283 = vunpack.c.h.b16 %v1618
    %v2284 = vunpack.c.l.b16 %v1619
    %v2285 = vunpack.c.h.b16 %v1619
    %v2286 = vunpack.c.l.b16 %v1620
    %v2287 = vunpack.c.h.b16 %v1620
    %v2288 = vunpack.c.l.b16 %v1621
    %v2289 = vunpack.c.h.b16 %v1621
    %v2290 = vunpack.c.l.b16 %v1622
    %v2291 = vunpack.c.h.b16 %v1622
    %v2292 = vunpack.c.l.b16 %v1623
    %v2293 = vunpack.c.h.b16 %v1623
    %v2294 = vunpack.c.l.b16 %v1624
    %v2295 = vunpack.c.h.b16 %v1624
    %v2296 = vunpack.c.l.b16 %v1625
    %v2297 = vunpack.c.h.b16 %v1625
    %v2298 = vunpack.c.l.b16 %v1626
    %v2299 = vunpack.c.h.b16 %v1626
    %v2300 = vunpack.c.l.b16 %v1627
    %v2301 = vunpack.c.h.b16 %v1627
    %v2302 = vunpack.c.l.b16 %v1628
    %v2303 = vunpack.c.h.b16 %v1628
    %v2304 = vunpack.c.l.b16 %v1629
    %v2305 = vunpack.c.h.b16 %v1629
    %v2306 = vunpack.c.l.b16 %v1630
    %v2307 = vunpack.c.h.b16 %v1630
    %v2308 = vunpack.c.l.b16 %v1631
    %v2309 = vunpack.c.h.b16 %v1631
    %v2310 = vunpack.c.l.b16 %v1632
    %v2311 = vunpack.c.h.b16 %v1632
    %v2312 = vunpack.c.l.b16 %v1633
    %v2313 = vunpack.c.h.b16 %v1633
    %v2314 = vunpack.c.l.b16 %v1634
    %v2315 = vunpack.c.h.b16 %v1634
    %v2316 = vunpack.c.l.b16 %v1635
    %v2317 = vunpack.c.h.b16 %v1635
    %v2318 = vunpack.c.l.b16 %v1636
    %v2319 = vunpack.c.h.b16 %v1636
    %v2320 = vunpack.c.l.b16 %v1637
    %v2321 = vunpack.c.h.b16 %v1637
    %v2322 = vunpack.c.l.b16 %v1638
    %v2323 = vunpack.c.h.b16 %v1638
    %v2324 = vunpack.c.l.b16 %v1639
    %v2325 = vunpack.c.h.b16 %v1639
    %v2326 = vunpack.c.l.b16 %v1640
    %v2327 = vunpack.c.h.b16 %v1640
    %v2328 = vunpack.c.l.b16 %v1641
    %v2329 = vunpack.c.h.b16 %v1641
    %v2330 = vunpack.c.l.b16 %v1642
    %v2331 = vunpack.c.h.b16 %v1642
    %v2332 = vunpack.c.l.b16 %v1643
    %v2333 = vunpack.c.h.b16 %v1643
    %v2334 = vunpack.c.l.b16 %v1644
    %v2335 = vunpack.c.h.b16 %v1644
    %v2336 = vunpack.c.l.b16 %v1645
    %v2337 = vunpack.c.h.b16 %v1645
    %v2338 = vunpack.c.l.b16 %v1646
    %v2339 = vunpack.c.h.b16 %v1646
    %v2340 = vunpack.c.l.b16 %v1647
    %v2341 = vunpack.c.h.b16 %v1647
    %v2342 = vunpack.c.l.b16 %v1648
    %v2343 = vunpack.c.h.b16 %v1648
    %v2344 = vunpack.c.l.b16 %v1649
    %v2345 = vunpack.c.h.b16 %v1649
    %v2346 = vunpack.c.l.b16 %v1650
    %v2347 = vunpack.c.h.b16 %v1650
    %v2348 = vunpack.c.l.b16 %v1651
    %v2349 = vunpack.c.h.b16 %v1651
    %v2350 = vunpack.c.l.b16 %v1652
    %v2351 = vunpack.c.h.b16 %v1652
    %v2352 = vunpack.c.l.b16 %v1653
    %v2353 = vunpack.c.h.b16 %v1653
    %v2354 = vunpack.c.l.b16 %v1654
    %v2355 = vunpack.c.h.b16 %v1654
    %v2356 = vunpack.c.l.b16 %v1655
    %v2357 = vunpack.c.h.b16 %v1655
    %v2358 = vunpack.c.l.b16 %v1656
    %v2359 = vunpack.c.h.b16 %v1656
    %v2360 = vunpack.c.l.b16 %v1657
    %v2361 = vunpack.c.h.b16 %v1657
    %v2362 = vunpack.c.l.b16 %v1658
    %v2363 = vunpack.c.h.b16 %v1658
    %v2364 = vunpack.c.l.b16 %v1659
    %v2365 = vunpack.c.h.b16 %v1659
    %v2366 = vunpack.c.l.b16 %v1660
    %v2367 = vunpack.c.h.b16 %v1660
    %v2368 = vunpack.c.l.b16 %v1661
    %v2369 = vunpack.c.h.b16 %v1661
    %v2370 = vunpack.c.l.b16 %v1662
    %v2371 = vunpack.c.h.b16 %v1662
    %v2372 = vunpack.c.l.b16 %v1663
    %v2373 = vunpack.c.h.b16 %v1663
    %v2374 = vunpack.c.l.b16 %v1664
    %v2375 = vunpack.c.h.b16 %v1664
    %v2376 = vunpack.c.l.b16 %v1665
    %v2377 = vunpack.c.h.b16 %v1665
    %v2378 = vunpack.c.l.b16 %v1666
    %v2379 = vunpack.c.h.b16 %v1666
    %v2380 = vunpack.c.l.b16 %v1667
    %v2381 = vunpack.c.h.b16 %v1667
    %v2382 = vunpack.c.l.b16 %v1668
    %v2383 = vunpack.c.h.b16 %v1668
    %v2384 = vunpack.c.l.b16 %v1669
    %v2385 = vunpack.c.h.b16 %v1669
    %v2386 = vunpack.c.l.b16 %v1670
    %v2387 = vunpack.c.h.b16 %v1670
    %v2388 = vunpack.c.l.b16 %v1671
    %v2389 = vunpack.c.h.b16 %v1671
    %v2390 = vunpack.c.l.b16 %v1672
    %v2391 = vunpack.c.h.b16 %v1672
    %v2392 = vunpack.c.l.b16 %v1673
    %v2393 = vunpack.c.h.b16 %v1673
    %v2394 = vunpack.c.l.b16 %v1674
    %v2395 = vunpack.c.h.b16 %v1674
    %v2396 = vunpack.c.l.b16 %v1675
    %v2397 = vunpack.c.h.b16 %v1675
    %v2398 = vunpack.c.l.b16 %v1676
    %v2399 = vunpack.c.h.b16 %v1676
    %v2400 = vunpack.c.l.b16 %v1677
    %v2401 = vunpack.c.h.b16 %v1677
    %v2402 = vunpack.c.l.b16 %v1678
    %v2403 = vunpack.c.h.b16 %v1678
    %v2404 = vunpack.c.l.b16 %v1679
    %v2405 = vunpack.c.h.b16 %v1679
    %v2406 = vunpack.c.l.b16 %v1680
    %v2407 = vunpack.c.h.b16 %v1680
    %v2408 = vunpack.c.l.b16 %v1681
    %v2409 = vunpack.c.h.b16 %v1681
    %v2410 = vunpack.c.l.b16 %v1682
    %v2411 = vunpack.c.h.b16 %v1682
    %v2412 = vunpack.c.l.b16 %v1683
    %v2413 = vunpack.c.h.b16 %v1683
    %v2414 = vunpack.c.l.b16 %v1684
    %v2415 = vunpack.c.h.b16 %v1684
    %v2416 = vunpack.c.l.b16 %v1685
    %v2417 = vunpack.c.h.b16 %v1685
    %v2418 = vunpack.c.l.b16 %v1686
    %v2419 = vunpack.c.h.b16 %v1686
    %v2420 = vunpack.c.l.b16 %v1687
    %v2421 = vunpack.c.h.b16 %v1687
    %v2422 = vunpack.c.l.b16 %v1688
    %v2423 = vunpack.c.h.b16 %v1688
    %v2424 = vunpack.c.l.b16 %v1689
    %v2425 = vunpack.c.h.b16 %v1689
    %v2426 = vunpack.c.l.b16 %v1690
    %v2427 = vunpack.c.h.b16 %v1690
    %v2428 = vunpack.c.l.b16 %v1691
    %v2429 = vunpack.c.h.b16 %v1691
    %v2430 = vunpack.c.l.b16 %v1692
    %v2431 = vunpack.c.h.b16 %v1692
    %v2432 = vunpack.c.l.b16 %v1693
    %v2433 = vunpack.c.h.b16 %v1693
    %v2434 = vunpack.c.l.b16 %v1694
    %v2435 = vunpack.c.h.b16 %v1694
    %v2436 = vunpack.c.l.b16 %v1695
    %v2437 = vunpack.c.h.b16 %v1695
    %v2438 = vunpack.c.l.b16 %v1696
    %v2439 = vunpack.c.h.b16 %v1696
    %v2440 = vunpack.c.l.b16 %v1697
    %v2441 = vunpack.c.h.b16 %v1697
    %v2442 = vunpack.c.l.b16 %v1698
    %v2443 = vunpack.c.h.b16 %v1698
    %v2444 = vunpack.c.l.b16 %v1699
    %v2445 = vunpack.c.h.b16 %v1699
    %v2446 = vunpack.c.l.b16 %v1700
    %v2447 = vunpack.c.h.b16 %v1700
    %v2448 = vunpack.c.l.b16 %v1701
    %v2449 = vunpack.c.h.b16 %v1701
    %v2450 = vunpack.c.l.b16 %v1702
    %v2451 = vunpack.c.h.b16 %v1702
    %v2452 = vunpack.c.l.b16 %v1703
    %v2453 = vunpack.c.h.b16 %v1703
    %v2454 = vunpack.c.l.b16 %v1704
    %v2455 = vunpack.c.h.b16 %v1704
    %v2456 = vunpack.c.l.b16 %v1705
    %v2457 = vunpack.c.h.b16 %v1705
    %v2458 = vunpack.c.l.b16 %v1706
    %v2459 = vunpack.c.h.b16 %v1706
    %v2460 = vunpack.c.l.b16 %v1707
    %v2461 = vunpack.c.h.b16 %v1707
    %v2462 = vunpack.c.l.b16 %v1708
    %v2463 = vunpack.c.h.b16 %v1708
    %v2464 = vunpack.c.l.b16 %v1709
    %v2465 = vunpack.c.h.b16 %v1709
    %v2466 = vunpack.c.l.b16 %v1710
    %v2467 = vunpack.c.h.b16 %v1710
    %v2468 = vunpack.c.l.b16 %v1711
    %v2469 = vunpack.c.h.b16 %v1711
    %v2470 = vunpack.c.l.b16 %v1712
    %v2471 = vunpack.c.h.b16 %v1712
    %v2472 = vunpack.c.l.b16 %v1713
    %v2473 = vunpack.c.h.b16 %v1713
    %v2474 = vunpack.c.l.b16 %v1714
    %v2475 = vunpack.c.h.b16 %v1714
    %v2476 = vunpack.c.l.b16 %v1715
    %v2477 = vunpack.c.h.b16 %v1715
    %v2478 = vunpack.c.l.b16 %v1716
    %v2479 = vunpack.c.h.b16 %v1716
    %v2480 = vunpack.c.l.b16 %v1717
    %v2481 = vunpack.c.h.b16 %v1717
    %v2482 = vunpack.c.l.b16 %v1718
    %v2483 = vunpack.c.h.b16 %v1718
    %v2484 = vunpack.c.l.b16 %v1719
    %v2485 = vunpack.c.h.b16 %v1719
    %v2486 = vunpack.c.l.b16 %v1720
    %v2487 = vunpack.c.h.b16 %v1720
    %v2488 = vunpack.c.l.b16 %v1721
    %v2489 = vunpack.c.h.b16 %v1721
    %v2490 = vunpack.c.l.b16 %v1722
    %v2491 = vunpack.c.h.b16 %v1722
    %v2492 = vunpack.c.l.b16 %v1723
    %v2493 = vunpack.c.h.b16 %v1723
    %v2494 = vunpack.c.l.b16 %v1724
    %v2495 = vunpack.c.h.b16 %v1724
    %v2496 = vunpack.c.l.b16 %v1725
    %v2497 = vunpack.c.h.b16 %v1725
    %v2498 = vunpack.c.l.b16 %v1726
    %v2499 = vunpack.c.h.b16 %v1726
    %v2500 = vunpack.c.l.b16 %v1727
    %v2501 = vunpack.c.h.b16 %v1727
    %v2502 = vunpack.c.l.b16 %v1728
    %v2503 = vunpack.c.h.b16 %v1728
    %v2504 = vunpack.c.l.b16 %v1729
    %v2505 = vunpack.c.h.b16 %v1729
    %v2506 = vunpack.c.l.b16 %v1730
    %v2507 = vunpack.c.h.b16 %v1730
    %v2508 = vunpack.c.l.b16 %v1731
    %v2509 = vunpack.c.h.b16 %v1731
    %v2510 = vunpack.c.l.b16 %v1732
    %v2511 = vunpack.c.h.b16 %v1732
    %v2512 = vunpack.c.l.b16 %v1733
    %v2513 = vunpack.c.h.b16 %v1733
    %v2514 = vunpack.c.l.b16 %v1734
    %v2515 = vunpack.c.h.b16 %v1734
    %v2516 = vunpack.c.l.b16 %v1735
    %v2517 = vunpack.c.h.b16 %v1735
    %v2518 = vunpack.c.l.b16 %v1736
    %v2519 = vunpack.c.h.b16 %v1736
    %v2520 = vunpack.c.l.b16 %v1737
    %v2521 = vunpack.c.h.b16 %v1737
    %v2522 = vunpack.c.l.b16 %v1738
    %v2523 = vunpack.c.h.b16 %v1738
    %v2524 = vunpack.c.l.b16 %v1739
    %v2525 = vunpack.c.h.b16 %v1739
    %v2526 = vunpack.c.l.b16 %v1740
    %v2527 = vunpack.c.h.b16 %v1740
    %v2528 = vunpack.c.l.b16 %v1741
    %v2529 = vunpack.c.h.b16 %v1741
    %v2530 = vunpack.c.l.b16 %v1742
    %v2531 = vunpack.c.h.b16 %v1742
    %v2532 = vunpack.c.l.b16 %v1743
    %v2533 = vunpack.c.h.b16 %v1743
    %v2534 = vunpack.c.l.b16 %v1744
    %v2535 = vunpack.c.h.b16 %v1744
    %v2536 = vunpack.c.l.b16 %v1745
    %v2537 = vunpack.c.h.b16 %v1745
    %v2538 = vunpack.c.l.b16 %v1746
    %v2539 = vunpack.c.h.b16 %v1746
    %v2540 = vunpack.c.l.b16 %v1747
    %v2541 = vunpack.c.h.b16 %v1747
    %v2542 = vunpack.c.l.b16 %v1748
    %v2543 = vunpack.c.h.b16 %v1748
    %v2544 = vunpack.c.l.b16 %v1749
    %v2545 = vunpack.c.h.b16 %v1749
    %v2546 = vunpack.c.l.b16 %v1750
    %v2547 = vunpack.c.h.b16 %v1750
    %v2548 = vunpack.c.l.b16 %v1751
    %v2549 = vunpack.c.h.b16 %v1751
    %v2550 = vunpack.c.l.b16 %v1752
    %v2551 = vunpack.c.h.b16 %v1752
    %v2552 = vunpack.c.l.b16 %v1753
    %v2553 = vunpack.c.h.b16 %v1753
    %v2554 = vunpack.c.l.b16 %v1754
    %v2555 = vunpack.c.h.b16 %v1754
    %v2556 = vunpack.c.l.b16 %v1755
    %v2557 = vunpack.c.h.b16 %v1755
    %v2558 = vunpack.c.l.b16 %v1756
    %v2559 = vunpack.c.h.b16 %v1756
    %v2560 = vunpack.c.l.b16 %v1757
    %v2561 = vunpack.c.h.b16 %v1757
    %v2562 = vunpack.c.l.b16 %v1758
    %v2563 = vunpack.c.h.b16 %v1758
    %v2564 = vunpack.c.l.b16 %v1759
    %v2565 = vunpack.c.h.b16 %v1759
    %v2566 = vunpack.c.l.b16 %v1760
    %v2567 = vunpack.c.h.b16 %v1760
    %v2568 = vunpack.c.l.b16 %v1761
    %v2569 = vunpack.c.h.b16 %v1761
    %v2570 = vunpack.c.l.b16 %v1762
    %v2571 = vunpack.c.h.b16 %v1762
    %v2572 = vunpack.c.l.b16 %v1763
    %v2573 = vunpack.c.h.b16 %v1763
    %v2574 = vunpack.c.l.b16 %v1764
    %v2575 = vunpack.c.h.b16 %v1764
    %v2576 = vunpack.c.l.b16 %v1765
    %v2577 = vunpack.c.h.b16 %v1765
    %v2578 = vunpack.c.l.b16 %v1766
    %v2579 = vunpack.c.h.b16 %v1766
    %v2580 = vunpack.c.l.b16 %v1767
    %v2581 = vunpack.c.h.b16 %v1767
    %v2582 = vunpack.c.l.b16 %v1768
    %v2583 = vunpack.c.h.b16 %v1768
    %v2584 = vunpack.c.l.b16 %v1769
    %v2585 = vunpack.c.h.b16 %v1769
    %v2586 = vunpack.c.l.b16 %v1770
    %v2587 = vunpack.c.h.b16 %v1770
    %v2588 = vunpack.c.l.b16 %v1771
    %v2589 = vunpack.c.h.b16 %v1771
    %v2590 = vunpack.c.l.b16 %v1772
    %v2591 = vunpack.c.h.b16 %v1772
    %v2592 = vunpack.c.l.b16 %v1773
    %v2593 = vunpack.c.h.b16 %v1773
    %v2594 = vunpack.c.l.b16 %v1774
    %v2595 = vunpack.c.h.b16 %v1774
    %v2596 = vunpack.c.l.b16 %v1775
    %v2597 = vunpack.c.h.b16 %v1775
    %v2598 = vlaneseq
    %v2599 = vand.u32 %v2598, 127
    %v2600 = vlaneseq
    %v2601 = vshrl.u32 %v2600, 7
    %v2602 = vsub.s32 %v2599, %v2601
    %v2603 = vrot.slane %v2278, %v2602
    %v2604 = vadd.s32 %v2599, 4294967288
    %v2605 = vlaneseq
    %v2606 = vshrl.u32 %v2605, 7
    %v2607 = vsub.s32 %v2604, %v2606
    %v2608 = vrot.slane %v2279, %v2607
    %vm2609 = vcmask 130112
    %v2610 = vsel %vm2609, %v2608, %v2603
    %v2611 = vadd.s32 %v2599, 4294967280
    %v2612 = vlaneseq
    %v2613 = vshrl.u32 %v2612, 7
    %v2614 = vsub.s32 %v2611, %v2613
    %v2615 = vrot.slane %v2280, %v2614
    %vm2616 = vcmask 195712
    %v2617 = vsel %vm2616, %v2615, %v2610
    %v2618 = vadd.s32 %v2599, 4294967272
    %v2619 = vlaneseq
    %v2620 = vshrl.u32 %v2619, 7
    %v2621 = vsub.s32 %v2618, %v2620
    %v2622 = vrot.slane %v2281, %v2621
    %vm2623 = vcmask 261312
    %v2624 = vsel %vm2623, %v2622, %v2617
    %v2625 = vadd.s32 %v2599, 4294967264
    %v2626 = vlaneseq
    %v2627 = vshrl.u32 %v2626, 7
    %v2628 = vsub.s32 %v2625, %v2627
    %v2629 = vrot.slane %v2282, %v2628
    %vm2630 = vcmask 326912
    %v2631 = vsel %vm2630, %v2629, %v2624
    %v2632 = vadd.s32 %v2599, 4294967256
    %v2633 = vlaneseq
    %v2634 = vshrl.u32 %v2633, 7
    %v2635 = vsub.s32 %v2632, %v2634
    %v2636 = vrot.slane %v2283, %v2635
    %vm2637 = vcmask 392512
    %v2638 = vsel %vm2637, %v2636, %v2631
    %v2639 = vadd.s32 %v2599, 4294967248
    %v2640 = vlaneseq
    %v2641 = vshrl.u32 %v2640, 7
    %v2642 = vsub.s32 %v2639, %v2641
    %v2643 = vrot.slane %v2284, %v2642
    %vm2644 = vcmask 458112
    %v2645 = vsel %vm2644, %v2643, %v2638
    %v2646 = vadd.s32 %v2599, 4294967240
    %v2647 = vlaneseq
    %v2648 = vshrl.u32 %v2647, 7
    %v2649 = vsub.s32 %v2646, %v2648
    %v2650 = vrot.slane %v2285, %v2649
    %vm2651 = vcmask 523712
    %v2652 = vsel %vm2651, %v2650, %v2645
    %v2653 = vadd.s32 %v2599, 4294967232
    %v2654 = vlaneseq
    %v2655 = vshrl.u32 %v2654, 7
    %v2656 = vsub.s32 %v2653, %v2655
    %v2657 = vrot.slane %v2286, %v2656
    %vm2658 = vcmask 589312
    %v2659 = vsel %vm2658, %v2657, %v2652
    %v2660 = vadd.s32 %v2599, 4294967224
    %v2661 = vlaneseq
    %v2662 = vshrl.u32 %v2661, 7
    %v2663 = vsub.s32 %v2660, %v2662
    %v2664 = vrot.slane %v2287, %v2663
    %vm2665 = vcmask 654912
    %v2666 = vsel %vm2665, %v2664, %v2659
    %v2667 = vadd.s32 %v2599, 4294967216
    %v2668 = vlaneseq
    %v2669 = vshrl.u32 %v2668, 7
    %v2670 = vsub.s32 %v2667, %v2669
    %v2671 = vrot.slane %v2288, %v2670
    %vm2672 = vcmask 720512
    %v2673 = vsel %vm2672, %v2671, %v2666
    %v2674 = vadd.s32 %v2599, 4294967208
    %v2675 = vlaneseq
    %v2676 = vshrl.u32 %v2675, 7
    %v2677 = vsub.s32 %v2674, %v2676
    %v2678 = vrot.slane %v2289, %v2677
    %vm2679 = vcmask 786112
    %v2680 = vsel %vm2679, %v2678, %v2673
    %v2681 = vadd.s32 %v2599, 4294967200
    %v2682 = vlaneseq
    %v2683 = vshrl.u32 %v2682, 7
    %v2684 = vsub.s32 %v2681, %v2683
    %v2685 = vrot.slane %v2290, %v2684
    %vm2686 = vcmask 851712
    %v2687 = vsel %vm2686, %v2685, %v2680
    %v2688 = vadd.s32 %v2599, 4294967192
    %v2689 = vlaneseq
    %v2690 = vshrl.u32 %v2689, 7
    %v2691 = vsub.s32 %v2688, %v2690
    %v2692 = vrot.slane %v2291, %v2691
    %vm2693 = vcmask 917312
    %v2694 = vsel %vm2693, %v2692, %v2687
    %v2695 = vadd.s32 %v2599, 4294967184
    %v2696 = vlaneseq
    %v2697 = vshrl.u32 %v2696, 7
    %v2698 = vsub.s32 %v2695, %v2697
    %v2699 = vrot.slane %v2292, %v2698
    %vm2700 = vcmask 982912
    %v2701 = vsel %vm2700, %v2699, %v2694
    %v2702 = vadd.s32 %v2599, 4294967176
    %v2703 = vlaneseq
    %v2704 = vshrl.u32 %v2703, 7
    %v2705 = vsub.s32 %v2702, %v2704
    %v2706 = vrot.slane %v2293, %v2705
    %vm2707 = vcmask 1048512
    %v2708 = vsel %vm2707, %v2706, %v2701
    %v2709 = vlaneseq
    %v2710 = vshrl.u32 %v2709, 7
    %v2711 = vsub.s32 %v2599, %v2710
    %v2712 = vrot.slane %v2294, %v2711
    %v2713 = vlaneseq
    %v2714 = vshrl.u32 %v2713, 7
    %v2715 = vsub.s32 %v2604, %v2714
    %v2716 = vrot.slane %v2295, %v2715
    %v2717 = vsel %vm2609, %v2716, %v2712
    %v2718 = vlaneseq
    %v2719 = vshrl.u32 %v2718, 7
    %v2720 = vsub.s32 %v2611, %v2719
    %v2721 = vrot.slane %v2296, %v2720
    %v2722 = vsel %vm2616, %v2721, %v2717
    %v2723 = vlaneseq
    %v2724 = vshrl.u32 %v2723, 7
    %v2725 = vsub.s32 %v2618, %v2724
    %v2726 = vrot.slane %v2297, %v2725
    %v2727 = vsel %vm2623, %v2726, %v2722
    %v2728 = vlaneseq
    %v2729 = vshrl.u32 %v2728, 7
    %v2730 = vsub.s32 %v2625, %v2729
    %v2731 = vrot.slane %v2298, %v2730
    %v2732 = vsel %vm2630, %v2731, %v2727
    %v2733 = vlaneseq
    %v2734 = vshrl.u32 %v2733, 7
    %v2735 = vsub.s32 %v2632, %v2734
    %v2736 = vrot.slane %v2299, %v2735
    %v2737 = vsel %vm2637, %v2736, %v2732
    %v2738 = vlaneseq
    %v2739 = vshrl.u32 %v2738, 7
    %v2740 = vsub.s32 %v2639, %v2739
    %v2741 = vrot.slane %v2300, %v2740
    %v2742 = vsel %vm2644, %v2741, %v2737
    %v2743 = vlaneseq
    %v2744 = vshrl.u32 %v2743, 7
    %v2745 = vsub.s32 %v2646, %v2744
    %v2746 = vrot.slane %v2301, %v2745
    %v2747 = vsel %vm2651, %v2746, %v2742
    %v2748 = vlaneseq
    %v2749 = vshrl.u32 %v2748, 7
    %v2750 = vsub.s32 %v2653, %v2749
    %v2751 = vrot.slane %v2302, %v2750
    %v2752 = vsel %vm2658, %v2751, %v2747
    %v2753 = vlaneseq
    %v2754 = vshrl.u32 %v2753, 7
    %v2755 = vsub.s32 %v2660, %v2754
    %v2756 = vrot.slane %v2303, %v2755
    %v2757 = vsel %vm2665, %v2756, %v2752
    %v2758 = vlaneseq
    %v2759 = vshrl.u32 %v2758, 7
    %v2760 = vsub.s32 %v2667, %v2759
    %v2761 = vrot.slane %v2304, %v2760
    %v2762 = vsel %vm2672, %v2761, %v2757
    %v2763 = vlaneseq
    %v2764 = vshrl.u32 %v2763, 7
    %v2765 = vsub.s32 %v2674, %v2764
    %v2766 = vrot.slane %v2305, %v2765
    %v2767 = vsel %vm2679, %v2766, %v2762
    %v2768 = vlaneseq
    %v2769 = vshrl.u32 %v2768, 7
    %v2770 = vsub.s32 %v2681, %v2769
    %v2771 = vrot.slane %v2306, %v2770
    %v2772 = vsel %vm2686, %v2771, %v2767
    %v2773 = vlaneseq
    %v2774 = vshrl.u32 %v2773, 7
    %v2775 = vsub.s32 %v2688, %v2774
    %v2776 = vrot.slane %v2307, %v2775
    %v2777 = vsel %vm2693, %v2776, %v2772
    %v2778 = vlaneseq
    %v2779 = vshrl.u32 %v2778, 7
    %v2780 = vsub.s32 %v2695, %v2779
    %v2781 = vrot.slane %v2308, %v2780
    %v2782 = vsel %vm2700, %v2781, %v2777
    %v2783 = vlaneseq
    %v2784 = vshrl.u32 %v2783, 7
    %v2785 = vsub.s32 %v2702, %v2784
    %v2786 = vrot.slane %v2309, %v2785
    %v2787 = vsel %vm2707, %v2786, %v2782
    %v2788 = vlaneseq
    %v2789 = vshrl.u32 %v2788, 7
    %v2790 = vsub.s32 %v2599, %v2789
    %v2791 = vrot.slane %v2310, %v2790
    %v2792 = vlaneseq
    %v2793 = vshrl.u32 %v2792, 7
    %v2794 = vsub.s32 %v2604, %v2793
    %v2795 = vrot.slane %v2311, %v2794
    %v2796 = vsel %vm2609, %v2795, %v2791
    %v2797 = vlaneseq
    %v2798 = vshrl.u32 %v2797, 7
    %v2799 = vsub.s32 %v2611, %v2798
    %v2800 = vrot.slane %v2312, %v2799
    %v2801 = vsel %vm2616, %v2800, %v2796
    %v2802 = vlaneseq
    %v2803 = vshrl.u32 %v2802, 7
    %v2804 = vsub.s32 %v2618, %v2803
    %v2805 = vrot.slane %v2313, %v2804
    %v2806 = vsel %vm2623, %v2805, %v2801
    %v2807 = vlaneseq
    %v2808 = vshrl.u32 %v2807, 7
    %v2809 = vsub.s32 %v2625, %v2808
    %v2810 = vrot.slane %v2314, %v2809
    %v2811 = vsel %vm2630, %v2810, %v2806
    %v2812 = vlaneseq
    %v2813 = vshrl.u32 %v2812, 7
    %v2814 = vsub.s32 %v2632, %v2813
    %v2815 = vrot.slane %v2315, %v2814
    %v2816 = vsel %vm2637, %v2815, %v2811
    %v2817 = vlaneseq
    %v2818 = vshrl.u32 %v2817, 7
    %v2819 = vsub.s32 %v2639, %v2818
    %v2820 = vrot.slane %v2316, %v2819
    %v2821 = vsel %vm2644, %v2820, %v2816
    %v2822 = vlaneseq
    %v2823 = vshrl.u32 %v2822, 7
    %v2824 = vsub.s32 %v2646, %v2823
    %v2825 = vrot.slane %v2317, %v2824
    %v2826 = vsel %vm2651, %v2825, %v2821
    %v2827 = vlaneseq
    %v2828 = vshrl.u32 %v2827, 7
    %v2829 = vsub.s32 %v2653, %v2828
    %v2830 = vrot.slane %v2318, %v2829
    %v2831 = vsel %vm2658, %v2830, %v2826
    %v2832 = vlaneseq
    %v2833 = vshrl.u32 %v2832, 7
    %v2834 = vsub.s32 %v2660, %v2833
    %v2835 = vrot.slane %v2319, %v2834
    %v2836 = vsel %vm2665, %v2835, %v2831
    %v2837 = vlaneseq
    %v2838 = vshrl.u32 %v2837, 7
    %v2839 = vsub.s32 %v2667, %v2838
    %v2840 = vrot.slane %v2320, %v2839
    %v2841 = vsel %vm2672, %v2840, %v2836
    %v2842 = vlaneseq
    %v2843 = vshrl.u32 %v2842, 7
    %v2844 = vsub.s32 %v2674, %v2843
    %v2845 = vrot.slane %v2321, %v2844
    %v2846 = vsel %vm2679, %v2845, %v2841
    %v2847 = vlaneseq
    %v2848 = vshrl.u32 %v2847, 7
    %v2849 = vsub.s32 %v2681, %v2848
    %v2850 = vrot.slane %v2322, %v2849
    %v2851 = vsel %vm2686, %v2850, %v2846
    %v2852 = vlaneseq
    %v2853 = vshrl.u32 %v2852, 7
    %v2854 = vsub.s32 %v2688, %v2853
    %v2855 = vrot.slane %v2323, %v2854
    %v2856 = vsel %vm2693, %v2855, %v2851
    %v2857 = vlaneseq
    %v2858 = vshrl.u32 %v2857, 7
    %v2859 = vsub.s32 %v2695, %v2858
    %v2860 = vrot.slane %v2324, %v2859
    %v2861 = vsel %vm2700, %v2860, %v2856
    %v2862 = vlaneseq
    %v2863 = vshrl.u32 %v2862, 7
    %v2864 = vsub.s32 %v2702, %v2863
    %v2865 = vrot.slane %v2325, %v2864
    %v2866 = vsel %vm2707, %v2865, %v2861
    %v2867 = vlaneseq
    %v2868 = vshrl.u32 %v2867, 7
    %v2869 = vsub.s32 %v2599, %v2868
    %v2870 = vrot.slane %v2326, %v2869
    %v2871 = vlaneseq
    %v2872 = vshrl.u32 %v2871, 7
    %v2873 = vsub.s32 %v2604, %v2872
    %v2874 = vrot.slane %v2327, %v2873
    %v2875 = vsel %vm2609, %v2874, %v2870
    %v2876 = vlaneseq
    %v2877 = vshrl.u32 %v2876, 7
    %v2878 = vsub.s32 %v2611, %v2877
    %v2879 = vrot.slane %v2328, %v2878
    %v2880 = vsel %vm2616, %v2879, %v2875
    %v2881 = vlaneseq
    %v2882 = vshrl.u32 %v2881, 7
    %v2883 = vsub.s32 %v2618, %v2882
    %v2884 = vrot.slane %v2329, %v2883
    %v2885 = vsel %vm2623, %v2884, %v2880
    %v2886 = vlaneseq
    %v2887 = vshrl.u32 %v2886, 7
    %v2888 = vsub.s32 %v2625, %v2887
    %v2889 = vrot.slane %v2330, %v2888
    %v2890 = vsel %vm2630, %v2889, %v2885
    %v2891 = vlaneseq
    %v2892 = vshrl.u32 %v2891, 7
    %v2893 = vsub.s32 %v2632, %v2892
    %v2894 = vrot.slane %v2331, %v2893
    %v2895 = vsel %vm2637, %v2894, %v2890
    %v2896 = vlaneseq
    %v2897 = vshrl.u32 %v2896, 7
    %v2898 = vsub.s32 %v2639, %v2897
    %v2899 = vrot.slane %v2332, %v2898
    %v2900 = vsel %vm2644, %v2899, %v2895
    %v2901 = vlaneseq
    %v2902 = vshrl.u32 %v2901, 7
    %v2903 = vsub.s32 %v2646, %v2902
    %v2904 = vrot.slane %v2333, %v2903
    %v2905 = vsel %vm2651, %v2904, %v2900
    %v2906 = vlaneseq
    %v2907 = vshrl.u32 %v2906, 7
    %v2908 = vsub.s32 %v2653, %v2907
    %v2909 = vrot.slane %v2334, %v2908
    %v2910 = vsel %vm2658, %v2909, %v2905
    %v2911 = vlaneseq
    %v2912 = vshrl.u32 %v2911, 7
    %v2913 = vsub.s32 %v2660, %v2912
    %v2914 = vrot.slane %v2335, %v2913
    %v2915 = vsel %vm2665, %v2914, %v2910
    %v2916 = vlaneseq
    %v2917 = vshrl.u32 %v2916, 7
    %v2918 = vsub.s32 %v2667, %v2917
    %v2919 = vrot.slane %v2336, %v2918
    %v2920 = vsel %vm2672, %v2919, %v2915
    %v2921 = vlaneseq
    %v2922 = vshrl.u32 %v2921, 7
    %v2923 = vsub.s32 %v2674, %v2922
    %v2924 = vrot.slane %v2337, %v2923
    %v2925 = vsel %vm2679, %v2924, %v2920
    %v2926 = vlaneseq
    %v2927 = vshrl.u32 %v2926, 7
    %v2928 = vsub.s32 %v2681, %v2927
    %v2929 = vrot.slane %v2338, %v2928
    %v2930 = vsel %vm2686, %v2929, %v2925
    %v2931 = vlaneseq
    %v2932 = vshrl.u32 %v2931, 7
    %v2933 = vsub.s32 %v2688, %v2932
    %v2934 = vrot.slane %v2339, %v2933
    %v2935 = vsel %vm2693, %v2934, %v2930
    %v2936 = vlaneseq
    %v2937 = vshrl.u32 %v2936, 7
    %v2938 = vsub.s32 %v2695, %v2937
    %v2939 = vrot.slane %v2340, %v2938
    %v2940 = vsel %vm2700, %v2939, %v2935
    %v2941 = vlaneseq
    %v2942 = vshrl.u32 %v2941, 7
    %v2943 = vsub.s32 %v2702, %v2942
    %v2944 = vrot.slane %v2341, %v2943
    %v2945 = vsel %vm2707, %v2944, %v2940
    %v2946 = vlaneseq
    %v2947 = vshrl.u32 %v2946, 7
    %v2948 = vsub.s32 %v2599, %v2947
    %v2949 = vrot.slane %v2342, %v2948
    %v2950 = vlaneseq
    %v2951 = vshrl.u32 %v2950, 7
    %v2952 = vsub.s32 %v2604, %v2951
    %v2953 = vrot.slane %v2343, %v2952
    %v2954 = vsel %vm2609, %v2953, %v2949
    %v2955 = vlaneseq
    %v2956 = vshrl.u32 %v2955, 7
    %v2957 = vsub.s32 %v2611, %v2956
    %v2958 = vrot.slane %v2344, %v2957
    %v2959 = vsel %vm2616, %v2958, %v2954
    %v2960 = vlaneseq
    %v2961 = vshrl.u32 %v2960, 7
    %v2962 = vsub.s32 %v2618, %v2961
    %v2963 = vrot.slane %v2345, %v2962
    %v2964 = vsel %vm2623, %v2963, %v2959
    %v2965 = vlaneseq
    %v2966 = vshrl.u32 %v2965, 7
    %v2967 = vsub.s32 %v2625, %v2966
    %v2968 = vrot.slane %v2346, %v2967
    %v2969 = vsel %vm2630, %v2968, %v2964
    %v2970 = vlaneseq
    %v2971 = vshrl.u32 %v2970, 7
    %v2972 = vsub.s32 %v2632, %v2971
    %v2973 = vrot.slane %v2347, %v2972
    %v2974 = vsel %vm2637, %v2973, %v2969
    %v2975 = vlaneseq
    %v2976 = vshrl.u32 %v2975, 7
    %v2977 = vsub.s32 %v2639, %v2976
    %v2978 = vrot.slane %v2348, %v2977
    %v2979 = vsel %vm2644, %v2978, %v2974
    %v2980 = vlaneseq
    %v2981 = vshrl.u32 %v2980, 7
    %v2982 = vsub.s32 %v2646, %v2981
    %v2983 = vrot.slane %v2349, %v2982
    %v2984 = vsel %vm2651, %v2983, %v2979
    %v2985 = vlaneseq
    %v2986 = vshrl.u32 %v2985, 7
    %v2987 = vsub.s32 %v2653, %v2986
    %v2988 = vrot.slane %v2350, %v2987
    %v2989 = vsel %vm2658, %v2988, %v2984
    %v2990 = vlaneseq
    %v2991 = vshrl.u32 %v2990, 7
    %v2992 = vsub.s32 %v2660, %v2991
    %v2993 = vrot.slane %v2351, %v2992
    %v2994 = vsel %vm2665, %v2993, %v2989
    %v2995 = vlaneseq
    %v2996 = vshrl.u32 %v2995, 7
    %v2997 = vsub.s32 %v2667, %v2996
    %v2998 = vrot.slane %v2352, %v2997
    %v2999 = vsel %vm2672, %v2998, %v2994
    %v3000 = vlaneseq
    %v3001 = vshrl.u32 %v3000, 7
    %v3002 = vsub.s32 %v2674, %v3001
    %v3003 = vrot.slane %v2353, %v3002
    %v3004 = vsel %vm2679, %v3003, %v2999
    %v3005 = vlaneseq
    %v3006 = vshrl.u32 %v3005, 7
    %v3007 = vsub.s32 %v2681, %v3006
    %v3008 = vrot.slane %v2354, %v3007
    %v3009 = vsel %vm2686, %v3008, %v3004
    %v3010 = vlaneseq
    %v3011 = vshrl.u32 %v3010, 7
    %v3012 = vsub.s32 %v2688, %v3011
    %v3013 = vrot.slane %v2355, %v3012
    %v3014 = vsel %vm2693, %v3013, %v3009
    %v3015 = vlaneseq
    %v3016 = vshrl.u32 %v3015, 7
    %v3017 = vsub.s32 %v2695, %v3016
    %v3018 = vrot.slane %v2356, %v3017
    %v3019 = vsel %vm2700, %v3018, %v3014
    %v3020 = vlaneseq
    %v3021 = vshrl.u32 %v3020, 7
    %v3022 = vsub.s32 %v2702, %v3021
    %v3023 = vrot.slane %v2357, %v3022
    %v3024 = vsel %vm2707, %v3023, %v3019
    %v3025 = vlaneseq
    %v3026 = vshrl.u32 %v3025, 7
    %v3027 = vsub.s32 %v2599, %v3026
    %v3028 = vrot.slane %v2358, %v3027
    %v3029 = vlaneseq
    %v3030 = vshrl.u32 %v3029, 7
    %v3031 = vsub.s32 %v2604, %v3030
    %v3032 = vrot.slane %v2359, %v3031
    %v3033 = vsel %vm2609, %v3032, %v3028
    %v3034 = vlaneseq
    %v3035 = vshrl.u32 %v3034, 7
    %v3036 = vsub.s32 %v2611, %v3035
    %v3037 = vrot.slane %v2360, %v3036
    %v3038 = vsel %vm2616, %v3037, %v3033
    %v3039 = vlaneseq
    %v3040 = vshrl.u32 %v3039, 7
    %v3041 = vsub.s32 %v2618, %v3040
    %v3042 = vrot.slane %v2361, %v3041
    %v3043 = vsel %vm2623, %v3042, %v3038
    %v3044 = vlaneseq
    %v3045 = vshrl.u32 %v3044, 7
    %v3046 = vsub.s32 %v2625, %v3045
    %v3047 = vrot.slane %v2362, %v3046
    %v3048 = vsel %vm2630, %v3047, %v3043
    %v3049 = vlaneseq
    %v3050 = vshrl.u32 %v3049, 7
    %v3051 = vsub.s32 %v2632, %v3050
    %v3052 = vrot.slane %v2363, %v3051
    %v3053 = vsel %vm2637, %v3052, %v3048
    %v3054 = vlaneseq
    %v3055 = vshrl.u32 %v3054, 7
    %v3056 = vsub.s32 %v2639, %v3055
    %v3057 = vrot.slane %v2364, %v3056
    %v3058 = vsel %vm2644, %v3057, %v3053
    %v3059 = vlaneseq
    %v3060 = vshrl.u32 %v3059, 7
    %v3061 = vsub.s32 %v2646, %v3060
    %v3062 = vrot.slane %v2365, %v3061
    %v3063 = vsel %vm2651, %v3062, %v3058
    %v3064 = vlaneseq
    %v3065 = vshrl.u32 %v3064, 7
    %v3066 = vsub.s32 %v2653, %v3065
    %v3067 = vrot.slane %v2366, %v3066
    %v3068 = vsel %vm2658, %v3067, %v3063
    %v3069 = vlaneseq
    %v3070 = vshrl.u32 %v3069, 7
    %v3071 = vsub.s32 %v2660, %v3070
    %v3072 = vrot.slane %v2367, %v3071
    %v3073 = vsel %vm2665, %v3072, %v3068
    %v3074 = vlaneseq
    %v3075 = vshrl.u32 %v3074, 7
    %v3076 = vsub.s32 %v2667, %v3075
    %v3077 = vrot.slane %v2368, %v3076
    %v3078 = vsel %vm2672, %v3077, %v3073
    %v3079 = vlaneseq
    %v3080 = vshrl.u32 %v3079, 7
    %v3081 = vsub.s32 %v2674, %v3080
    %v3082 = vrot.slane %v2369, %v3081
    %v3083 = vsel %vm2679, %v3082, %v3078
    %v3084 = vlaneseq
    %v3085 = vshrl.u32 %v3084, 7
    %v3086 = vsub.s32 %v2681, %v3085
    %v3087 = vrot.slane %v2370, %v3086
    %v3088 = vsel %vm2686, %v3087, %v3083
    %v3089 = vlaneseq
    %v3090 = vshrl.u32 %v3089, 7
    %v3091 = vsub.s32 %v2688, %v3090
    %v3092 = vrot.slane %v2371, %v3091
    %v3093 = vsel %vm2693, %v3092, %v3088
    %v3094 = vlaneseq
    %v3095 = vshrl.u32 %v3094, 7
    %v3096 = vsub.s32 %v2695, %v3095
    %v3097 = vrot.slane %v2372, %v3096
    %v3098 = vsel %vm2700, %v3097, %v3093
    %v3099 = vlaneseq
    %v3100 = vshrl.u32 %v3099, 7
    %v3101 = vsub.s32 %v2702, %v3100
    %v3102 = vrot.slane %v2373, %v3101
    %v3103 = vsel %vm2707, %v3102, %v3098
    %v3104 = vlaneseq
    %v3105 = vshrl.u32 %v3104, 7
    %v3106 = vsub.s32 %v2599, %v3105
    %v3107 = vrot.slane %v2374, %v3106
    %v3108 = vlaneseq
    %v3109 = vshrl.u32 %v3108, 7
    %v3110 = vsub.s32 %v2604, %v3109
    %v3111 = vrot.slane %v2375, %v3110
    %v3112 = vsel %vm2609, %v3111, %v3107
    %v3113 = vlaneseq
    %v3114 = vshrl.u32 %v3113, 7
    %v3115 = vsub.s32 %v2611, %v3114
    %v3116 = vrot.slane %v2376, %v3115
    %v3117 = vsel %vm2616, %v3116, %v3112
    %v3118 = vlaneseq
    %v3119 = vshrl.u32 %v3118, 7
    %v3120 = vsub.s32 %v2618, %v3119
    %v3121 = vrot.slane %v2377, %v3120
    %v3122 = vsel %vm2623, %v3121, %v3117
    %v3123 = vlaneseq
    %v3124 = vshrl.u32 %v3123, 7
    %v3125 = vsub.s32 %v2625, %v3124
    %v3126 = vrot.slane %v2378, %v3125
    %v3127 = vsel %vm2630, %v3126, %v3122
    %v3128 = vlaneseq
    %v3129 = vshrl.u32 %v3128, 7
    %v3130 = vsub.s32 %v2632, %v3129
    %v3131 = vrot.slane %v2379, %v3130
    %v3132 = vsel %vm2637, %v3131, %v3127
    %v3133 = vlaneseq
    %v3134 = vshrl.u32 %v3133, 7
    %v3135 = vsub.s32 %v2639, %v3134
    %v3136 = vrot.slane %v2380, %v3135
    %v3137 = vsel %vm2644, %v3136, %v3132
    %v3138 = vlaneseq
    %v3139 = vshrl.u32 %v3138, 7
    %v3140 = vsub.s32 %v2646, %v3139
    %v3141 = vrot.slane %v2381, %v3140
    %v3142 = vsel %vm2651, %v3141, %v3137
    %v3143 = vlaneseq
    %v3144 = vshrl.u32 %v3143, 7
    %v3145 = vsub.s32 %v2653, %v3144
    %v3146 = vrot.slane %v2382, %v3145
    %v3147 = vsel %vm2658, %v3146, %v3142
    %v3148 = vlaneseq
    %v3149 = vshrl.u32 %v3148, 7
    %v3150 = vsub.s32 %v2660, %v3149
    %v3151 = vrot.slane %v2383, %v3150
    %v3152 = vsel %vm2665, %v3151, %v3147
    %v3153 = vlaneseq
    %v3154 = vshrl.u32 %v3153, 7
    %v3155 = vsub.s32 %v2667, %v3154
    %v3156 = vrot.slane %v2384, %v3155
    %v3157 = vsel %vm2672, %v3156, %v3152
    %v3158 = vlaneseq
    %v3159 = vshrl.u32 %v3158, 7
    %v3160 = vsub.s32 %v2674, %v3159
    %v3161 = vrot.slane %v2385, %v3160
    %v3162 = vsel %vm2679, %v3161, %v3157
    %v3163 = vlaneseq
    %v3164 = vshrl.u32 %v3163, 7
    %v3165 = vsub.s32 %v2681, %v3164
    %v3166 = vrot.slane %v2386, %v3165
    %v3167 = vsel %vm2686, %v3166, %v3162
    %v3168 = vlaneseq
    %v3169 = vshrl.u32 %v3168, 7
    %v3170 = vsub.s32 %v2688, %v3169
    %v3171 = vrot.slane %v2387, %v3170
    %v3172 = vsel %vm2693, %v3171, %v3167
    %v3173 = vlaneseq
    %v3174 = vshrl.u32 %v3173, 7
    %v3175 = vsub.s32 %v2695, %v3174
    %v3176 = vrot.slane %v2388, %v3175
    %v3177 = vsel %vm2700, %v3176, %v3172
    %v3178 = vlaneseq
    %v3179 = vshrl.u32 %v3178, 7
    %v3180 = vsub.s32 %v2702, %v3179
    %v3181 = vrot.slane %v2389, %v3180
    %v3182 = vsel %vm2707, %v3181, %v3177
    %v3183 = vlaneseq
    %v3184 = vshrl.u32 %v3183, 7
    %v3185 = vsub.s32 %v2599, %v3184
    %v3186 = vrot.slane %v2390, %v3185
    %v3187 = vlaneseq
    %v3188 = vshrl.u32 %v3187, 7
    %v3189 = vsub.s32 %v2604, %v3188
    %v3190 = vrot.slane %v2391, %v3189
    %v3191 = vsel %vm2609, %v3190, %v3186
    %v3192 = vlaneseq
    %v3193 = vshrl.u32 %v3192, 7
    %v3194 = vsub.s32 %v2611, %v3193
    %v3195 = vrot.slane %v2392, %v3194
    %v3196 = vsel %vm2616, %v3195, %v3191
    %v3197 = vlaneseq
    %v3198 = vshrl.u32 %v3197, 7
    %v3199 = vsub.s32 %v2618, %v3198
    %v3200 = vrot.slane %v2393, %v3199
    %v3201 = vsel %vm2623, %v3200, %v3196
    %v3202 = vlaneseq
    %v3203 = vshrl.u32 %v3202, 7
    %v3204 = vsub.s32 %v2625, %v3203
    %v3205 = vrot.slane %v2394, %v3204
    %v3206 = vsel %vm2630, %v3205, %v3201
    %v3207 = vlaneseq
    %v3208 = vshrl.u32 %v3207, 7
    %v3209 = vsub.s32 %v2632, %v3208
    %v3210 = vrot.slane %v2395, %v3209
    %v3211 = vsel %vm2637, %v3210, %v3206
    %v3212 = vlaneseq
    %v3213 = vshrl.u32 %v3212, 7
    %v3214 = vsub.s32 %v2639, %v3213
    %v3215 = vrot.slane %v2396, %v3214
    %v3216 = vsel %vm2644, %v3215, %v3211
    %v3217 = vlaneseq
    %v3218 = vshrl.u32 %v3217, 7
    %v3219 = vsub.s32 %v2646, %v3218
    %v3220 = vrot.slane %v2397, %v3219
    %v3221 = vsel %vm2651, %v3220, %v3216
    %v3222 = vlaneseq
    %v3223 = vshrl.u32 %v3222, 7
    %v3224 = vsub.s32 %v2653, %v3223
    %v3225 = vrot.slane %v2398, %v3224
    %v3226 = vsel %vm2658, %v3225, %v3221
    %v3227 = vlaneseq
    %v3228 = vshrl.u32 %v3227, 7
    %v3229 = vsub.s32 %v2660, %v3228
    %v3230 = vrot.slane %v2399, %v3229
    %v3231 = vsel %vm2665, %v3230, %v3226
    %v3232 = vlaneseq
    %v3233 = vshrl.u32 %v3232, 7
    %v3234 = vsub.s32 %v2667, %v3233
    %v3235 = vrot.slane %v2400, %v3234
    %v3236 = vsel %vm2672, %v3235, %v3231
    %v3237 = vlaneseq
    %v3238 = vshrl.u32 %v3237, 7
    %v3239 = vsub.s32 %v2674, %v3238
    %v3240 = vrot.slane %v2401, %v3239
    %v3241 = vsel %vm2679, %v3240, %v3236
    %v3242 = vlaneseq
    %v3243 = vshrl.u32 %v3242, 7
    %v3244 = vsub.s32 %v2681, %v3243
    %v3245 = vrot.slane %v2402, %v3244
    %v3246 = vsel %vm2686, %v3245, %v3241
    %v3247 = vlaneseq
    %v3248 = vshrl.u32 %v3247, 7
    %v3249 = vsub.s32 %v2688, %v3248
    %v3250 = vrot.slane %v2403, %v3249
    %v3251 = vsel %vm2693, %v3250, %v3246
    %v3252 = vlaneseq
    %v3253 = vshrl.u32 %v3252, 7
    %v3254 = vsub.s32 %v2695, %v3253
    %v3255 = vrot.slane %v2404, %v3254
    %v3256 = vsel %vm2700, %v3255, %v3251
    %v3257 = vlaneseq
    %v3258 = vshrl.u32 %v3257, 7
    %v3259 = vsub.s32 %v2702, %v3258
    %v3260 = vrot.slane %v2405, %v3259
    %v3261 = vsel %vm2707, %v3260, %v3256
    %v3262 = vlaneseq
    %v3263 = vshrl.u32 %v3262, 7
    %v3264 = vsub.s32 %v2599, %v3263
    %v3265 = vrot.slane %v2406, %v3264
    %v3266 = vlaneseq
    %v3267 = vshrl.u32 %v3266, 7
    %v3268 = vsub.s32 %v2604, %v3267
    %v3269 = vrot.slane %v2407, %v3268
    %v3270 = vsel %vm2609, %v3269, %v3265
    %v3271 = vlaneseq
    %v3272 = vshrl.u32 %v3271, 7
    %v3273 = vsub.s32 %v2611, %v3272
    %v3274 = vrot.slane %v2408, %v3273
    %v3275 = vsel %vm2616, %v3274, %v3270
    %v3276 = vlaneseq
    %v3277 = vshrl.u32 %v3276, 7
    %v3278 = vsub.s32 %v2618, %v3277
    %v3279 = vrot.slane %v2409, %v3278
    %v3280 = vsel %vm2623, %v3279, %v3275
    %v3281 = vlaneseq
    %v3282 = vshrl.u32 %v3281, 7
    %v3283 = vsub.s32 %v2625, %v3282
    %v3284 = vrot.slane %v2410, %v3283
    %v3285 = vsel %vm2630, %v3284, %v3280
    %v3286 = vlaneseq
    %v3287 = vshrl.u32 %v3286, 7
    %v3288 = vsub.s32 %v2632, %v3287
    %v3289 = vrot.slane %v2411, %v3288
    %v3290 = vsel %vm2637, %v3289, %v3285
    %v3291 = vlaneseq
    %v3292 = vshrl.u32 %v3291, 7
    %v3293 = vsub.s32 %v2639, %v3292
    %v3294 = vrot.slane %v2412, %v3293
    %v3295 = vsel %vm2644, %v3294, %v3290
    %v3296 = vlaneseq
    %v3297 = vshrl.u32 %v3296, 7
    %v3298 = vsub.s32 %v2646, %v3297
    %v3299 = vrot.slane %v2413, %v3298
    %v3300 = vsel %vm2651, %v3299, %v3295
    %v3301 = vlaneseq
    %v3302 = vshrl.u32 %v3301, 7
    %v3303 = vsub.s32 %v2653, %v3302
    %v3304 = vrot.slane %v2414, %v3303
    %v3305 = vsel %vm2658, %v3304, %v3300
    %v3306 = vlaneseq
    %v3307 = vshrl.u32 %v3306, 7
    %v3308 = vsub.s32 %v2660, %v3307
    %v3309 = vrot.slane %v2415, %v3308
    %v3310 = vsel %vm2665, %v3309, %v3305
    %v3311 = vlaneseq
    %v3312 = vshrl.u32 %v3311, 7
    %v3313 = vsub.s32 %v2667, %v3312
    %v3314 = vrot.slane %v2416, %v3313
    %v3315 = vsel %vm2672, %v3314, %v3310
    %v3316 = vlaneseq
    %v3317 = vshrl.u32 %v3316, 7
    %v3318 = vsub.s32 %v2674, %v3317
    %v3319 = vrot.slane %v2417, %v3318
    %v3320 = vsel %vm2679, %v3319, %v3315
    %v3321 = vlaneseq
    %v3322 = vshrl.u32 %v3321, 7
    %v3323 = vsub.s32 %v2681, %v3322
    %v3324 = vrot.slane %v2418, %v3323
    %v3325 = vsel %vm2686, %v3324, %v3320
    %v3326 = vlaneseq
    %v3327 = vshrl.u32 %v3326, 7
    %v3328 = vsub.s32 %v2688, %v3327
    %v3329 = vrot.slane %v2419, %v3328
    %v3330 = vsel %vm2693, %v3329, %v3325
    %v3331 = vlaneseq
    %v3332 = vshrl.u32 %v3331, 7
    %v3333 = vsub.s32 %v2695, %v3332
    %v3334 = vrot.slane %v2420, %v3333
    %v3335 = vsel %vm2700, %v3334, %v3330
    %v3336 = vlaneseq
    %v3337 = vshrl.u32 %v3336, 7
    %v3338 = vsub.s32 %v2702, %v3337
    %v3339 = vrot.slane %v2421, %v3338
    %v3340 = vsel %vm2707, %v3339, %v3335
    %v3341 = vlaneseq
    %v3342 = vshrl.u32 %v3341, 7
    %v3343 = vsub.s32 %v2599, %v3342
    %v3344 = vrot.slane %v2422, %v3343
    %v3345 = vlaneseq
    %v3346 = vshrl.u32 %v3345, 7
    %v3347 = vsub.s32 %v2604, %v3346
    %v3348 = vrot.slane %v2423, %v3347
    %v3349 = vsel %vm2609, %v3348, %v3344
    %v3350 = vlaneseq
    %v3351 = vshrl.u32 %v3350, 7
    %v3352 = vsub.s32 %v2611, %v3351
    %v3353 = vrot.slane %v2424, %v3352
    %v3354 = vsel %vm2616, %v3353, %v3349
    %v3355 = vlaneseq
    %v3356 = vshrl.u32 %v3355, 7
    %v3357 = vsub.s32 %v2618, %v3356
    %v3358 = vrot.slane %v2425, %v3357
    %v3359 = vsel %vm2623, %v3358, %v3354
    %v3360 = vlaneseq
    %v3361 = vshrl.u32 %v3360, 7
    %v3362 = vsub.s32 %v2625, %v3361
    %v3363 = vrot.slane %v2426, %v3362
    %v3364 = vsel %vm2630, %v3363, %v3359
    %v3365 = vlaneseq
    %v3366 = vshrl.u32 %v3365, 7
    %v3367 = vsub.s32 %v2632, %v3366
    %v3368 = vrot.slane %v2427, %v3367
    %v3369 = vsel %vm2637, %v3368, %v3364
    %v3370 = vlaneseq
    %v3371 = vshrl.u32 %v3370, 7
    %v3372 = vsub.s32 %v2639, %v3371
    %v3373 = vrot.slane %v2428, %v3372
    %v3374 = vsel %vm2644, %v3373, %v3369
    %v3375 = vlaneseq
    %v3376 = vshrl.u32 %v3375, 7
    %v3377 = vsub.s32 %v2646, %v3376
    %v3378 = vrot.slane %v2429, %v3377
    %v3379 = vsel %vm2651, %v3378, %v3374
    %v3380 = vlaneseq
    %v3381 = vshrl.u32 %v3380, 7
    %v3382 = vsub.s32 %v2653, %v3381
    %v3383 = vrot.slane %v2430, %v3382
    %v3384 = vsel %vm2658, %v3383, %v3379
    %v3385 = vlaneseq
    %v3386 = vshrl.u32 %v3385, 7
    %v3387 = vsub.s32 %v2660, %v3386
    %v3388 = vrot.slane %v2431, %v3387
    %v3389 = vsel %vm2665, %v3388, %v3384
    %v3390 = vlaneseq
    %v3391 = vshrl.u32 %v3390, 7
    %v3392 = vsub.s32 %v2667, %v3391
    %v3393 = vrot.slane %v2432, %v3392
    %v3394 = vsel %vm2672, %v3393, %v3389
    %v3395 = vlaneseq
    %v3396 = vshrl.u32 %v3395, 7
    %v3397 = vsub.s32 %v2674, %v3396
    %v3398 = vrot.slane %v2433, %v3397
    %v3399 = vsel %vm2679, %v3398, %v3394
    %v3400 = vlaneseq
    %v3401 = vshrl.u32 %v3400, 7
    %v3402 = vsub.s32 %v2681, %v3401
    %v3403 = vrot.slane %v2434, %v3402
    %v3404 = vsel %vm2686, %v3403, %v3399
    %v3405 = vlaneseq
    %v3406 = vshrl.u32 %v3405, 7
    %v3407 = vsub.s32 %v2688, %v3406
    %v3408 = vrot.slane %v2435, %v3407
    %v3409 = vsel %vm2693, %v3408, %v3404
    %v3410 = vlaneseq
    %v3411 = vshrl.u32 %v3410, 7
    %v3412 = vsub.s32 %v2695, %v3411
    %v3413 = vrot.slane %v2436, %v3412
    %v3414 = vsel %vm2700, %v3413, %v3409
    %v3415 = vlaneseq
    %v3416 = vshrl.u32 %v3415, 7
    %v3417 = vsub.s32 %v2702, %v3416
    %v3418 = vrot.slane %v2437, %v3417
    %v3419 = vsel %vm2707, %v3418, %v3414
    %v3420 = vlaneseq
    %v3421 = vshrl.u32 %v3420, 7
    %v3422 = vsub.s32 %v2599, %v3421
    %v3423 = vrot.slane %v2438, %v3422
    %v3424 = vlaneseq
    %v3425 = vshrl.u32 %v3424, 7
    %v3426 = vsub.s32 %v2604, %v3425
    %v3427 = vrot.slane %v2439, %v3426
    %v3428 = vsel %vm2609, %v3427, %v3423
    %v3429 = vlaneseq
    %v3430 = vshrl.u32 %v3429, 7
    %v3431 = vsub.s32 %v2611, %v3430
    %v3432 = vrot.slane %v2440, %v3431
    %v3433 = vsel %vm2616, %v3432, %v3428
    %v3434 = vlaneseq
    %v3435 = vshrl.u32 %v3434, 7
    %v3436 = vsub.s32 %v2618, %v3435
    %v3437 = vrot.slane %v2441, %v3436
    %v3438 = vsel %vm2623, %v3437, %v3433
    %v3439 = vlaneseq
    %v3440 = vshrl.u32 %v3439, 7
    %v3441 = vsub.s32 %v2625, %v3440
    %v3442 = vrot.slane %v2442, %v3441
    %v3443 = vsel %vm2630, %v3442, %v3438
    %v3444 = vlaneseq
    %v3445 = vshrl.u32 %v3444, 7
    %v3446 = vsub.s32 %v2632, %v3445
    %v3447 = vrot.slane %v2443, %v3446
    %v3448 = vsel %vm2637, %v3447, %v3443
    %v3449 = vlaneseq
    %v3450 = vshrl.u32 %v3449, 7
    %v3451 = vsub.s32 %v2639, %v3450
    %v3452 = vrot.slane %v2444, %v3451
    %v3453 = vsel %vm2644, %v3452, %v3448
    %v3454 = vlaneseq
    %v3455 = vshrl.u32 %v3454, 7
    %v3456 = vsub.s32 %v2646, %v3455
    %v3457 = vrot.slane %v2445, %v3456
    %v3458 = vsel %vm2651, %v3457, %v3453
    %v3459 = vlaneseq
    %v3460 = vshrl.u32 %v3459, 7
    %v3461 = vsub.s32 %v2653, %v3460
    %v3462 = vrot.slane %v2446, %v3461
    %v3463 = vsel %vm2658, %v3462, %v3458
    %v3464 = vlaneseq
    %v3465 = vshrl.u32 %v3464, 7
    %v3466 = vsub.s32 %v2660, %v3465
    %v3467 = vrot.slane %v2447, %v3466
    %v3468 = vsel %vm2665, %v3467, %v3463
    %v3469 = vlaneseq
    %v3470 = vshrl.u32 %v3469, 7
    %v3471 = vsub.s32 %v2667, %v3470
    %v3472 = vrot.slane %v2448, %v3471
    %v3473 = vsel %vm2672, %v3472, %v3468
    %v3474 = vlaneseq
    %v3475 = vshrl.u32 %v3474, 7
    %v3476 = vsub.s32 %v2674, %v3475
    %v3477 = vrot.slane %v2449, %v3476
    %v3478 = vsel %vm2679, %v3477, %v3473
    %v3479 = vlaneseq
    %v3480 = vshrl.u32 %v3479, 7
    %v3481 = vsub.s32 %v2681, %v3480
    %v3482 = vrot.slane %v2450, %v3481
    %v3483 = vsel %vm2686, %v3482, %v3478
    %v3484 = vlaneseq
    %v3485 = vshrl.u32 %v3484, 7
    %v3486 = vsub.s32 %v2688, %v3485
    %v3487 = vrot.slane %v2451, %v3486
    %v3488 = vsel %vm2693, %v3487, %v3483
    %v3489 = vlaneseq
    %v3490 = vshrl.u32 %v3489, 7
    %v3491 = vsub.s32 %v2695, %v3490
    %v3492 = vrot.slane %v2452, %v3491
    %v3493 = vsel %vm2700, %v3492, %v3488
    %v3494 = vlaneseq
    %v3495 = vshrl.u32 %v3494, 7
    %v3496 = vsub.s32 %v2702, %v3495
    %v3497 = vrot.slane %v2453, %v3496
    %v3498 = vsel %vm2707, %v3497, %v3493
    %v3499 = vlaneseq
    %v3500 = vshrl.u32 %v3499, 7
    %v3501 = vsub.s32 %v2599, %v3500
    %v3502 = vrot.slane %v2454, %v3501
    %v3503 = vlaneseq
    %v3504 = vshrl.u32 %v3503, 7
    %v3505 = vsub.s32 %v2604, %v3504
    %v3506 = vrot.slane %v2455, %v3505
    %v3507 = vsel %vm2609, %v3506, %v3502
    %v3508 = vlaneseq
    %v3509 = vshrl.u32 %v3508, 7
    %v3510 = vsub.s32 %v2611, %v3509
    %v3511 = vrot.slane %v2456, %v3510
    %v3512 = vsel %vm2616, %v3511, %v3507
    %v3513 = vlaneseq
    %v3514 = vshrl.u32 %v3513, 7
    %v3515 = vsub.s32 %v2618, %v3514
    %v3516 = vrot.slane %v2457, %v3515
    %v3517 = vsel %vm2623, %v3516, %v3512
    %v3518 = vlaneseq
    %v3519 = vshrl.u32 %v3518, 7
    %v3520 = vsub.s32 %v2625, %v3519
    %v3521 = vrot.slane %v2458, %v3520
    %v3522 = vsel %vm2630, %v3521, %v3517
    %v3523 = vlaneseq
    %v3524 = vshrl.u32 %v3523, 7
    %v3525 = vsub.s32 %v2632, %v3524
    %v3526 = vrot.slane %v2459, %v3525
    %v3527 = vsel %vm2637, %v3526, %v3522
    %v3528 = vlaneseq
    %v3529 = vshrl.u32 %v3528, 7
    %v3530 = vsub.s32 %v2639, %v3529
    %v3531 = vrot.slane %v2460, %v3530
    %v3532 = vsel %vm2644, %v3531, %v3527
    %v3533 = vlaneseq
    %v3534 = vshrl.u32 %v3533, 7
    %v3535 = vsub.s32 %v2646, %v3534
    %v3536 = vrot.slane %v2461, %v3535
    %v3537 = vsel %vm2651, %v3536, %v3532
    %v3538 = vlaneseq
    %v3539 = vshrl.u32 %v3538, 7
    %v3540 = vsub.s32 %v2653, %v3539
    %v3541 = vrot.slane %v2462, %v3540
    %v3542 = vsel %vm2658, %v3541, %v3537
    %v3543 = vlaneseq
    %v3544 = vshrl.u32 %v3543, 7
    %v3545 = vsub.s32 %v2660, %v3544
    %v3546 = vrot.slane %v2463, %v3545
    %v3547 = vsel %vm2665, %v3546, %v3542
    %v3548 = vlaneseq
    %v3549 = vshrl.u32 %v3548, 7
    %v3550 = vsub.s32 %v2667, %v3549
    %v3551 = vrot.slane %v2464, %v3550
    %v3552 = vsel %vm2672, %v3551, %v3547
    %v3553 = vlaneseq
    %v3554 = vshrl.u32 %v3553, 7
    %v3555 = vsub.s32 %v2674, %v3554
    %v3556 = vrot.slane %v2465, %v3555
    %v3557 = vsel %vm2679, %v3556, %v3552
    %v3558 = vlaneseq
    %v3559 = vshrl.u32 %v3558, 7
    %v3560 = vsub.s32 %v2681, %v3559
    %v3561 = vrot.slane %v2466, %v3560
    %v3562 = vsel %vm2686, %v3561, %v3557
    %v3563 = vlaneseq
    %v3564 = vshrl.u32 %v3563, 7
    %v3565 = vsub.s32 %v2688, %v3564
    %v3566 = vrot.slane %v2467, %v3565
    %v3567 = vsel %vm2693, %v3566, %v3562
    %v3568 = vlaneseq
    %v3569 = vshrl.u32 %v3568, 7
    %v3570 = vsub.s32 %v2695, %v3569
    %v3571 = vrot.slane %v2468, %v3570
    %v3572 = vsel %vm2700, %v3571, %v3567
    %v3573 = vlaneseq
    %v3574 = vshrl.u32 %v3573, 7
    %v3575 = vsub.s32 %v2702, %v3574
    %v3576 = vrot.slane %v2469, %v3575
    %v3577 = vsel %vm2707, %v3576, %v3572
    %v3578 = vlaneseq
    %v3579 = vshrl.u32 %v3578, 7
    %v3580 = vsub.s32 %v2599, %v3579
    %v3581 = vrot.slane %v2470, %v3580
    %v3582 = vlaneseq
    %v3583 = vshrl.u32 %v3582, 7
    %v3584 = vsub.s32 %v2604, %v3583
    %v3585 = vrot.slane %v2471, %v3584
    %v3586 = vsel %vm2609, %v3585, %v3581
    %v3587 = vlaneseq
    %v3588 = vshrl.u32 %v3587, 7
    %v3589 = vsub.s32 %v2611, %v3588
    %v3590 = vrot.slane %v2472, %v3589
    %v3591 = vsel %vm2616, %v3590, %v3586
    %v3592 = vlaneseq
    %v3593 = vshrl.u32 %v3592, 7
    %v3594 = vsub.s32 %v2618, %v3593
    %v3595 = vrot.slane %v2473, %v3594
    %v3596 = vsel %vm2623, %v3595, %v3591
    %v3597 = vlaneseq
    %v3598 = vshrl.u32 %v3597, 7
    %v3599 = vsub.s32 %v2625, %v3598
    %v3600 = vrot.slane %v2474, %v3599
    %v3601 = vsel %vm2630, %v3600, %v3596
    %v3602 = vlaneseq
    %v3603 = vshrl.u32 %v3602, 7
    %v3604 = vsub.s32 %v2632, %v3603
    %v3605 = vrot.slane %v2475, %v3604
    %v3606 = vsel %vm2637, %v3605, %v3601
    %v3607 = vlaneseq
    %v3608 = vshrl.u32 %v3607, 7
    %v3609 = vsub.s32 %v2639, %v3608
    %v3610 = vrot.slane %v2476, %v3609
    %v3611 = vsel %vm2644, %v3610, %v3606
    %v3612 = vlaneseq
    %v3613 = vshrl.u32 %v3612, 7
    %v3614 = vsub.s32 %v2646, %v3613
    %v3615 = vrot.slane %v2477, %v3614
    %v3616 = vsel %vm2651, %v3615, %v3611
    %v3617 = vlaneseq
    %v3618 = vshrl.u32 %v3617, 7
    %v3619 = vsub.s32 %v2653, %v3618
    %v3620 = vrot.slane %v2478, %v3619
    %v3621 = vsel %vm2658, %v3620, %v3616
    %v3622 = vlaneseq
    %v3623 = vshrl.u32 %v3622, 7
    %v3624 = vsub.s32 %v2660, %v3623
    %v3625 = vrot.slane %v2479, %v3624
    %v3626 = vsel %vm2665, %v3625, %v3621
    %v3627 = vlaneseq
    %v3628 = vshrl.u32 %v3627, 7
    %v3629 = vsub.s32 %v2667, %v3628
    %v3630 = vrot.slane %v2480, %v3629
    %v3631 = vsel %vm2672, %v3630, %v3626
    %v3632 = vlaneseq
    %v3633 = vshrl.u32 %v3632, 7
    %v3634 = vsub.s32 %v2674, %v3633
    %v3635 = vrot.slane %v2481, %v3634
    %v3636 = vsel %vm2679, %v3635, %v3631
    %v3637 = vlaneseq
    %v3638 = vshrl.u32 %v3637, 7
    %v3639 = vsub.s32 %v2681, %v3638
    %v3640 = vrot.slane %v2482, %v3639
    %v3641 = vsel %vm2686, %v3640, %v3636
    %v3642 = vlaneseq
    %v3643 = vshrl.u32 %v3642, 7
    %v3644 = vsub.s32 %v2688, %v3643
    %v3645 = vrot.slane %v2483, %v3644
    %v3646 = vsel %vm2693, %v3645, %v3641
    %v3647 = vlaneseq
    %v3648 = vshrl.u32 %v3647, 7
    %v3649 = vsub.s32 %v2695, %v3648
    %v3650 = vrot.slane %v2484, %v3649
    %v3651 = vsel %vm2700, %v3650, %v3646
    %v3652 = vlaneseq
    %v3653 = vshrl.u32 %v3652, 7
    %v3654 = vsub.s32 %v2702, %v3653
    %v3655 = vrot.slane %v2485, %v3654
    %v3656 = vsel %vm2707, %v3655, %v3651
    %v3657 = vlaneseq
    %v3658 = vshrl.u32 %v3657, 7
    %v3659 = vsub.s32 %v2599, %v3658
    %v3660 = vrot.slane %v2486, %v3659
    %v3661 = vlaneseq
    %v3662 = vshrl.u32 %v3661, 7
    %v3663 = vsub.s32 %v2604, %v3662
    %v3664 = vrot.slane %v2487, %v3663
    %v3665 = vsel %vm2609, %v3664, %v3660
    %v3666 = vlaneseq
    %v3667 = vshrl.u32 %v3666, 7
    %v3668 = vsub.s32 %v2611, %v3667
    %v3669 = vrot.slane %v2488, %v3668
    %v3670 = vsel %vm2616, %v3669, %v3665
    %v3671 = vlaneseq
    %v3672 = vshrl.u32 %v3671, 7
    %v3673 = vsub.s32 %v2618, %v3672
    %v3674 = vrot.slane %v2489, %v3673
    %v3675 = vsel %vm2623, %v3674, %v3670
    %v3676 = vlaneseq
    %v3677 = vshrl.u32 %v3676, 7
    %v3678 = vsub.s32 %v2625, %v3677
    %v3679 = vrot.slane %v2490, %v3678
    %v3680 = vsel %vm2630, %v3679, %v3675
    %v3681 = vlaneseq
    %v3682 = vshrl.u32 %v3681, 7
    %v3683 = vsub.s32 %v2632, %v3682
    %v3684 = vrot.slane %v2491, %v3683
    %v3685 = vsel %vm2637, %v3684, %v3680
    %v3686 = vlaneseq
    %v3687 = vshrl.u32 %v3686, 7
    %v3688 = vsub.s32 %v2639, %v3687
    %v3689 = vrot.slane %v2492, %v3688
    %v3690 = vsel %vm2644, %v3689, %v3685
    %v3691 = vlaneseq
    %v3692 = vshrl.u32 %v3691, 7
    %v3693 = vsub.s32 %v2646, %v3692
    %v3694 = vrot.slane %v2493, %v3693
    %v3695 = vsel %vm2651, %v3694, %v3690
    %v3696 = vlaneseq
    %v3697 = vshrl.u32 %v3696, 7
    %v3698 = vsub.s32 %v2653, %v3697
    %v3699 = vrot.slane %v2494, %v3698
    %v3700 = vsel %vm2658, %v3699, %v3695
    %v3701 = vlaneseq
    %v3702 = vshrl.u32 %v3701, 7
    %v3703 = vsub.s32 %v2660, %v3702
    %v3704 = vrot.slane %v2495, %v3703
    %v3705 = vsel %vm2665, %v3704, %v3700
    %v3706 = vlaneseq
    %v3707 = vshrl.u32 %v3706, 7
    %v3708 = vsub.s32 %v2667, %v3707
    %v3709 = vrot.slane %v2496, %v3708
    %v3710 = vsel %vm2672, %v3709, %v3705
    %v3711 = vlaneseq
    %v3712 = vshrl.u32 %v3711, 7
    %v3713 = vsub.s32 %v2674, %v3712
    %v3714 = vrot.slane %v2497, %v3713
    %v3715 = vsel %vm2679, %v3714, %v3710
    %v3716 = vlaneseq
    %v3717 = vshrl.u32 %v3716, 7
    %v3718 = vsub.s32 %v2681, %v3717
    %v3719 = vrot.slane %v2498, %v3718
    %v3720 = vsel %vm2686, %v3719, %v3715
    %v3721 = vlaneseq
    %v3722 = vshrl.u32 %v3721, 7
    %v3723 = vsub.s32 %v2688, %v3722
    %v3724 = vrot.slane %v2499, %v3723
    %v3725 = vsel %vm2693, %v3724, %v3720
    %v3726 = vlaneseq
    %v3727 = vshrl.u32 %v3726, 7
    %v3728 = vsub.s32 %v2695, %v3727
    %v3729 = vrot.slane %v2500, %v3728
    %v3730 = vsel %vm2700, %v3729, %v3725
    %v3731 = vlaneseq
    %v3732 = vshrl.u32 %v3731, 7
    %v3733 = vsub.s32 %v2702, %v3732
    %v3734 = vrot.slane %v2501, %v3733
    %v3735 = vsel %vm2707, %v3734, %v3730
    %v3736 = vlaneseq
    %v3737 = vshrl.u32 %v3736, 7
    %v3738 = vsub.s32 %v2599, %v3737
    %v3739 = vrot.slane %v2502, %v3738
    %v3740 = vlaneseq
    %v3741 = vshrl.u32 %v3740, 7
    %v3742 = vsub.s32 %v2604, %v3741
    %v3743 = vrot.slane %v2503, %v3742
    %v3744 = vsel %vm2609, %v3743, %v3739
    %v3745 = vlaneseq
    %v3746 = vshrl.u32 %v3745, 7
    %v3747 = vsub.s32 %v2611, %v3746
    %v3748 = vrot.slane %v2504, %v3747
    %v3749 = vsel %vm2616, %v3748, %v3744
    %v3750 = vlaneseq
    %v3751 = vshrl.u32 %v3750, 7
    %v3752 = vsub.s32 %v2618, %v3751
    %v3753 = vrot.slane %v2505, %v3752
    %v3754 = vsel %vm2623, %v3753, %v3749
    %v3755 = vlaneseq
    %v3756 = vshrl.u32 %v3755, 7
    %v3757 = vsub.s32 %v2625, %v3756
    %v3758 = vrot.slane %v2506, %v3757
    %v3759 = vsel %vm2630, %v3758, %v3754
    %v3760 = vlaneseq
    %v3761 = vshrl.u32 %v3760, 7
    %v3762 = vsub.s32 %v2632, %v3761
    %v3763 = vrot.slane %v2507, %v3762
    %v3764 = vsel %vm2637, %v3763, %v3759
    %v3765 = vlaneseq
    %v3766 = vshrl.u32 %v3765, 7
    %v3767 = vsub.s32 %v2639, %v3766
    %v3768 = vrot.slane %v2508, %v3767
    %v3769 = vsel %vm2644, %v3768, %v3764
    %v3770 = vlaneseq
    %v3771 = vshrl.u32 %v3770, 7
    %v3772 = vsub.s32 %v2646, %v3771
    %v3773 = vrot.slane %v2509, %v3772
    %v3774 = vsel %vm2651, %v3773, %v3769
    %v3775 = vlaneseq
    %v3776 = vshrl.u32 %v3775, 7
    %v3777 = vsub.s32 %v2653, %v3776
    %v3778 = vrot.slane %v2510, %v3777
    %v3779 = vsel %vm2658, %v3778, %v3774
    %v3780 = vlaneseq
    %v3781 = vshrl.u32 %v3780, 7
    %v3782 = vsub.s32 %v2660, %v3781
    %v3783 = vrot.slane %v2511, %v3782
    %v3784 = vsel %vm2665, %v3783, %v3779
    %v3785 = vlaneseq
    %v3786 = vshrl.u32 %v3785, 7
    %v3787 = vsub.s32 %v2667, %v3786
    %v3788 = vrot.slane %v2512, %v3787
    %v3789 = vsel %vm2672, %v3788, %v3784
    %v3790 = vlaneseq
    %v3791 = vshrl.u32 %v3790, 7
    %v3792 = vsub.s32 %v2674, %v3791
    %v3793 = vrot.slane %v2513, %v3792
    %v3794 = vsel %vm2679, %v3793, %v3789
    %v3795 = vlaneseq
    %v3796 = vshrl.u32 %v3795, 7
    %v3797 = vsub.s32 %v2681, %v3796
    %v3798 = vrot.slane %v2514, %v3797
    %v3799 = vsel %vm2686, %v3798, %v3794
    %v3800 = vlaneseq
    %v3801 = vshrl.u32 %v3800, 7
    %v3802 = vsub.s32 %v2688, %v3801
    %v3803 = vrot.slane %v2515, %v3802
    %v3804 = vsel %vm2693, %v3803, %v3799
    %v3805 = vlaneseq
    %v3806 = vshrl.u32 %v3805, 7
    %v3807 = vsub.s32 %v2695, %v3806
    %v3808 = vrot.slane %v2516, %v3807
    %v3809 = vsel %vm2700, %v3808, %v3804
    %v3810 = vlaneseq
    %v3811 = vshrl.u32 %v3810, 7
    %v3812 = vsub.s32 %v2702, %v3811
    %v3813 = vrot.slane %v2517, %v3812
    %v3814 = vsel %vm2707, %v3813, %v3809
    %v3815 = vlaneseq
    %v3816 = vshrl.u32 %v3815, 7
    %v3817 = vsub.s32 %v2599, %v3816
    %v3818 = vrot.slane %v2518, %v3817
    %v3819 = vlaneseq
    %v3820 = vshrl.u32 %v3819, 7
    %v3821 = vsub.s32 %v2604, %v3820
    %v3822 = vrot.slane %v2519, %v3821
    %v3823 = vsel %vm2609, %v3822, %v3818
    %v3824 = vlaneseq
    %v3825 = vshrl.u32 %v3824, 7
    %v3826 = vsub.s32 %v2611, %v3825
    %v3827 = vrot.slane %v2520, %v3826
    %v3828 = vsel %vm2616, %v3827, %v3823
    %v3829 = vlaneseq
    %v3830 = vshrl.u32 %v3829, 7
    %v3831 = vsub.s32 %v2618, %v3830
    %v3832 = vrot.slane %v2521, %v3831
    %v3833 = vsel %vm2623, %v3832, %v3828
    %v3834 = vlaneseq
    %v3835 = vshrl.u32 %v3834, 7
    %v3836 = vsub.s32 %v2625, %v3835
    %v3837 = vrot.slane %v2522, %v3836
    %v3838 = vsel %vm2630, %v3837, %v3833
    %v3839 = vlaneseq
    %v3840 = vshrl.u32 %v3839, 7
    %v3841 = vsub.s32 %v2632, %v3840
    %v3842 = vrot.slane %v2523, %v3841
    %v3843 = vsel %vm2637, %v3842, %v3838
    %v3844 = vlaneseq
    %v3845 = vshrl.u32 %v3844, 7
    %v3846 = vsub.s32 %v2639, %v3845
    %v3847 = vrot.slane %v2524, %v3846
    %v3848 = vsel %vm2644, %v3847, %v3843
    %v3849 = vlaneseq
    %v3850 = vshrl.u32 %v3849, 7
    %v3851 = vsub.s32 %v2646, %v3850
    %v3852 = vrot.slane %v2525, %v3851
    %v3853 = vsel %vm2651, %v3852, %v3848
    %v3854 = vlaneseq
    %v3855 = vshrl.u32 %v3854, 7
    %v3856 = vsub.s32 %v2653, %v3855
    %v3857 = vrot.slane %v2526, %v3856
    %v3858 = vsel %vm2658, %v3857, %v3853
    %v3859 = vlaneseq
    %v3860 = vshrl.u32 %v3859, 7
    %v3861 = vsub.s32 %v2660, %v3860
    %v3862 = vrot.slane %v2527, %v3861
    %v3863 = vsel %vm2665, %v3862, %v3858
    %v3864 = vlaneseq
    %v3865 = vshrl.u32 %v3864, 7
    %v3866 = vsub.s32 %v2667, %v3865
    %v3867 = vrot.slane %v2528, %v3866
    %v3868 = vsel %vm2672, %v3867, %v3863
    %v3869 = vlaneseq
    %v3870 = vshrl.u32 %v3869, 7
    %v3871 = vsub.s32 %v2674, %v3870
    %v3872 = vrot.slane %v2529, %v3871
    %v3873 = vsel %vm2679, %v3872, %v3868
    %v3874 = vlaneseq
    %v3875 = vshrl.u32 %v3874, 7
    %v3876 = vsub.s32 %v2681, %v3875
    %v3877 = vrot.slane %v2530, %v3876
    %v3878 = vsel %vm2686, %v3877, %v3873
    %v3879 = vlaneseq
    %v3880 = vshrl.u32 %v3879, 7
    %v3881 = vsub.s32 %v2688, %v3880
    %v3882 = vrot.slane %v2531, %v3881
    %v3883 = vsel %vm2693, %v3882, %v3878
    %v3884 = vlaneseq
    %v3885 = vshrl.u32 %v3884, 7
    %v3886 = vsub.s32 %v2695, %v3885
    %v3887 = vrot.slane %v2532, %v3886
    %v3888 = vsel %vm2700, %v3887, %v3883
    %v3889 = vlaneseq
    %v3890 = vshrl.u32 %v3889, 7
    %v3891 = vsub.s32 %v2702, %v3890
    %v3892 = vrot.slane %v2533, %v3891
    %v3893 = vsel %vm2707, %v3892, %v3888
    %v3894 = vlaneseq
    %v3895 = vshrl.u32 %v3894, 7
    %v3896 = vsub.s32 %v2599, %v3895
    %v3897 = vrot.slane %v2534, %v3896
    %v3898 = vlaneseq
    %v3899 = vshrl.u32 %v3898, 7
    %v3900 = vsub.s32 %v2604, %v3899
    %v3901 = vrot.slane %v2535, %v3900
    %v3902 = vsel %vm2609, %v3901, %v3897
    %v3903 = vlaneseq
    %v3904 = vshrl.u32 %v3903, 7
    %v3905 = vsub.s32 %v2611, %v3904
    %v3906 = vrot.slane %v2536, %v3905
    %v3907 = vsel %vm2616, %v3906, %v3902
    %v3908 = vlaneseq
    %v3909 = vshrl.u32 %v3908, 7
    %v3910 = vsub.s32 %v2618, %v3909
    %v3911 = vrot.slane %v2537, %v3910
    %v3912 = vsel %vm2623, %v3911, %v3907
    %v3913 = vlaneseq
    %v3914 = vshrl.u32 %v3913, 7
    %v3915 = vsub.s32 %v2625, %v3914
    %v3916 = vrot.slane %v2538, %v3915
    %v3917 = vsel %vm2630, %v3916, %v3912
    %v3918 = vlaneseq
    %v3919 = vshrl.u32 %v3918, 7
    %v3920 = vsub.s32 %v2632, %v3919
    %v3921 = vrot.slane %v2539, %v3920
    %v3922 = vsel %vm2637, %v3921, %v3917
    %v3923 = vlaneseq
    %v3924 = vshrl.u32 %v3923, 7
    %v3925 = vsub.s32 %v2639, %v3924
    %v3926 = vrot.slane %v2540, %v3925
    %v3927 = vsel %vm2644, %v3926, %v3922
    %v3928 = vlaneseq
    %v3929 = vshrl.u32 %v3928, 7
    %v3930 = vsub.s32 %v2646, %v3929
    %v3931 = vrot.slane %v2541, %v3930
    %v3932 = vsel %vm2651, %v3931, %v3927
    %v3933 = vlaneseq
    %v3934 = vshrl.u32 %v3933, 7
    %v3935 = vsub.s32 %v2653, %v3934
    %v3936 = vrot.slane %v2542, %v3935
    %v3937 = vsel %vm2658, %v3936, %v3932
    %v3938 = vlaneseq
    %v3939 = vshrl.u32 %v3938, 7
    %v3940 = vsub.s32 %v2660, %v3939
    %v3941 = vrot.slane %v2543, %v3940
    %v3942 = vsel %vm2665, %v3941, %v3937
    %v3943 = vlaneseq
    %v3944 = vshrl.u32 %v3943, 7
    %v3945 = vsub.s32 %v2667, %v3944
    %v3946 = vrot.slane %v2544, %v3945
    %v3947 = vsel %vm2672, %v3946, %v3942
    %v3948 = vlaneseq
    %v3949 = vshrl.u32 %v3948, 7
    %v3950 = vsub.s32 %v2674, %v3949
    %v3951 = vrot.slane %v2545, %v3950
    %v3952 = vsel %vm2679, %v3951, %v3947
    %v3953 = vlaneseq
    %v3954 = vshrl.u32 %v3953, 7
    %v3955 = vsub.s32 %v2681, %v3954
    %v3956 = vrot.slane %v2546, %v3955
    %v3957 = vsel %vm2686, %v3956, %v3952
    %v3958 = vlaneseq
    %v3959 = vshrl.u32 %v3958, 7
    %v3960 = vsub.s32 %v2688, %v3959
    %v3961 = vrot.slane %v2547, %v3960
    %v3962 = vsel %vm2693, %v3961, %v3957
    %v3963 = vlaneseq
    %v3964 = vshrl.u32 %v3963, 7
    %v3965 = vsub.s32 %v2695, %v3964
    %v3966 = vrot.slane %v2548, %v3965
    %v3967 = vsel %vm2700, %v3966, %v3962
    %v3968 = vlaneseq
    %v3969 = vshrl.u32 %v3968, 7
    %v3970 = vsub.s32 %v2702, %v3969
    %v3971 = vrot.slane %v2549, %v3970
    %v3972 = vsel %vm2707, %v3971, %v3967
    %v3973 = vlaneseq
    %v3974 = vshrl.u32 %v3973, 7
    %v3975 = vsub.s32 %v2599, %v3974
    %v3976 = vrot.slane %v2550, %v3975
    %v3977 = vlaneseq
    %v3978 = vshrl.u32 %v3977, 7
    %v3979 = vsub.s32 %v2604, %v3978
    %v3980 = vrot.slane %v2551, %v3979
    %v3981 = vsel %vm2609, %v3980, %v3976
    %v3982 = vlaneseq
    %v3983 = vshrl.u32 %v3982, 7
    %v3984 = vsub.s32 %v2611, %v3983
    %v3985 = vrot.slane %v2552, %v3984
    %v3986 = vsel %vm2616, %v3985, %v3981
    %v3987 = vlaneseq
    %v3988 = vshrl.u32 %v3987, 7
    %v3989 = vsub.s32 %v2618, %v3988
    %v3990 = vrot.slane %v2553, %v3989
    %v3991 = vsel %vm2623, %v3990, %v3986
    %v3992 = vlaneseq
    %v3993 = vshrl.u32 %v3992, 7
    %v3994 = vsub.s32 %v2625, %v3993
    %v3995 = vrot.slane %v2554, %v3994
    %v3996 = vsel %vm2630, %v3995, %v3991
    %v3997 = vlaneseq
    %v3998 = vshrl.u32 %v3997, 7
    %v3999 = vsub.s32 %v2632, %v3998
    %v4000 = vrot.slane %v2555, %v3999
    %v4001 = vsel %vm2637, %v4000, %v3996
    %v4002 = vlaneseq
    %v4003 = vshrl.u32 %v4002, 7
    %v4004 = vsub.s32 %v2639, %v4003
    %v4005 = vrot.slane %v2556, %v4004
    %v4006 = vsel %vm2644, %v4005, %v4001
    %v4007 = vlaneseq
    %v4008 = vshrl.u32 %v4007, 7
    %v4009 = vsub.s32 %v2646, %v4008
    %v4010 = vrot.slane %v2557, %v4009
    %v4011 = vsel %vm2651, %v4010, %v4006
    %v4012 = vlaneseq
    %v4013 = vshrl.u32 %v4012, 7
    %v4014 = vsub.s32 %v2653, %v4013
    %v4015 = vrot.slane %v2558, %v4014
    %v4016 = vsel %vm2658, %v4015, %v4011
    %v4017 = vlaneseq
    %v4018 = vshrl.u32 %v4017, 7
    %v4019 = vsub.s32 %v2660, %v4018
    %v4020 = vrot.slane %v2559, %v4019
    %v4021 = vsel %vm2665, %v4020, %v4016
    %v4022 = vlaneseq
    %v4023 = vshrl.u32 %v4022, 7
    %v4024 = vsub.s32 %v2667, %v4023
    %v4025 = vrot.slane %v2560, %v4024
    %v4026 = vsel %vm2672, %v4025, %v4021
    %v4027 = vlaneseq
    %v4028 = vshrl.u32 %v4027, 7
    %v4029 = vsub.s32 %v2674, %v4028
    %v4030 = vrot.slane %v2561, %v4029
    %v4031 = vsel %vm2679, %v4030, %v4026
    %v4032 = vlaneseq
    %v4033 = vshrl.u32 %v4032, 7
    %v4034 = vsub.s32 %v2681, %v4033
    %v4035 = vrot.slane %v2562, %v4034
    %v4036 = vsel %vm2686, %v4035, %v4031
    %v4037 = vlaneseq
    %v4038 = vshrl.u32 %v4037, 7
    %v4039 = vsub.s32 %v2688, %v4038
    %v4040 = vrot.slane %v2563, %v4039
    %v4041 = vsel %vm2693, %v4040, %v4036
    %v4042 = vlaneseq
    %v4043 = vshrl.u32 %v4042, 7
    %v4044 = vsub.s32 %v2695, %v4043
    %v4045 = vrot.slane %v2564, %v4044
    %v4046 = vsel %vm2700, %v4045, %v4041
    %v4047 = vlaneseq
    %v4048 = vshrl.u32 %v4047, 7
    %v4049 = vsub.s32 %v2702, %v4048
    %v4050 = vrot.slane %v2565, %v4049
    %v4051 = vsel %vm2707, %v4050, %v4046
    %v4052 = vlaneseq
    %v4053 = vshrl.u32 %v4052, 7
    %v4054 = vsub.s32 %v2599, %v4053
    %v4055 = vrot.slane %v2566, %v4054
    %v4056 = vlaneseq
    %v4057 = vshrl.u32 %v4056, 7
    %v4058 = vsub.s32 %v2604, %v4057
    %v4059 = vrot.slane %v2567, %v4058
    %v4060 = vsel %vm2609, %v4059, %v4055
    %v4061 = vlaneseq
    %v4062 = vshrl.u32 %v4061, 7
    %v4063 = vsub.s32 %v2611, %v4062
    %v4064 = vrot.slane %v2568, %v4063
    %v4065 = vsel %vm2616, %v4064, %v4060
    %v4066 = vlaneseq
    %v4067 = vshrl.u32 %v4066, 7
    %v4068 = vsub.s32 %v2618, %v4067
    %v4069 = vrot.slane %v2569, %v4068
    %v4070 = vsel %vm2623, %v4069, %v4065
    %v4071 = vlaneseq
    %v4072 = vshrl.u32 %v4071, 7
    %v4073 = vsub.s32 %v2625, %v4072
    %v4074 = vrot.slane %v2570, %v4073
    %v4075 = vsel %vm2630, %v4074, %v4070
    %v4076 = vlaneseq
    %v4077 = vshrl.u32 %v4076, 7
    %v4078 = vsub.s32 %v2632, %v4077
    %v4079 = vrot.slane %v2571, %v4078
    %v4080 = vsel %vm2637, %v4079, %v4075
    %v4081 = vlaneseq
    %v4082 = vshrl.u32 %v4081, 7
    %v4083 = vsub.s32 %v2639, %v4082
    %v4084 = vrot.slane %v2572, %v4083
    %v4085 = vsel %vm2644, %v4084, %v4080
    %v4086 = vlaneseq
    %v4087 = vshrl.u32 %v4086, 7
    %v4088 = vsub.s32 %v2646, %v4087
    %v4089 = vrot.slane %v2573, %v4088
    %v4090 = vsel %vm2651, %v4089, %v4085
    %v4091 = vlaneseq
    %v4092 = vshrl.u32 %v4091, 7
    %v4093 = vsub.s32 %v2653, %v4092
    %v4094 = vrot.slane %v2574, %v4093
    %v4095 = vsel %vm2658, %v4094, %v4090
    %v4096 = vlaneseq
    %v4097 = vshrl.u32 %v4096, 7
    %v4098 = vsub.s32 %v2660, %v4097
    %v4099 = vrot.slane %v2575, %v4098
    %v4100 = vsel %vm2665, %v4099, %v4095
    %v4101 = vlaneseq
    %v4102 = vshrl.u32 %v4101, 7
    %v4103 = vsub.s32 %v2667, %v4102
    %v4104 = vrot.slane %v2576, %v4103
    %v4105 = vsel %vm2672, %v4104, %v4100
    %v4106 = vlaneseq
    %v4107 = vshrl.u32 %v4106, 7
    %v4108 = vsub.s32 %v2674, %v4107
    %v4109 = vrot.slane %v2577, %v4108
    %v4110 = vsel %vm2679, %v4109, %v4105
    %v4111 = vlaneseq
    %v4112 = vshrl.u32 %v4111, 7
    %v4113 = vsub.s32 %v2681, %v4112
    %v4114 = vrot.slane %v2578, %v4113
    %v4115 = vsel %vm2686, %v4114, %v4110
    %v4116 = vlaneseq
    %v4117 = vshrl.u32 %v4116, 7
    %v4118 = vsub.s32 %v2688, %v4117
    %v4119 = vrot.slane %v2579, %v4118
    %v4120 = vsel %vm2693, %v4119, %v4115
    %v4121 = vlaneseq
    %v4122 = vshrl.u32 %v4121, 7
    %v4123 = vsub.s32 %v2695, %v4122
    %v4124 = vrot.slane %v2580, %v4123
    %v4125 = vsel %vm2700, %v4124, %v4120
    %v4126 = vlaneseq
    %v4127 = vshrl.u32 %v4126, 7
    %v4128 = vsub.s32 %v2702, %v4127
    %v4129 = vrot.slane %v2581, %v4128
    %v4130 = vsel %vm2707, %v4129, %v4125
    %v4131 = vlaneseq
    %v4132 = vshrl.u32 %v4131, 7
    %v4133 = vsub.s32 %v2599, %v4132
    %v4134 = vrot.slane %v2582, %v4133
    %v4135 = vlaneseq
    %v4136 = vshrl.u32 %v4135, 7
    %v4137 = vsub.s32 %v2604, %v4136
    %v4138 = vrot.slane %v2583, %v4137
    %v4139 = vsel %vm2609, %v4138, %v4134
    %v4140 = vlaneseq
    %v4141 = vshrl.u32 %v4140, 7
    %v4142 = vsub.s32 %v2611, %v4141
    %v4143 = vrot.slane %v2584, %v4142
    %v4144 = vsel %vm2616, %v4143, %v4139
    %v4145 = vlaneseq
    %v4146 = vshrl.u32 %v4145, 7
    %v4147 = vsub.s32 %v2618, %v4146
    %v4148 = vrot.slane %v2585, %v4147
    %v4149 = vsel %vm2623, %v4148, %v4144
    %v4150 = vlaneseq
    %v4151 = vshrl.u32 %v4150, 7
    %v4152 = vsub.s32 %v2625, %v4151
    %v4153 = vrot.slane %v2586, %v4152
    %v4154 = vsel %vm2630, %v4153, %v4149
    %v4155 = vlaneseq
    %v4156 = vshrl.u32 %v4155, 7
    %v4157 = vsub.s32 %v2632, %v4156
    %v4158 = vrot.slane %v2587, %v4157
    %v4159 = vsel %vm2637, %v4158, %v4154
    %v4160 = vlaneseq
    %v4161 = vshrl.u32 %v4160, 7
    %v4162 = vsub.s32 %v2639, %v4161
    %v4163 = vrot.slane %v2588, %v4162
    %v4164 = vsel %vm2644, %v4163, %v4159
    %v4165 = vlaneseq
    %v4166 = vshrl.u32 %v4165, 7
    %v4167 = vsub.s32 %v2646, %v4166
    %v4168 = vrot.slane %v2589, %v4167
    %v4169 = vsel %vm2651, %v4168, %v4164
    %v4170 = vlaneseq
    %v4171 = vshrl.u32 %v4170, 7
    %v4172 = vsub.s32 %v2653, %v4171
    %v4173 = vrot.slane %v2590, %v4172
    %v4174 = vsel %vm2658, %v4173, %v4169
    %v4175 = vlaneseq
    %v4176 = vshrl.u32 %v4175, 7
    %v4177 = vsub.s32 %v2660, %v4176
    %v4178 = vrot.slane %v2591, %v4177
    %v4179 = vsel %vm2665, %v4178, %v4174
    %v4180 = vlaneseq
    %v4181 = vshrl.u32 %v4180, 7
    %v4182 = vsub.s32 %v2667, %v4181
    %v4183 = vrot.slane %v2592, %v4182
    %v4184 = vsel %vm2672, %v4183, %v4179
    %v4185 = vlaneseq
    %v4186 = vshrl.u32 %v4185, 7
    %v4187 = vsub.s32 %v2674, %v4186
    %v4188 = vrot.slane %v2593, %v4187
    %v4189 = vsel %vm2679, %v4188, %v4184
    %v4190 = vlaneseq
    %v4191 = vshrl.u32 %v4190, 7
    %v4192 = vsub.s32 %v2681, %v4191
    %v4193 = vrot.slane %v2594, %v4192
    %v4194 = vsel %vm2686, %v4193, %v4189
    %v4195 = vlaneseq
    %v4196 = vshrl.u32 %v4195, 7
    %v4197 = vsub.s32 %v2688, %v4196
    %v4198 = vrot.slane %v2595, %v4197
    %v4199 = vsel %vm2693, %v4198, %v4194
    %v4200 = vlaneseq
    %v4201 = vshrl.u32 %v4200, 7
    %v4202 = vsub.s32 %v2695, %v4201
    %v4203 = vrot.slane %v2596, %v4202
    %v4204 = vsel %vm2700, %v4203, %v4199
    %v4205 = vlaneseq
    %v4206 = vshrl.u32 %v4205, 7
    %v4207 = vsub.s32 %v2702, %v4206
    %v4208 = vrot.slane %v2597, %v4207
    %v4209 = vsel %vm2707, %v4208, %v4204
    %vm4210 = vcmask 1041409
    %v4211 = vsel %vm4210, %v3498, %v2708
    %v4212 = vsel %vm4210, %v3577, %v2787
    %v4213 = vsel %vm4210, %v3656, %v2866
    %v4214 = vsel %vm4210, %v3735, %v2945
    %v4215 = vsel %vm4210, %v3814, %v3024
    %v4216 = vsel %vm4210, %v3893, %v3103
    %v4217 = vsel %vm4210, %v3972, %v3182
    %v4218 = vsel %vm4210, %v4051, %v3261
    %v4219 = vsel %vm4210, %v4130, %v3340
    %v4220 = vsel %vm4210, %v4209, %v3419
    %v4221 = vpack.c.b16 %v4211, %v4211
    %v4222 = vpack.c.b16 %v4212, %v4212
    %v4223 = vpack.c.b16 %v4213, %v4213
    %v4224 = vpack.c.b16 %v4214, %v4214
    %v4225 = vpack.c.b16 %v4215, %v4215
    %v4226 = vpack.c.b16 %v4216, %v4216
    %v4227 = vpack.c.b16 %v4217, %v4217
    %v4228 = vpack.c.b16 %v4218, %v4218
    %v4229 = vpack.c.b16 %v4219, %v4219
    %v4230 = vpack.c.b16 %v4220, %v4220
    %v4561 = vunpack.c.l.b16 %v1776
    %v4562 = vunpack.c.h.b16 %v1776
    %v4563 = vunpack.c.l.b16 %v1777
    %v4564 = vunpack.c.h.b16 %v1777
    %v4565 = vunpack.c.l.b16 %v1778
    %v4566 = vunpack.c.h.b16 %v1778
    %v4567 = vunpack.c.l.b16 %v1779
    %v4568 = vunpack.c.h.b16 %v1779
    %v4569 = vunpack.c.l.b16 %v1780
    %v4570 = vunpack.c.h.b16 %v1780
    %v4571 = vunpack.c.l.b16 %v1781
    %v4572 = vunpack.c.h.b16 %v1781
    %v4573 = vunpack.c.l.b16 %v1782
    %v4574 = vunpack.c.h.b16 %v1782
    %v4575 = vunpack.c.l.b16 %v1783
    %v4576 = vunpack.c.h.b16 %v1783
    %v4577 = vunpack.c.l.b16 %v1784
    %v4578 = vunpack.c.h.b16 %v1784
    %v4579 = vunpack.c.l.b16 %v1785
    %v4580 = vunpack.c.h.b16 %v1785
    %v4581 = vunpack.c.l.b16 %v1786
    %v4582 = vunpack.c.h.b16 %v1786
    %v4583 = vunpack.c.l.b16 %v1787
    %v4584 = vunpack.c.h.b16 %v1787
    %v4585 = vunpack.c.l.b16 %v1788
    %v4586 = vunpack.c.h.b16 %v1788
    %v4587 = vunpack.c.l.b16 %v1789
    %v4588 = vunpack.c.h.b16 %v1789
    %v4589 = vunpack.c.l.b16 %v1790
    %v4590 = vunpack.c.h.b16 %v1790
    %v4591 = vunpack.c.l.b16 %v1791
    %v4592 = vunpack.c.h.b16 %v1791
    %v4593 = vunpack.c.l.b16 %v1792
    %v4594 = vunpack.c.h.b16 %v1792
    %v4595 = vunpack.c.l.b16 %v1793
    %v4596 = vunpack.c.h.b16 %v1793
    %v4597 = vunpack.c.l.b16 %v1794
    %v4598 = vunpack.c.h.b16 %v1794
    %v4599 = vunpack.c.l.b16 %v1795
    %v4600 = vunpack.c.h.b16 %v1795
    %v4601 = vunpack.c.l.b16 %v1796
    %v4602 = vunpack.c.h.b16 %v1796
    %v4603 = vunpack.c.l.b16 %v1797
    %v4604 = vunpack.c.h.b16 %v1797
    %v4605 = vunpack.c.l.b16 %v1798
    %v4606 = vunpack.c.h.b16 %v1798
    %v4607 = vunpack.c.l.b16 %v1799
    %v4608 = vunpack.c.h.b16 %v1799
    %v4609 = vunpack.c.l.b16 %v1800
    %v4610 = vunpack.c.h.b16 %v1800
    %v4611 = vunpack.c.l.b16 %v1801
    %v4612 = vunpack.c.h.b16 %v1801
    %v4613 = vunpack.c.l.b16 %v1802
    %v4614 = vunpack.c.h.b16 %v1802
    %v4615 = vunpack.c.l.b16 %v1803
    %v4616 = vunpack.c.h.b16 %v1803
    %v4617 = vunpack.c.l.b16 %v1804
    %v4618 = vunpack.c.h.b16 %v1804
    %v4619 = vunpack.c.l.b16 %v1805
    %v4620 = vunpack.c.h.b16 %v1805
    %v4621 = vunpack.c.l.b16 %v1806
    %v4622 = vunpack.c.h.b16 %v1806
    %v4623 = vunpack.c.l.b16 %v1807
    %v4624 = vunpack.c.h.b16 %v1807
    %v4625 = vunpack.c.l.b16 %v1808
    %v4626 = vunpack.c.h.b16 %v1808
    %v4627 = vunpack.c.l.b16 %v1809
    %v4628 = vunpack.c.h.b16 %v1809
    %v4629 = vunpack.c.l.b16 %v1810
    %v4630 = vunpack.c.h.b16 %v1810
    %v4631 = vunpack.c.l.b16 %v1811
    %v4632 = vunpack.c.h.b16 %v1811
    %v4633 = vunpack.c.l.b16 %v1812
    %v4634 = vunpack.c.h.b16 %v1812
    %v4635 = vunpack.c.l.b16 %v1813
    %v4636 = vunpack.c.h.b16 %v1813
    %v4637 = vunpack.c.l.b16 %v1814
    %v4638 = vunpack.c.h.b16 %v1814
    %v4639 = vunpack.c.l.b16 %v1815
    %v4640 = vunpack.c.h.b16 %v1815
    %v4641 = vunpack.c.l.b16 %v1816
    %v4642 = vunpack.c.h.b16 %v1816
    %v4643 = vunpack.c.l.b16 %v1817
    %v4644 = vunpack.c.h.b16 %v1817
    %v4645 = vunpack.c.l.b16 %v1818
    %v4646 = vunpack.c.h.b16 %v1818
    %v4647 = vunpack.c.l.b16 %v1819
    %v4648 = vunpack.c.h.b16 %v1819
    %v4649 = vunpack.c.l.b16 %v1820
    %v4650 = vunpack.c.h.b16 %v1820
    %v4651 = vunpack.c.l.b16 %v1821
    %v4652 = vunpack.c.h.b16 %v1821
    %v4653 = vunpack.c.l.b16 %v1822
    %v4654 = vunpack.c.h.b16 %v1822
    %v4655 = vunpack.c.l.b16 %v1823
    %v4656 = vunpack.c.h.b16 %v1823
    %v4657 = vunpack.c.l.b16 %v1824
    %v4658 = vunpack.c.h.b16 %v1824
    %v4659 = vunpack.c.l.b16 %v1825
    %v4660 = vunpack.c.h.b16 %v1825
    %v4661 = vunpack.c.l.b16 %v1826
    %v4662 = vunpack.c.h.b16 %v1826
    %v4663 = vunpack.c.l.b16 %v1827
    %v4664 = vunpack.c.h.b16 %v1827
    %v4665 = vunpack.c.l.b16 %v1828
    %v4666 = vunpack.c.h.b16 %v1828
    %v4667 = vunpack.c.l.b16 %v1829
    %v4668 = vunpack.c.h.b16 %v1829
    %v4669 = vunpack.c.l.b16 %v1830
    %v4670 = vunpack.c.h.b16 %v1830
    %v4671 = vunpack.c.l.b16 %v1831
    %v4672 = vunpack.c.h.b16 %v1831
    %v4673 = vunpack.c.l.b16 %v1832
    %v4674 = vunpack.c.h.b16 %v1832
    %v4675 = vunpack.c.l.b16 %v1833
    %v4676 = vunpack.c.h.b16 %v1833
    %v4677 = vunpack.c.l.b16 %v1834
    %v4678 = vunpack.c.h.b16 %v1834
    %v4679 = vunpack.c.l.b16 %v1835
    %v4680 = vunpack.c.h.b16 %v1835
    %v4681 = vunpack.c.l.b16 %v1836
    %v4682 = vunpack.c.h.b16 %v1836
    %v4683 = vunpack.c.l.b16 %v1837
    %v4684 = vunpack.c.h.b16 %v1837
    %v4685 = vunpack.c.l.b16 %v1838
    %v4686 = vunpack.c.h.b16 %v1838
    %v4687 = vunpack.c.l.b16 %v1839
    %v4688 = vunpack.c.h.b16 %v1839
    %v4689 = vunpack.c.l.b16 %v1840
    %v4690 = vunpack.c.h.b16 %v1840
    %v4691 = vunpack.c.l.b16 %v1841
    %v4692 = vunpack.c.h.b16 %v1841
    %v4693 = vunpack.c.l.b16 %v1842
    %v4694 = vunpack.c.h.b16 %v1842
    %v4695 = vunpack.c.l.b16 %v1843
    %v4696 = vunpack.c.h.b16 %v1843
    %v4697 = vunpack.c.l.b16 %v1844
    %v4698 = vunpack.c.h.b16 %v1844
    %v4699 = vunpack.c.l.b16 %v1845
    %v4700 = vunpack.c.h.b16 %v1845
    %v4701 = vunpack.c.l.b16 %v1846
    %v4702 = vunpack.c.h.b16 %v1846
    %v4703 = vunpack.c.l.b16 %v1847
    %v4704 = vunpack.c.h.b16 %v1847
    %v4705 = vunpack.c.l.b16 %v1848
    %v4706 = vunpack.c.h.b16 %v1848
    %v4707 = vunpack.c.l.b16 %v1849
    %v4708 = vunpack.c.h.b16 %v1849
    %v4709 = vunpack.c.l.b16 %v1850
    %v4710 = vunpack.c.h.b16 %v1850
    %v4711 = vunpack.c.l.b16 %v1851
    %v4712 = vunpack.c.h.b16 %v1851
    %v4713 = vunpack.c.l.b16 %v1852
    %v4714 = vunpack.c.h.b16 %v1852
    %v4715 = vunpack.c.l.b16 %v1853
    %v4716 = vunpack.c.h.b16 %v1853
    %v4717 = vunpack.c.l.b16 %v1854
    %v4718 = vunpack.c.h.b16 %v1854
    %v4719 = vunpack.c.l.b16 %v1855
    %v4720 = vunpack.c.h.b16 %v1855
    %v4721 = vunpack.c.l.b16 %v1856
    %v4722 = vunpack.c.h.b16 %v1856
    %v4723 = vunpack.c.l.b16 %v1857
    %v4724 = vunpack.c.h.b16 %v1857
    %v4725 = vunpack.c.l.b16 %v1858
    %v4726 = vunpack.c.h.b16 %v1858
    %v4727 = vunpack.c.l.b16 %v1859
    %v4728 = vunpack.c.h.b16 %v1859
    %v4729 = vunpack.c.l.b16 %v1860
    %v4730 = vunpack.c.h.b16 %v1860
    %v4731 = vunpack.c.l.b16 %v1861
    %v4732 = vunpack.c.h.b16 %v1861
    %v4733 = vunpack.c.l.b16 %v1862
    %v4734 = vunpack.c.h.b16 %v1862
    %v4735 = vunpack.c.l.b16 %v1863
    %v4736 = vunpack.c.h.b16 %v1863
    %v4737 = vunpack.c.l.b16 %v1864
    %v4738 = vunpack.c.h.b16 %v1864
    %v4739 = vunpack.c.l.b16 %v1865
    %v4740 = vunpack.c.h.b16 %v1865
    %v4741 = vunpack.c.l.b16 %v1866
    %v4742 = vunpack.c.h.b16 %v1866
    %v4743 = vunpack.c.l.b16 %v1867
    %v4744 = vunpack.c.h.b16 %v1867
    %v4745 = vunpack.c.l.b16 %v1868
    %v4746 = vunpack.c.h.b16 %v1868
    %v4747 = vunpack.c.l.b16 %v1869
    %v4748 = vunpack.c.h.b16 %v1869
    %v4749 = vunpack.c.l.b16 %v1870
    %v4750 = vunpack.c.h.b16 %v1870
    %v4751 = vunpack.c.l.b16 %v1871
    %v4752 = vunpack.c.h.b16 %v1871
    %v4753 = vunpack.c.l.b16 %v1872
    %v4754 = vunpack.c.h.b16 %v1872
    %v4755 = vunpack.c.l.b16 %v1873
    %v4756 = vunpack.c.h.b16 %v1873
    %v4757 = vunpack.c.l.b16 %v1874
    %v4758 = vunpack.c.h.b16 %v1874
    %v4759 = vunpack.c.l.b16 %v1875
    %v4760 = vunpack.c.h.b16 %v1875
    %v4761 = vunpack.c.l.b16 %v1876
    %v4762 = vunpack.c.h.b16 %v1876
    %v4763 = vunpack.c.l.b16 %v1877
    %v4764 = vunpack.c.h.b16 %v1877
    %v4765 = vunpack.c.l.b16 %v1878
    %v4766 = vunpack.c.h.b16 %v1878
    %v4767 = vunpack.c.l.b16 %v1879
    %v4768 = vunpack.c.h.b16 %v1879
    %v4769 = vunpack.c.l.b16 %v1880
    %v4770 = vunpack.c.h.b16 %v1880
    %v4771 = vunpack.c.l.b16 %v1881
    %v4772 = vunpack.c.h.b16 %v1881
    %v4773 = vunpack.c.l.b16 %v1882
    %v4774 = vunpack.c.h.b16 %v1882
    %v4775 = vunpack.c.l.b16 %v1883
    %v4776 = vunpack.c.h.b16 %v1883
    %v4777 = vunpack.c.l.b16 %v1884
    %v4778 = vunpack.c.h.b16 %v1884
    %v4779 = vunpack.c.l.b16 %v1885
    %v4780 = vunpack.c.h.b16 %v1885
    %v4781 = vunpack.c.l.b16 %v1886
    %v4782 = vunpack.c.h.b16 %v1886
    %v4783 = vunpack.c.l.b16 %v1887
    %v4784 = vunpack.c.h.b16 %v1887
    %v4785 = vunpack.c.l.b16 %v1888
    %v4786 = vunpack.c.h.b16 %v1888
    %v4787 = vunpack.c.l.b16 %v1889
    %v4788 = vunpack.c.h.b16 %v1889
    %v4789 = vunpack.c.l.b16 %v1890
    %v4790 = vunpack.c.h.b16 %v1890
    %v4791 = vunpack.c.l.b16 %v1891
    %v4792 = vunpack.c.h.b16 %v1891
    %v4793 = vunpack.c.l.b16 %v1892
    %v4794 = vunpack.c.h.b16 %v1892
    %v4795 = vunpack.c.l.b16 %v1893
    %v4796 = vunpack.c.h.b16 %v1893
    %v4797 = vunpack.c.l.b16 %v1894
    %v4798 = vunpack.c.h.b16 %v1894
    %v4799 = vunpack.c.l.b16 %v1895
    %v4800 = vunpack.c.h.b16 %v1895
    %v4801 = vunpack.c.l.b16 %v1896
    %v4802 = vunpack.c.h.b16 %v1896
    %v4803 = vunpack.c.l.b16 %v1897
    %v4804 = vunpack.c.h.b16 %v1897
    %v4805 = vunpack.c.l.b16 %v1898
    %v4806 = vunpack.c.h.b16 %v1898
    %v4807 = vunpack.c.l.b16 %v1899
    %v4808 = vunpack.c.h.b16 %v1899
    %v4809 = vunpack.c.l.b16 %v1900
    %v4810 = vunpack.c.h.b16 %v1900
    %v4811 = vunpack.c.l.b16 %v1901
    %v4812 = vunpack.c.h.b16 %v1901
    %v4813 = vunpack.c.l.b16 %v1902
    %v4814 = vunpack.c.h.b16 %v1902
    %v4815 = vunpack.c.l.b16 %v1903
    %v4816 = vunpack.c.h.b16 %v1903
    %v4817 = vunpack.c.l.b16 %v1904
    %v4818 = vunpack.c.h.b16 %v1904
    %v4819 = vunpack.c.l.b16 %v1905
    %v4820 = vunpack.c.h.b16 %v1905
    %v4821 = vunpack.c.l.b16 %v1906
    %v4822 = vunpack.c.h.b16 %v1906
    %v4823 = vunpack.c.l.b16 %v1907
    %v4824 = vunpack.c.h.b16 %v1907
    %v4825 = vunpack.c.l.b16 %v1908
    %v4826 = vunpack.c.h.b16 %v1908
    %v4827 = vunpack.c.l.b16 %v1909
    %v4828 = vunpack.c.h.b16 %v1909
    %v4829 = vunpack.c.l.b16 %v1910
    %v4830 = vunpack.c.h.b16 %v1910
    %v4831 = vunpack.c.l.b16 %v1911
    %v4832 = vunpack.c.h.b16 %v1911
    %v4833 = vunpack.c.l.b16 %v1912
    %v4834 = vunpack.c.h.b16 %v1912
    %v4835 = vunpack.c.l.b16 %v1913
    %v4836 = vunpack.c.h.b16 %v1913
    %v4837 = vunpack.c.l.b16 %v1914
    %v4838 = vunpack.c.h.b16 %v1914
    %v4839 = vunpack.c.l.b16 %v1915
    %v4840 = vunpack.c.h.b16 %v1915
    %v4841 = vunpack.c.l.b16 %v1916
    %v4842 = vunpack.c.h.b16 %v1916
    %v4843 = vunpack.c.l.b16 %v1917
    %v4844 = vunpack.c.h.b16 %v1917
    %v4845 = vunpack.c.l.b16 %v1918
    %v4846 = vunpack.c.h.b16 %v1918
    %v4847 = vunpack.c.l.b16 %v1919
    %v4848 = vunpack.c.h.b16 %v1919
    %v4849 = vunpack.c.l.b16 %v1920
    %v4850 = vunpack.c.h.b16 %v1920
    %v4851 = vunpack.c.l.b16 %v1921
    %v4852 = vunpack.c.h.b16 %v1921
    %v4853 = vunpack.c.l.b16 %v1922
    %v4854 = vunpack.c.h.b16 %v1922
    %v4855 = vunpack.c.l.b16 %v1923
    %v4856 = vunpack.c.h.b16 %v1923
    %v4857 = vunpack.c.l.b16 %v1924
    %v4858 = vunpack.c.h.b16 %v1924
    %v4859 = vunpack.c.l.b16 %v1925
    %v4860 = vunpack.c.h.b16 %v1925
    %v4861 = vunpack.c.l.b16 %v1926
    %v4862 = vunpack.c.h.b16 %v1926
    %v4863 = vunpack.c.l.b16 %v1927
    %v4864 = vunpack.c.h.b16 %v1927
    %v4865 = vunpack.c.l.b16 %v1928
    %v4866 = vunpack.c.h.b16 %v1928
    %v4867 = vunpack.c.l.b16 %v1929
    %v4868 = vunpack.c.h.b16 %v1929
    %v4869 = vunpack.c.l.b16 %v1930
    %v4870 = vunpack.c.h.b16 %v1930
    %v4871 = vunpack.c.l.b16 %v1931
    %v4872 = vunpack.c.h.b16 %v1931
    %v4873 = vunpack.c.l.b16 %v1932
    %v4874 = vunpack.c.h.b16 %v1932
    %v4875 = vunpack.c.l.b16 %v1933
    %v4876 = vunpack.c.h.b16 %v1933
    %v4877 = vunpack.c.l.b16 %v1934
    %v4878 = vunpack.c.h.b16 %v1934
    %v4879 = vunpack.c.l.b16 %v1935
    %v4880 = vunpack.c.h.b16 %v1935
    %v4881 = vunpack.c.l.b16 %v1936
    %v4882 = vunpack.c.h.b16 %v1936
    %v4883 = vunpack.c.l.b16 %v1937
    %v4884 = vunpack.c.h.b16 %v1937
    %v4885 = vunpack.c.l.b16 %v1938
    %v4886 = vunpack.c.h.b16 %v1938
    %v4887 = vunpack.c.l.b16 %v1939
    %v4888 = vunpack.c.h.b16 %v1939
    %v4889 = vunpack.c.l.b16 %v1940
    %v4890 = vunpack.c.h.b16 %v1940
    %v4891 = vunpack.c.l.b16 %v1941
    %v4892 = vunpack.c.h.b16 %v1941
    %v4893 = vunpack.c.l.b16 %v1942
    %v4894 = vunpack.c.h.b16 %v1942
    %v4895 = vunpack.c.l.b16 %v1943
    %v4896 = vunpack.c.h.b16 %v1943
    %v4897 = vunpack.c.l.b16 %v1944
    %v4898 = vunpack.c.h.b16 %v1944
    %v4899 = vunpack.c.l.b16 %v1945
    %v4900 = vunpack.c.h.b16 %v1945
    %v4901 = vunpack.c.l.b16 %v1946
    %v4902 = vunpack.c.h.b16 %v1946
    %v4903 = vunpack.c.l.b16 %v1947
    %v4904 = vunpack.c.h.b16 %v1947
    %v4905 = vunpack.c.l.b16 %v1948
    %v4906 = vunpack.c.h.b16 %v1948
    %v4907 = vunpack.c.l.b16 %v1949
    %v4908 = vunpack.c.h.b16 %v1949
    %v4909 = vunpack.c.l.b16 %v1950
    %v4910 = vunpack.c.h.b16 %v1950
    %v4911 = vunpack.c.l.b16 %v1951
    %v4912 = vunpack.c.h.b16 %v1951
    %v4913 = vunpack.c.l.b16 %v1952
    %v4914 = vunpack.c.h.b16 %v1952
    %v4915 = vunpack.c.l.b16 %v1953
    %v4916 = vunpack.c.h.b16 %v1953
    %v4917 = vunpack.c.l.b16 %v1954
    %v4918 = vunpack.c.h.b16 %v1954
    %v4919 = vunpack.c.l.b16 %v1955
    %v4920 = vunpack.c.h.b16 %v1955
    %v4921 = vunpack.c.l.b16 %v1956
    %v4922 = vunpack.c.h.b16 %v1956
    %v4923 = vunpack.c.l.b16 %v1957
    %v4924 = vunpack.c.h.b16 %v1957
    %v4925 = vunpack.c.l.b16 %v1958
    %v4926 = vunpack.c.h.b16 %v1958
    %v4927 = vunpack.c.l.b16 %v1959
    %v4928 = vunpack.c.h.b16 %v1959
    %v4929 = vunpack.c.l.b16 %v1960
    %v4930 = vunpack.c.h.b16 %v1960
    %v4931 = vunpack.c.l.b16 %v1961
    %v4932 = vunpack.c.h.b16 %v1961
    %v4933 = vunpack.c.l.b16 %v1962
    %v4934 = vunpack.c.h.b16 %v1962
    %v4935 = vunpack.c.l.b16 %v1963
    %v4936 = vunpack.c.h.b16 %v1963
    %v4937 = vunpack.c.l.b16 %v1964
    %v4938 = vunpack.c.h.b16 %v1964
    %v4939 = vunpack.c.l.b16 %v1965
    %v4940 = vunpack.c.h.b16 %v1965
    %v4941 = vunpack.c.l.b16 %v1966
    %v4942 = vunpack.c.h.b16 %v1966
    %v4943 = vunpack.c.l.b16 %v1967
    %v4944 = vunpack.c.h.b16 %v1967
    %v4945 = vunpack.c.l.b16 %v1968
    %v4946 = vunpack.c.h.b16 %v1968
    %v4947 = vunpack.c.l.b16 %v1969
    %v4948 = vunpack.c.h.b16 %v1969
    %v4949 = vunpack.c.l.b16 %v1970
    %v4950 = vunpack.c.h.b16 %v1970
    %v4951 = vunpack.c.l.b16 %v1971
    %v4952 = vunpack.c.h.b16 %v1971
    %v4953 = vunpack.c.l.b16 %v1972
    %v4954 = vunpack.c.h.b16 %v1972
    %v4955 = vunpack.c.l.b16 %v1973
    %v4956 = vunpack.c.h.b16 %v1973
    %v4957 = vunpack.c.l.b16 %v1974
    %v4958 = vunpack.c.h.b16 %v1974
    %v4959 = vunpack.c.l.b16 %v1975
    %v4960 = vunpack.c.h.b16 %v1975
    %v4961 = vunpack.c.l.b16 %v1976
    %v4962 = vunpack.c.h.b16 %v1976
    %v4963 = vunpack.c.l.b16 %v1977
    %v4964 = vunpack.c.h.b16 %v1977
    %v4965 = vunpack.c.l.b16 %v1978
    %v4966 = vunpack.c.h.b16 %v1978
    %v4967 = vunpack.c.l.b16 %v1979
    %v4968 = vunpack.c.h.b16 %v1979
    %v4969 = vunpack.c.l.b16 %v1980
    %v4970 = vunpack.c.h.b16 %v1980
    %v4971 = vunpack.c.l.b16 %v1981
    %v4972 = vunpack.c.h.b16 %v1981
    %v4973 = vunpack.c.l.b16 %v1982
    %v4974 = vunpack.c.h.b16 %v1982
    %v4975 = vunpack.c.l.b16 %v1983
    %v4976 = vunpack.c.h.b16 %v1983
    %v4977 = vunpack.c.l.b16 %v1984
    %v4978 = vunpack.c.h.b16 %v1984
    %v4979 = vunpack.c.l.b16 %v1985
    %v4980 = vunpack.c.h.b16 %v1985
    %v4981 = vunpack.c.l.b16 %v1986
    %v4982 = vunpack.c.h.b16 %v1986
    %v4983 = vunpack.c.l.b16 %v1987
    %v4984 = vunpack.c.h.b16 %v1987
    %v4985 = vunpack.c.l.b16 %v1988
    %v4986 = vunpack.c.h.b16 %v1988
    %v4987 = vunpack.c.l.b16 %v1989
    %v4988 = vunpack.c.h.b16 %v1989
    %v4989 = vunpack.c.l.b16 %v1990
    %v4990 = vunpack.c.h.b16 %v1990
    %v4991 = vunpack.c.l.b16 %v1991
    %v4992 = vunpack.c.h.b16 %v1991
    %v4993 = vunpack.c.l.b16 %v1992
    %v4994 = vunpack.c.h.b16 %v1992
    %v4995 = vunpack.c.l.b16 %v1993
    %v4996 = vunpack.c.h.b16 %v1993
    %v4997 = vunpack.c.l.b16 %v1994
    %v4998 = vunpack.c.h.b16 %v1994
    %v4999 = vunpack.c.l.b16 %v1995
    %v5000 = vunpack.c.h.b16 %v1995
    %v5001 = vunpack.c.l.b16 %v1996
    %v5002 = vunpack.c.h.b16 %v1996
    %v5003 = vunpack.c.l.b16 %v1997
    %v5004 = vunpack.c.h.b16 %v1997
    %v5005 = vunpack.c.l.b16 %v1998
    %v5006 = vunpack.c.h.b16 %v1998
    %v5007 = vunpack.c.l.b16 %v1999
    %v5008 = vunpack.c.h.b16 %v1999
    %v5009 = vunpack.c.l.b16 %v2000
    %v5010 = vunpack.c.h.b16 %v2000
    %v5011 = vunpack.c.l.b16 %v2001
    %v5012 = vunpack.c.h.b16 %v2001
    %v5013 = vunpack.c.l.b16 %v2002
    %v5014 = vunpack.c.h.b16 %v2002
    %v5015 = vunpack.c.l.b16 %v2003
    %v5016 = vunpack.c.h.b16 %v2003
    %v5017 = vunpack.c.l.b16 %v2004
    %v5018 = vunpack.c.h.b16 %v2004
    %v5019 = vunpack.c.l.b16 %v2005
    %v5020 = vunpack.c.h.b16 %v2005
    %v5021 = vunpack.c.l.b16 %v2006
    %v5022 = vunpack.c.h.b16 %v2006
    %v5023 = vunpack.c.l.b16 %v2007
    %v5024 = vunpack.c.h.b16 %v2007
    %v5025 = vunpack.c.l.b16 %v2008
    %v5026 = vunpack.c.h.b16 %v2008
    %v5027 = vunpack.c.l.b16 %v2009
    %v5028 = vunpack.c.h.b16 %v2009
    %v5029 = vunpack.c.l.b16 %v2010
    %v5030 = vunpack.c.h.b16 %v2010
    %v5031 = vunpack.c.l.b16 %v2011
    %v5032 = vunpack.c.h.b16 %v2011
    %v5033 = vunpack.c.l.b16 %v2012
    %v5034 = vunpack.c.h.b16 %v2012
    %v5035 = vunpack.c.l.b16 %v2013
    %v5036 = vunpack.c.h.b16 %v2013
    %v5037 = vunpack.c.l.b16 %v2014
    %v5038 = vunpack.c.h.b16 %v2014
    %v5039 = vunpack.c.l.b16 %v2015
    %v5040 = vunpack.c.h.b16 %v2015
    %v5041 = vunpack.c.l.b16 %v2016
    %v5042 = vunpack.c.h.b16 %v2016
    %v5043 = vunpack.c.l.b16 %v2017
    %v5044 = vunpack.c.h.b16 %v2017
    %v5045 = vunpack.c.l.b16 %v2018
    %v5046 = vunpack.c.h.b16 %v2018
    %v5047 = vunpack.c.l.b16 %v2019
    %v5048 = vunpack.c.h.b16 %v2019
    %v5049 = vunpack.c.l.b16 %v2020
    %v5050 = vunpack.c.h.b16 %v2020
    %v5051 = vunpack.c.l.b16 %v2021
    %v5052 = vunpack.c.h.b16 %v2021
    %v5053 = vunpack.c.l.b16 %v2022
    %v5054 = vunpack.c.h.b16 %v2022
    %v5055 = vunpack.c.l.b16 %v2023
    %v5056 = vunpack.c.h.b16 %v2023
    %v5057 = vunpack.c.l.b16 %v2024
    %v5058 = vunpack.c.h.b16 %v2024
    %v5059 = vunpack.c.l.b16 %v2025
    %v5060 = vunpack.c.h.b16 %v2025
    %v5061 = vunpack.c.l.b16 %v2026
    %v5062 = vunpack.c.h.b16 %v2026
    %v5063 = vunpack.c.l.b16 %v2027
    %v5064 = vunpack.c.h.b16 %v2027
    %v5065 = vunpack.c.l.b16 %v2028
    %v5066 = vunpack.c.h.b16 %v2028
    %v5067 = vunpack.c.l.b16 %v2029
    %v5068 = vunpack.c.h.b16 %v2029
    %v5069 = vunpack.c.l.b16 %v2030
    %v5070 = vunpack.c.h.b16 %v2030
    %v5071 = vunpack.c.l.b16 %v2031
    %v5072 = vunpack.c.h.b16 %v2031
    %v5073 = vunpack.c.l.b16 %v2032
    %v5074 = vunpack.c.h.b16 %v2032
    %v5075 = vunpack.c.l.b16 %v2033
    %v5076 = vunpack.c.h.b16 %v2033
    %v5077 = vunpack.c.l.b16 %v2034
    %v5078 = vunpack.c.h.b16 %v2034
    %v5079 = vunpack.c.l.b16 %v2035
    %v5080 = vunpack.c.h.b16 %v2035
    %v5081 = vunpack.c.l.b16 %v2036
    %v5082 = vunpack.c.h.b16 %v2036
    %v5083 = vunpack.c.l.b16 %v2037
    %v5084 = vunpack.c.h.b16 %v2037
    %v5085 = vunpack.c.l.b16 %v2038
    %v5086 = vunpack.c.h.b16 %v2038
    %v5087 = vunpack.c.l.b16 %v2039
    %v5088 = vunpack.c.h.b16 %v2039
    %v5089 = vunpack.c.l.b16 %v2040
    %v5090 = vunpack.c.h.b16 %v2040
    %v5091 = vunpack.c.l.b16 %v2041
    %v5092 = vunpack.c.h.b16 %v2041
    %v5093 = vunpack.c.l.b16 %v2042
    %v5094 = vunpack.c.h.b16 %v2042
    %v5095 = vunpack.c.l.b16 %v2043
    %v5096 = vunpack.c.h.b16 %v2043
    %v5097 = vunpack.c.l.b16 %v2044
    %v5098 = vunpack.c.h.b16 %v2044
    %v5099 = vunpack.c.l.b16 %v2045
    %v5100 = vunpack.c.h.b16 %v2045
    %v5101 = vunpack.c.l.b16 %v2046
    %v5102 = vunpack.c.h.b16 %v2046
    %v5103 = vunpack.c.l.b16 %v2047
    %v5104 = vunpack.c.h.b16 %v2047
    %v5105 = vunpack.c.l.b16 %v2048
    %v5106 = vunpack.c.h.b16 %v2048
    %v5107 = vunpack.c.l.b16 %v2049
    %v5108 = vunpack.c.h.b16 %v2049
    %v5109 = vunpack.c.l.b16 %v2050
    %v5110 = vunpack.c.h.b16 %v2050
    %v5111 = vunpack.c.l.b16 %v2051
    %v5112 = vunpack.c.h.b16 %v2051
    %v5113 = vunpack.c.l.b16 %v2052
    %v5114 = vunpack.c.h.b16 %v2052
    %v5115 = vunpack.c.l.b16 %v2053
    %v5116 = vunpack.c.h.b16 %v2053
    %v5117 = vunpack.c.l.b16 %v2054
    %v5118 = vunpack.c.h.b16 %v2054
    %v5119 = vunpack.c.l.b16 %v2055
    %v5120 = vunpack.c.h.b16 %v2055
    %v5121 = vunpack.c.l.b16 %v2056
    %v5122 = vunpack.c.h.b16 %v2056
    %v5123 = vunpack.c.l.b16 %v2057
    %v5124 = vunpack.c.h.b16 %v2057
    %v5125 = vunpack.c.l.b16 %v2058
    %v5126 = vunpack.c.h.b16 %v2058
    %v5127 = vunpack.c.l.b16 %v2059
    %v5128 = vunpack.c.h.b16 %v2059
    %v5129 = vunpack.c.l.b16 %v2060
    %v5130 = vunpack.c.h.b16 %v2060
    %v5131 = vunpack.c.l.b16 %v2061
    %v5132 = vunpack.c.h.b16 %v2061
    %v5133 = vunpack.c.l.b16 %v2062
    %v5134 = vunpack.c.h.b16 %v2062
    %v5135 = vunpack.c.l.b16 %v2063
    %v5136 = vunpack.c.h.b16 %v2063
    %v5137 = vunpack.c.l.b16 %v2064
    %v5138 = vunpack.c.h.b16 %v2064
    %v5139 = vunpack.c.l.b16 %v2065
    %v5140 = vunpack.c.h.b16 %v2065
    %v5141 = vunpack.c.l.b16 %v2066
    %v5142 = vunpack.c.h.b16 %v2066
    %v5143 = vunpack.c.l.b16 %v2067
    %v5144 = vunpack.c.h.b16 %v2067
    %v5145 = vunpack.c.l.b16 %v2068
    %v5146 = vunpack.c.h.b16 %v2068
    %v5147 = vunpack.c.l.b16 %v2069
    %v5148 = vunpack.c.h.b16 %v2069
    %v5149 = vunpack.c.l.b16 %v2070
    %v5150 = vunpack.c.h.b16 %v2070
    %v5151 = vunpack.c.l.b16 %v2071
    %v5152 = vunpack.c.h.b16 %v2071
    %v5153 = vunpack.c.l.b16 %v2072
    %v5154 = vunpack.c.h.b16 %v2072
    %v5155 = vunpack.c.l.b16 %v2073
    %v5156 = vunpack.c.h.b16 %v2073
    %v5157 = vunpack.c.l.b16 %v2074
    %v5158 = vunpack.c.h.b16 %v2074
    %v5159 = vunpack.c.l.b16 %v2075
    %v5160 = vunpack.c.h.b16 %v2075
    %v5161 = vunpack.c.l.b16 %v2076
    %v5162 = vunpack.c.h.b16 %v2076
    %v5163 = vunpack.c.l.b16 %v2077
    %v5164 = vunpack.c.h.b16 %v2077
    %v5165 = vunpack.c.l.b16 %v2078
    %v5166 = vunpack.c.h.b16 %v2078
    %v5167 = vunpack.c.l.b16 %v2079
    %v5168 = vunpack.c.h.b16 %v2079
    %v5169 = vunpack.c.l.b16 %v2080
    %v5170 = vunpack.c.h.b16 %v2080
    %v5171 = vunpack.c.l.b16 %v2081
    %v5172 = vunpack.c.h.b16 %v2081
    %v5173 = vunpack.c.l.b16 %v2082
    %v5174 = vunpack.c.h.b16 %v2082
    %v5175 = vunpack.c.l.b16 %v2083
    %v5176 = vunpack.c.h.b16 %v2083
    %v5177 = vunpack.c.l.b16 %v2084
    %v5178 = vunpack.c.h.b16 %v2084
    %v5179 = vunpack.c.l.b16 %v2085
    %v5180 = vunpack.c.h.b16 %v2085
    %v5181 = vunpack.c.l.b16 %v2086
    %v5182 = vunpack.c.h.b16 %v2086
    %v5183 = vunpack.c.l.b16 %v2087
    %v5184 = vunpack.c.h.b16 %v2087
    %v5185 = vunpack.c.l.b16 %v2088
    %v5186 = vunpack.c.h.b16 %v2088
    %v5187 = vunpack.c.l.b16 %v2089
    %v5188 = vunpack.c.h.b16 %v2089
    %v5189 = vunpack.c.l.b16 %v2090
    %v5190 = vunpack.c.h.b16 %v2090
    %v5191 = vunpack.c.l.b16 %v2091
    %v5192 = vunpack.c.h.b16 %v2091
    %v5193 = vunpack.c.l.b16 %v2092
    %v5194 = vunpack.c.h.b16 %v2092
    %v5195 = vunpack.c.l.b16 %v2093
    %v5196 = vunpack.c.h.b16 %v2093
    %v5197 = vunpack.c.l.b16 %v2094
    %v5198 = vunpack.c.h.b16 %v2094
    %v5199 = vunpack.c.l.b16 %v2095
    %v5200 = vunpack.c.h.b16 %v2095
    %v5201 = vpack.c.b16 %v4565, %v4561
    %v5202 = vpack.c.b16 %v4566, %v4562
    %v5203 = vpack.c.b16 %v4567, %v4563
    %v5204 = vpack.c.b16 %v4568, %v4564
    %v5205 = vpack.c.b16 %v4573, %v4569
    %v5206 = vpack.c.b16 %v4574, %v4570
    %v5207 = vpack.c.b16 %v4575, %v4571
    %v5208 = vpack.c.b16 %v4576, %v4572
    %v5209 = vpack.c.b16 %v4581, %v4577
    %v5210 = vpack.c.b16 %v4582, %v4578
    %v5211 = vpack.c.b16 %v4583, %v4579
    %v5212 = vpack.c.b16 %v4584, %v4580
    %v5213 = vpack.c.b16 %v4589, %v4585
    %v5214 = vpack.c.b16 %v4590, %v4586
    %v5215 = vpack.c.b16 %v4591, %v4587
    %v5216 = vpack.c.b16 %v4592, %v4588
    %v5217 = vpack.c.b16 %v4597, %v4593
    %v5218 = vpack.c.b16 %v4598, %v4594
    %v5219 = vpack.c.b16 %v4599, %v4595
    %v5220 = vpack.c.b16 %v4600, %v4596
    %v5221 = vpack.c.b16 %v4605, %v4601
    %v5222 = vpack.c.b16 %v4606, %v4602
    %v5223 = vpack.c.b16 %v4607, %v4603
    %v5224 = vpack.c.b16 %v4608, %v4604
    %v5225 = vpack.c.b16 %v4613, %v4609
    %v5226 = vpack.c.b16 %v4614, %v4610
    %v5227 = vpack.c.b16 %v4615, %v4611
    %v5228 = vpack.c.b16 %v4616, %v4612
    %v5229 = vpack.c.b16 %v4621, %v4617
    %v5230 = vpack.c.b16 %v4622, %v4618
    %v5231 = vpack.c.b16 %v4623, %v4619
    %v5232 = vpack.c.b16 %v4624, %v4620
    %v5233 = vpack.c.b16 %v4629, %v4625
    %v5234 = vpack.c.b16 %v4630, %v4626
    %v5235 = vpack.c.b16 %v4631, %v4627
    %v5236 = vpack.c.b16 %v4632, %v4628
    %v5237 = vpack.c.b16 %v4637, %v4633
    %v5238 = vpack.c.b16 %v4638, %v4634
    %v5239 = vpack.c.b16 %v4639, %v4635
    %v5240 = vpack.c.b16 %v4640, %v4636
    %v5241 = vpack.c.b16 %v4645, %v4641
    %v5242 = vpack.c.b16 %v4646, %v4642
    %v5243 = vpack.c.b16 %v4647, %v4643
    %v5244 = vpack.c.b16 %v4648, %v4644
    %v5245 = vpack.c.b16 %v4653, %v4649
    %v5246 = vpack.c.b16 %v4654, %v4650
    %v5247 = vpack.c.b16 %v4655, %v4651
    %v5248 = vpack.c.b16 %v4656, %v4652
    %v5249 = vpack.c.b16 %v4661, %v4657
    %v5250 = vpack.c.b16 %v4662, %v4658
    %v5251 = vpack.c.b16 %v4663, %v4659
    %v5252 = vpack.c.b16 %v4664, %v4660
    %v5253 = vpack.c.b16 %v4669, %v4665
    %v5254 = vpack.c.b16 %v4670, %v4666
    %v5255 = vpack.c.b16 %v4671, %v4667
    %v5256 = vpack.c.b16 %v4672, %v4668
    %v5257 = vpack.c.b16 %v4677, %v4673
    %v5258 = vpack.c.b16 %v4678, %v4674
    %v5259 = vpack.c.b16 %v4679, %v4675
    %v5260 = vpack.c.b16 %v4680, %v4676
    %v5261 = vpack.c.b16 %v4685, %v4681
    %v5262 = vpack.c.b16 %v4686, %v4682
    %v5263 = vpack.c.b16 %v4687, %v4683
    %v5264 = vpack.c.b16 %v4688, %v4684
    %v5265 = vpack.c.b16 %v4693, %v4689
    %v5266 = vpack.c.b16 %v4694, %v4690
    %v5267 = vpack.c.b16 %v4695, %v4691
    %v5268 = vpack.c.b16 %v4696, %v4692
    %v5269 = vpack.c.b16 %v4701, %v4697
    %v5270 = vpack.c.b16 %v4702, %v4698
    %v5271 = vpack.c.b16 %v4703, %v4699
    %v5272 = vpack.c.b16 %v4704, %v4700
    %v5273 = vpack.c.b16 %v4709, %v4705
    %v5274 = vpack.c.b16 %v4710, %v4706
    %v5275 = vpack.c.b16 %v4711, %v4707
    %v5276 = vpack.c.b16 %v4712, %v4708
    %v5277 = vpack.c.b16 %v4717, %v4713
    %v5278 = vpack.c.b16 %v4718, %v4714
    %v5279 = vpack.c.b16 %v4719, %v4715
    %v5280 = vpack.c.b16 %v4720, %v4716
    %v5281 = vpack.c.b16 %v4725, %v4721
    %v5282 = vpack.c.b16 %v4726, %v4722
    %v5283 = vpack.c.b16 %v4727, %v4723
    %v5284 = vpack.c.b16 %v4728, %v4724
    %v5285 = vpack.c.b16 %v4733, %v4729
    %v5286 = vpack.c.b16 %v4734, %v4730
    %v5287 = vpack.c.b16 %v4735, %v4731
    %v5288 = vpack.c.b16 %v4736, %v4732
    %v5289 = vpack.c.b16 %v4741, %v4737
    %v5290 = vpack.c.b16 %v4742, %v4738
    %v5291 = vpack.c.b16 %v4743, %v4739
    %v5292 = vpack.c.b16 %v4744, %v4740
    %v5293 = vpack.c.b16 %v4749, %v4745
    %v5294 = vpack.c.b16 %v4750, %v4746
    %v5295 = vpack.c.b16 %v4751, %v4747
    %v5296 = vpack.c.b16 %v4752, %v4748
    %v5297 = vpack.c.b16 %v4757, %v4753
    %v5298 = vpack.c.b16 %v4758, %v4754
    %v5299 = vpack.c.b16 %v4759, %v4755
    %v5300 = vpack.c.b16 %v4760, %v4756
    %v5301 = vpack.c.b16 %v4765, %v4761
    %v5302 = vpack.c.b16 %v4766, %v4762
    %v5303 = vpack.c.b16 %v4767, %v4763
    %v5304 = vpack.c.b16 %v4768, %v4764
    %v5305 = vpack.c.b16 %v4773, %v4769
    %v5306 = vpack.c.b16 %v4774, %v4770
    %v5307 = vpack.c.b16 %v4775, %v4771
    %v5308 = vpack.c.b16 %v4776, %v4772
    %v5309 = vpack.c.b16 %v4781, %v4777
    %v5310 = vpack.c.b16 %v4782, %v4778
    %v5311 = vpack.c.b16 %v4783, %v4779
    %v5312 = vpack.c.b16 %v4784, %v4780
    %v5313 = vpack.c.b16 %v4789, %v4785
    %v5314 = vpack.c.b16 %v4790, %v4786
    %v5315 = vpack.c.b16 %v4791, %v4787
    %v5316 = vpack.c.b16 %v4792, %v4788
    %v5317 = vpack.c.b16 %v4797, %v4793
    %v5318 = vpack.c.b16 %v4798, %v4794
    %v5319 = vpack.c.b16 %v4799, %v4795
    %v5320 = vpack.c.b16 %v4800, %v4796
    %v5321 = vpack.c.b16 %v4805, %v4801
    %v5322 = vpack.c.b16 %v4806, %v4802
    %v5323 = vpack.c.b16 %v4807, %v4803
    %v5324 = vpack.c.b16 %v4808, %v4804
    %v5325 = vpack.c.b16 %v4813, %v4809
    %v5326 = vpack.c.b16 %v4814, %v4810
    %v5327 = vpack.c.b16 %v4815, %v4811
    %v5328 = vpack.c.b16 %v4816, %v4812
    %v5329 = vpack.c.b16 %v4821, %v4817
    %v5330 = vpack.c.b16 %v4822, %v4818
    %v5331 = vpack.c.b16 %v4823, %v4819
    %v5332 = vpack.c.b16 %v4824, %v4820
    %v5333 = vpack.c.b16 %v4829, %v4825
    %v5334 = vpack.c.b16 %v4830, %v4826
    %v5335 = vpack.c.b16 %v4831, %v4827
    %v5336 = vpack.c.b16 %v4832, %v4828
    %v5337 = vpack.c.b16 %v4837, %v4833
    %v5338 = vpack.c.b16 %v4838, %v4834
    %v5339 = vpack.c.b16 %v4839, %v4835
    %v5340 = vpack.c.b16 %v4840, %v4836
    %v5341 = vpack.c.b16 %v4845, %v4841
    %v5342 = vpack.c.b16 %v4846, %v4842
    %v5343 = vpack.c.b16 %v4847, %v4843
    %v5344 = vpack.c.b16 %v4848, %v4844
    %v5345 = vpack.c.b16 %v4853, %v4849
    %v5346 = vpack.c.b16 %v4854, %v4850
    %v5347 = vpack.c.b16 %v4855, %v4851
    %v5348 = vpack.c.b16 %v4856, %v4852
    %v5349 = vpack.c.b16 %v4861, %v4857
    %v5350 = vpack.c.b16 %v4862, %v4858
    %v5351 = vpack.c.b16 %v4863, %v4859
    %v5352 = vpack.c.b16 %v4864, %v4860
    %v5353 = vpack.c.b16 %v4869, %v4865
    %v5354 = vpack.c.b16 %v4870, %v4866
    %v5355 = vpack.c.b16 %v4871, %v4867
    %v5356 = vpack.c.b16 %v4872, %v4868
    %v5357 = vpack.c.b16 %v4877, %v4873
    %v5358 = vpack.c.b16 %v4878, %v4874
    %v5359 = vpack.c.b16 %v4879, %v4875
    %v5360 = vpack.c.b16 %v4880, %v4876
    %v5361 = vpack.c.b16 %v4885, %v4881
    %v5362 = vpack.c.b16 %v4886, %v4882
    %v5363 = vpack.c.b16 %v4887, %v4883
    %v5364 = vpack.c.b16 %v4888, %v4884
    %v5365 = vpack.c.b16 %v4893, %v4889
    %v5366 = vpack.c.b16 %v4894, %v4890
    %v5367 = vpack.c.b16 %v4895, %v4891
    %v5368 = vpack.c.b16 %v4896, %v4892
    %v5369 = vpack.c.b16 %v4901, %v4897
    %v5370 = vpack.c.b16 %v4902, %v4898
    %v5371 = vpack.c.b16 %v4903, %v4899
    %v5372 = vpack.c.b16 %v4904, %v4900
    %v5373 = vpack.c.b16 %v4909, %v4905
    %v5374 = vpack.c.b16 %v4910, %v4906
    %v5375 = vpack.c.b16 %v4911, %v4907
    %v5376 = vpack.c.b16 %v4912, %v4908
    %v5377 = vpack.c.b16 %v4917, %v4913
    %v5378 = vpack.c.b16 %v4918, %v4914
    %v5379 = vpack.c.b16 %v4919, %v4915
    %v5380 = vpack.c.b16 %v4920, %v4916
    %v5381 = vpack.c.b16 %v4925, %v4921
    %v5382 = vpack.c.b16 %v4926, %v4922
    %v5383 = vpack.c.b16 %v4927, %v4923
    %v5384 = vpack.c.b16 %v4928, %v4924
    %v5385 = vpack.c.b16 %v4933, %v4929
    %v5386 = vpack.c.b16 %v4934, %v4930
    %v5387 = vpack.c.b16 %v4935, %v4931
    %v5388 = vpack.c.b16 %v4936, %v4932
    %v5389 = vpack.c.b16 %v4941, %v4937
    %v5390 = vpack.c.b16 %v4942, %v4938
    %v5391 = vpack.c.b16 %v4943, %v4939
    %v5392 = vpack.c.b16 %v4944, %v4940
    %v5393 = vpack.c.b16 %v4949, %v4945
    %v5394 = vpack.c.b16 %v4950, %v4946
    %v5395 = vpack.c.b16 %v4951, %v4947
    %v5396 = vpack.c.b16 %v4952, %v4948
    %v5397 = vpack.c.b16 %v4957, %v4953
    %v5398 = vpack.c.b16 %v4958, %v4954
    %v5399 = vpack.c.b16 %v4959, %v4955
    %v5400 = vpack.c.b16 %v4960, %v4956
    %v5401 = vpack.c.b16 %v4965, %v4961
    %v5402 = vpack.c.b16 %v4966, %v4962
    %v5403 = vpack.c.b16 %v4967, %v4963
    %v5404 = vpack.c.b16 %v4968, %v4964
    %v5405 = vpack.c.b16 %v4973, %v4969
    %v5406 = vpack.c.b16 %v4974, %v4970
    %v5407 = vpack.c.b16 %v4975, %v4971
    %v5408 = vpack.c.b16 %v4976, %v4972
    %v5409 = vpack.c.b16 %v4981, %v4977
    %v5410 = vpack.c.b16 %v4982, %v4978
    %v5411 = vpack.c.b16 %v4983, %v4979
    %v5412 = vpack.c.b16 %v4984, %v4980
    %v5413 = vpack.c.b16 %v4989, %v4985
    %v5414 = vpack.c.b16 %v4990, %v4986
    %v5415 = vpack.c.b16 %v4991, %v4987
    %v5416 = vpack.c.b16 %v4992, %v4988
    %v5417 = vpack.c.b16 %v4997, %v4993
    %v5418 = vpack.c.b16 %v4998, %v4994
    %v5419 = vpack.c.b16 %v4999, %v4995
    %v5420 = vpack.c.b16 %v5000, %v4996
    %v5421 = vpack.c.b16 %v5005, %v5001
    %v5422 = vpack.c.b16 %v5006, %v5002
    %v5423 = vpack.c.b16 %v5007, %v5003
    %v5424 = vpack.c.b16 %v5008, %v5004
    %v5425 = vpack.c.b16 %v5013, %v5009
    %v5426 = vpack.c.b16 %v5014, %v5010
    %v5427 = vpack.c.b16 %v5015, %v5011
    %v5428 = vpack.c.b16 %v5016, %v5012
    %v5429 = vpack.c.b16 %v5021, %v5017
    %v5430 = vpack.c.b16 %v5022, %v5018
    %v5431 = vpack.c.b16 %v5023, %v5019
    %v5432 = vpack.c.b16 %v5024, %v5020
    %v5433 = vpack.c.b16 %v5029, %v5025
    %v5434 = vpack.c.b16 %v5030, %v5026
    %v5435 = vpack.c.b16 %v5031, %v5027
    %v5436 = vpack.c.b16 %v5032, %v5028
    %v5437 = vpack.c.b16 %v5037, %v5033
    %v5438 = vpack.c.b16 %v5038, %v5034
    %v5439 = vpack.c.b16 %v5039, %v5035
    %v5440 = vpack.c.b16 %v5040, %v5036
    %v5441 = vpack.c.b16 %v5045, %v5041
    %v5442 = vpack.c.b16 %v5046, %v5042
    %v5443 = vpack.c.b16 %v5047, %v5043
    %v5444 = vpack.c.b16 %v5048, %v5044
    %v5445 = vpack.c.b16 %v5053, %v5049
    %v5446 = vpack.c.b16 %v5054, %v5050
    %v5447 = vpack.c.b16 %v5055, %v5051
    %v5448 = vpack.c.b16 %v5056, %v5052
    %v5449 = vpack.c.b16 %v5061, %v5057
    %v5450 = vpack.c.b16 %v5062, %v5058
    %v5451 = vpack.c.b16 %v5063, %v5059
    %v5452 = vpack.c.b16 %v5064, %v5060
    %v5453 = vpack.c.b16 %v5069, %v5065
    %v5454 = vpack.c.b16 %v5070, %v5066
    %v5455 = vpack.c.b16 %v5071, %v5067
    %v5456 = vpack.c.b16 %v5072, %v5068
    %v5457 = vpack.c.b16 %v5077, %v5073
    %v5458 = vpack.c.b16 %v5078, %v5074
    %v5459 = vpack.c.b16 %v5079, %v5075
    %v5460 = vpack.c.b16 %v5080, %v5076
    %v5461 = vpack.c.b16 %v5085, %v5081
    %v5462 = vpack.c.b16 %v5086, %v5082
    %v5463 = vpack.c.b16 %v5087, %v5083
    %v5464 = vpack.c.b16 %v5088, %v5084
    %v5465 = vpack.c.b16 %v5093, %v5089
    %v5466 = vpack.c.b16 %v5094, %v5090
    %v5467 = vpack.c.b16 %v5095, %v5091
    %v5468 = vpack.c.b16 %v5096, %v5092
    %v5469 = vpack.c.b16 %v5101, %v5097
    %v5470 = vpack.c.b16 %v5102, %v5098
    %v5471 = vpack.c.b16 %v5103, %v5099
    %v5472 = vpack.c.b16 %v5104, %v5100
    %v5473 = vpack.c.b16 %v5109, %v5105
    %v5474 = vpack.c.b16 %v5110, %v5106
    %v5475 = vpack.c.b16 %v5111, %v5107
    %v5476 = vpack.c.b16 %v5112, %v5108
    %v5477 = vpack.c.b16 %v5117, %v5113
    %v5478 = vpack.c.b16 %v5118, %v5114
    %v5479 = vpack.c.b16 %v5119, %v5115
    %v5480 = vpack.c.b16 %v5120, %v5116
    %v5481 = vpack.c.b16 %v5125, %v5121
    %v5482 = vpack.c.b16 %v5126, %v5122
    %v5483 = vpack.c.b16 %v5127, %v5123
    %v5484 = vpack.c.b16 %v5128, %v5124
    %v5485 = vpack.c.b16 %v5133, %v5129
    %v5486 = vpack.c.b16 %v5134, %v5130
    %v5487 = vpack.c.b16 %v5135, %v5131
    %v5488 = vpack.c.b16 %v5136, %v5132
    %v5489 = vpack.c.b16 %v5141, %v5137
    %v5490 = vpack.c.b16 %v5142, %v5138
    %v5491 = vpack.c.b16 %v5143, %v5139
    %v5492 = vpack.c.b16 %v5144, %v5140
    %v5493 = vpack.c.b16 %v5149, %v5145
    %v5494 = vpack.c.b16 %v5150, %v5146
    %v5495 = vpack.c.b16 %v5151, %v5147
    %v5496 = vpack.c.b16 %v5152, %v5148
    %v5497 = vpack.c.b16 %v5157, %v5153
    %v5498 = vpack.c.b16 %v5158, %v5154
    %v5499 = vpack.c.b16 %v5159, %v5155
    %v5500 = vpack.c.b16 %v5160, %v5156
    %v5501 = vpack.c.b16 %v5165, %v5161
    %v5502 = vpack.c.b16 %v5166, %v5162
    %v5503 = vpack.c.b16 %v5167, %v5163
    %v5504 = vpack.c.b16 %v5168, %v5164
    %v5505 = vpack.c.b16 %v5173, %v5169
    %v5506 = vpack.c.b16 %v5174, %v5170
    %v5507 = vpack.c.b16 %v5175, %v5171
    %v5508 = vpack.c.b16 %v5176, %v5172
    %v5509 = vpack.c.b16 %v5181, %v5177
    %v5510 = vpack.c.b16 %v5182, %v5178
    %v5511 = vpack.c.b16 %v5183, %v5179
    %v5512 = vpack.c.b16 %v5184, %v5180
    %v5513 = vpack.c.b16 %v5189, %v5185
    %v5514 = vpack.c.b16 %v5190, %v5186
    %v5515 = vpack.c.b16 %v5191, %v5187
    %v5516 = vpack.c.b16 %v5192, %v5188
    %v5517 = vpack.c.b16 %v5197, %v5193
    %v5518 = vpack.c.b16 %v5198, %v5194
    %v5519 = vpack.c.b16 %v5199, %v5195
    %v5520 = vpack.c.b16 %v5200, %v5196
    %5841 = vmatprep.subr.bf16.mxu0 %v5202
    %5842 = vmatpush1.bf16.msra.mxu0 %v5201
    %5843 = vmatprep.subr.bf16.mxu0 %v5206
    %5844 = vmatpush1.bf16.msra.mxu0 %v5205
    %5845 = vmatprep.subr.bf16.mxu0 %v5210
    %5846 = vmatpush1.bf16.msra.mxu0 %v5209
    %5847 = vmatprep.subr.bf16.mxu0 %v5214
    %5848 = vmatpush1.bf16.msra.mxu0 %v5213
    %5849 = vmatprep.subr.bf16.mxu0 %v5218
    %5850 = vmatpush1.bf16.msra.mxu0 %v5217
    %5851 = vmatprep.subr.bf16.mxu0 %v5222
    %5852 = vmatpush1.bf16.msra.mxu0 %v5221
    %5853 = vmatprep.subr.bf16.mxu0 %v5226
    %5854 = vmatpush1.bf16.msra.mxu0 %v5225
    %5855 = vmatprep.subr.bf16.mxu0 %v5230
    %5856 = vmatpush1.bf16.msra.mxu0 %v5229
    %5857 = vmatprep.subr.bf16.mxu0 %v5234
    %5858 = vmatpush1.bf16.msra.mxu0 %v5233
    %5859 = vmatprep.subr.bf16.mxu0 %v5238
    %5860 = vmatpush1.bf16.msra.mxu0 %v5237
    %5861 = vmatprep.subr.bf16.mxu0 %v5242
    %5862 = vmatpush1.bf16.msra.mxu0 %v5241
    %5863 = vmatprep.subr.bf16.mxu0 %v5246
    %5864 = vmatpush1.bf16.msra.mxu0 %v5245
    %5865 = vmatprep.subr.bf16.mxu0 %v5250
    %5866 = vmatpush1.bf16.msra.mxu0 %v5249
    %5867 = vmatprep.subr.bf16.mxu0 %v5254
    %5868 = vmatpush1.bf16.msra.mxu0 %v5253
    %5869 = vmatprep.subr.bf16.mxu0 %v5258
    %5870 = vmatpush1.bf16.msra.mxu0 %v5257
    %5871 = vmatprep.subr.bf16.mxu0 %v5262
    %5872 = vmatpush1.bf16.msra.mxu0 %v5261
    %5873 = vmatprep.mubr.bf16.mxu0 %v4222
    %5874 = vmatmul.mubr.bf16.gmra.mrb[0].mxu0 %v4221
    %v5875 = vpop.f32.mrb[0].mxu0
    %v5876 = vadd.f32 %v2101, %v5875
    %v5877 = vpop.f32.mrb[0].mxu0
    %v5878 = vadd.f32 %v2105, %v5877
    %v5879 = vpop.f32.mrb[0].mxu0
    %v5880 = vpop.f32.mrb[0].mxu0
    %5881 = vdwg.mxu0
    %5882 = vmatprep.subr.bf16.mxu0 %v5266
    %5883 = vmatpush1.bf16.msra.mxu0 %v5265
    %5884 = vmatprep.subr.bf16.mxu0 %v5270
    %5885 = vmatpush1.bf16.msra.mxu0 %v5269
    %5886 = vmatprep.subr.bf16.mxu0 %v5274
    %5887 = vmatpush1.bf16.msra.mxu0 %v5273
    %5888 = vmatprep.subr.bf16.mxu0 %v5278
    %5889 = vmatpush1.bf16.msra.mxu0 %v5277
    %5890 = vmatprep.subr.bf16.mxu0 %v5282
    %5891 = vmatpush1.bf16.msra.mxu0 %v5281
    %5892 = vmatprep.subr.bf16.mxu0 %v5286
    %5893 = vmatpush1.bf16.msra.mxu0 %v5285
    %5894 = vmatprep.subr.bf16.mxu0 %v5290
    %5895 = vmatpush1.bf16.msra.mxu0 %v5289
    %5896 = vmatprep.subr.bf16.mxu0 %v5294
    %5897 = vmatpush1.bf16.msra.mxu0 %v5293
    %5898 = vmatprep.subr.bf16.mxu0 %v5298
    %5899 = vmatpush1.bf16.msra.mxu0 %v5297
    %5900 = vmatprep.subr.bf16.mxu0 %v5302
    %5901 = vmatpush1.bf16.msra.mxu0 %v5301
    %5902 = vmatprep.subr.bf16.mxu0 %v5306
    %5903 = vmatpush1.bf16.msra.mxu0 %v5305
    %5904 = vmatprep.subr.bf16.mxu0 %v5310
    %5905 = vmatpush1.bf16.msra.mxu0 %v5309
    %5906 = vmatprep.subr.bf16.mxu0 %v5314
    %5907 = vmatpush1.bf16.msra.mxu0 %v5313
    %5908 = vmatprep.subr.bf16.mxu0 %v5318
    %5909 = vmatpush1.bf16.msra.mxu0 %v5317
    %5910 = vmatprep.subr.bf16.mxu0 %v5322
    %5911 = vmatpush1.bf16.msra.mxu0 %v5321
    %5912 = vmatprep.subr.bf16.mxu0 %v5326
    %5913 = vmatpush1.bf16.msra.mxu0 %v5325
    %5914 = vmatprep.mubr.bf16.mxu0 %v4224
    %5915 = vmatmul.mubr.bf16.gmra.mrb[0].mxu0 %v4223
    %v5916 = vpop.f32.mrb[0].mxu0
    %v5917 = vadd.f32 %v5876, %v5916
    %v5918 = vpop.f32.mrb[0].mxu0
    %v5919 = vadd.f32 %v5878, %v5918
    %v5920 = vpop.f32.mrb[0].mxu0
    %v5921 = vpop.f32.mrb[0].mxu0
    %5922 = vdwg.mxu0
    %5923 = vmatprep.subr.bf16.mxu0 %v5330
    %5924 = vmatpush1.bf16.msra.mxu0 %v5329
    %5925 = vmatprep.subr.bf16.mxu0 %v5334
    %5926 = vmatpush1.bf16.msra.mxu0 %v5333
    %5927 = vmatprep.subr.bf16.mxu0 %v5338
    %5928 = vmatpush1.bf16.msra.mxu0 %v5337
    %5929 = vmatprep.subr.bf16.mxu0 %v5342
    %5930 = vmatpush1.bf16.msra.mxu0 %v5341
    %5931 = vmatprep.subr.bf16.mxu0 %v5346
    %5932 = vmatpush1.bf16.msra.mxu0 %v5345
    %5933 = vmatprep.subr.bf16.mxu0 %v5350
    %5934 = vmatpush1.bf16.msra.mxu0 %v5349
    %5935 = vmatprep.subr.bf16.mxu0 %v5354
    %5936 = vmatpush1.bf16.msra.mxu0 %v5353
    %5937 = vmatprep.subr.bf16.mxu0 %v5358
    %5938 = vmatpush1.bf16.msra.mxu0 %v5357
    %5939 = vmatprep.subr.bf16.mxu0 %v5362
    %5940 = vmatpush1.bf16.msra.mxu0 %v5361
    %5941 = vmatprep.subr.bf16.mxu0 %v5366
    %5942 = vmatpush1.bf16.msra.mxu0 %v5365
    %5943 = vmatprep.subr.bf16.mxu0 %v5370
    %5944 = vmatpush1.bf16.msra.mxu0 %v5369
    %5945 = vmatprep.subr.bf16.mxu0 %v5374
    %5946 = vmatpush1.bf16.msra.mxu0 %v5373
    %5947 = vmatprep.subr.bf16.mxu0 %v5378
    %5948 = vmatpush1.bf16.msra.mxu0 %v5377
    %5949 = vmatprep.subr.bf16.mxu0 %v5382
    %5950 = vmatpush1.bf16.msra.mxu0 %v5381
    %5951 = vmatprep.subr.bf16.mxu0 %v5386
    %5952 = vmatpush1.bf16.msra.mxu0 %v5385
    %5953 = vmatprep.subr.bf16.mxu0 %v5390
    %5954 = vmatpush1.bf16.msra.mxu0 %v5389
    %5955 = vmatprep.mubr.bf16.mxu0 %v4226
    %5956 = vmatmul.mubr.bf16.gmra.mrb[0].mxu0 %v4225
    %v5957 = vpop.f32.mrb[0].mxu0
    %v5958 = vadd.f32 %v5917, %v5957
    %v5959 = vpop.f32.mrb[0].mxu0
    %v5960 = vadd.f32 %v5919, %v5959
    %v5961 = vpop.f32.mrb[0].mxu0
    %v5962 = vpop.f32.mrb[0].mxu0
    %5963 = vdwg.mxu0
    %5964 = vmatprep.subr.bf16.mxu0 %v5394
    %5965 = vmatpush1.bf16.msra.mxu0 %v5393
    %5966 = vmatprep.subr.bf16.mxu0 %v5398
    %5967 = vmatpush1.bf16.msra.mxu0 %v5397
    %5968 = vmatprep.subr.bf16.mxu0 %v5402
    %5969 = vmatpush1.bf16.msra.mxu0 %v5401
    %5970 = vmatprep.subr.bf16.mxu0 %v5406
    %5971 = vmatpush1.bf16.msra.mxu0 %v5405
    %5972 = vmatprep.subr.bf16.mxu0 %v5410
    %5973 = vmatpush1.bf16.msra.mxu0 %v5409
    %5974 = vmatprep.subr.bf16.mxu0 %v5414
    %5975 = vmatpush1.bf16.msra.mxu0 %v5413
    %5976 = vmatprep.subr.bf16.mxu0 %v5418
    %5977 = vmatpush1.bf16.msra.mxu0 %v5417
    %5978 = vmatprep.subr.bf16.mxu0 %v5422
    %5979 = vmatpush1.bf16.msra.mxu0 %v5421
    %5980 = vmatprep.subr.bf16.mxu0 %v5426
    %5981 = vmatpush1.bf16.msra.mxu0 %v5425
    %5982 = vmatprep.subr.bf16.mxu0 %v5430
    %5983 = vmatpush1.bf16.msra.mxu0 %v5429
    %5984 = vmatprep.subr.bf16.mxu0 %v5434
    %5985 = vmatpush1.bf16.msra.mxu0 %v5433
    %5986 = vmatprep.subr.bf16.mxu0 %v5438
    %5987 = vmatpush1.bf16.msra.mxu0 %v5437
    %5988 = vmatprep.subr.bf16.mxu0 %v5442
    %5989 = vmatpush1.bf16.msra.mxu0 %v5441
    %5990 = vmatprep.subr.bf16.mxu0 %v5446
    %5991 = vmatpush1.bf16.msra.mxu0 %v5445
    %5992 = vmatprep.subr.bf16.mxu0 %v5450
    %5993 = vmatpush1.bf16.msra.mxu0 %v5449
    %5994 = vmatprep.subr.bf16.mxu0 %v5454
    %5995 = vmatpush1.bf16.msra.mxu0 %v5453
    %5996 = vmatprep.mubr.bf16.mxu0 %v4228
    %5997 = vmatmul.mubr.bf16.gmra.mrb[0].mxu0 %v4227
    %v5998 = vpop.f32.mrb[0].mxu0
    %v5999 = vadd.f32 %v5958, %v5998
    %v6000 = vpop.f32.mrb[0].mxu0
    %v6001 = vadd.f32 %v5960, %v6000
    %v6002 = vpop.f32.mrb[0].mxu0
    %v6003 = vpop.f32.mrb[0].mxu0
    %6004 = vdwg.mxu0
    %6005 = vmatprep.subr.bf16.mxu0 %v5458
    %6006 = vmatpush1.bf16.msra.mxu0 %v5457
    %6007 = vmatprep.subr.bf16.mxu0 %v5462
    %6008 = vmatpush1.bf16.msra.mxu0 %v5461
    %6009 = vmatprep.subr.bf16.mxu0 %v5466
    %6010 = vmatpush1.bf16.msra.mxu0 %v5465
    %6011 = vmatprep.subr.bf16.mxu0 %v5470
    %6012 = vmatpush1.bf16.msra.mxu0 %v5469
    %6013 = vmatprep.subr.bf16.mxu0 %v5474
    %6014 = vmatpush1.bf16.msra.mxu0 %v5473
    %6015 = vmatprep.subr.bf16.mxu0 %v5478
    %6016 = vmatpush1.bf16.msra.mxu0 %v5477
    %6017 = vmatprep.subr.bf16.mxu0 %v5482
    %6018 = vmatpush1.bf16.msra.mxu0 %v5481
    %6019 = vmatprep.subr.bf16.mxu0 %v5486
    %6020 = vmatpush1.bf16.msra.mxu0 %v5485
    %6021 = vmatprep.subr.bf16.mxu0 %v5490
    %6022 = vmatpush1.bf16.msra.mxu0 %v5489
    %6023 = vmatprep.subr.bf16.mxu0 %v5494
    %6024 = vmatpush1.bf16.msra.mxu0 %v5493
    %6025 = vmatprep.subr.bf16.mxu0 %v5498
    %6026 = vmatpush1.bf16.msra.mxu0 %v5497
    %6027 = vmatprep.subr.bf16.mxu0 %v5502
    %6028 = vmatpush1.bf16.msra.mxu0 %v5501
    %6029 = vmatprep.subr.bf16.mxu0 %v5506
    %6030 = vmatpush1.bf16.msra.mxu0 %v5505
    %6031 = vmatprep.subr.bf16.mxu0 %v5510
    %6032 = vmatpush1.bf16.msra.mxu0 %v5509
    %6033 = vmatprep.subr.bf16.mxu0 %v5514
    %6034 = vmatpush1.bf16.msra.mxu0 %v5513
    %6035 = vmatprep.subr.bf16.mxu0 %v5518
    %6036 = vmatpush1.bf16.msra.mxu0 %v5517
    %6037 = vmatprep.mubr.bf16.mxu0 %v4230
    %6038 = vmatmul.mubr.bf16.gmra.mrb[0].mxu0 %v4229
    %v6039 = vpop.f32.mrb[0].mxu0
    %v6040 = vadd.f32 %v5999, %v6039
    %v6041 = vpop.f32.mrb[0].mxu0
    %v6042 = vadd.f32 %v6001, %v6041
    %v6043 = vpop.f32.mrb[0].mxu0
    %v6044 = vpop.f32.mrb[0].mxu0
    %6045 = vdwg.mxu0
    %6046 = vmatprep.subr.bf16.mxu0 %v5204
    %6047 = vmatpush1.bf16.msra.mxu0 %v5203
    %6048 = vmatprep.subr.bf16.mxu0 %v5208
    %6049 = vmatpush1.bf16.msra.mxu0 %v5207
    %6050 = vmatprep.subr.bf16.mxu0 %v5212
    %6051 = vmatpush1.bf16.msra.mxu0 %v5211
    %6052 = vmatprep.subr.bf16.mxu0 %v5216
    %6053 = vmatpush1.bf16.msra.mxu0 %v5215
    %6054 = vmatprep.subr.bf16.mxu0 %v5220
    %6055 = vmatpush1.bf16.msra.mxu0 %v5219
    %6056 = vmatprep.subr.bf16.mxu0 %v5224
    %6057 = vmatpush1.bf16.msra.mxu0 %v5223
    %6058 = vmatprep.subr.bf16.mxu0 %v5228
    %6059 = vmatpush1.bf16.msra.mxu0 %v5227
    %6060 = vmatprep.subr.bf16.mxu0 %v5232
    %6061 = vmatpush1.bf16.msra.mxu0 %v5231
    %6062 = vmatprep.subr.bf16.mxu0 %v5236
    %6063 = vmatpush1.bf16.msra.mxu0 %v5235
    %6064 = vmatprep.subr.bf16.mxu0 %v5240
    %6065 = vmatpush1.bf16.msra.mxu0 %v5239
    %6066 = vmatprep.subr.bf16.mxu0 %v5244
    %6067 = vmatpush1.bf16.msra.mxu0 %v5243
    %6068 = vmatprep.subr.bf16.mxu0 %v5248
    %6069 = vmatpush1.bf16.msra.mxu0 %v5247
    %6070 = vmatprep.subr.bf16.mxu0 %v5252
    %6071 = vmatpush1.bf16.msra.mxu0 %v5251
    %6072 = vmatprep.subr.bf16.mxu0 %v5256
    %6073 = vmatpush1.bf16.msra.mxu0 %v5255
    %6074 = vmatprep.subr.bf16.mxu0 %v5260
    %6075 = vmatpush1.bf16.msra.mxu0 %v5259
    %6076 = vmatprep.subr.bf16.mxu0 %v5264
    %6077 = vmatpush1.bf16.msra.mxu0 %v5263
    %6078 = vmatprep.mubr.bf16.mxu0 %v4222
    %6079 = vmatmul.mubr.bf16.gmra.mrb[0].mxu0 %v4221
    %v6080 = vpop.f32.mrb[0].mxu0
    %v6081 = vadd.f32 %v2109, %v6080
    %v6082 = vpop.f32.mrb[0].mxu0
    %v6083 = vadd.f32 %v2113, %v6082
    %v6084 = vpop.f32.mrb[0].mxu0
    %v6085 = vpop.f32.mrb[0].mxu0
    %6086 = vdwg.mxu0
    %6087 = vmatprep.subr.bf16.mxu0 %v5268
    %6088 = vmatpush1.bf16.msra.mxu0 %v5267
    %6089 = vmatprep.subr.bf16.mxu0 %v5272
    %6090 = vmatpush1.bf16.msra.mxu0 %v5271
    %6091 = vmatprep.subr.bf16.mxu0 %v5276
    %6092 = vmatpush1.bf16.msra.mxu0 %v5275
    %6093 = vmatprep.subr.bf16.mxu0 %v5280
    %6094 = vmatpush1.bf16.msra.mxu0 %v5279
    %6095 = vmatprep.subr.bf16.mxu0 %v5284
    %6096 = vmatpush1.bf16.msra.mxu0 %v5283
    %6097 = vmatprep.subr.bf16.mxu0 %v5288
    %6098 = vmatpush1.bf16.msra.mxu0 %v5287
    %6099 = vmatprep.subr.bf16.mxu0 %v5292
    %6100 = vmatpush1.bf16.msra.mxu0 %v5291
    %6101 = vmatprep.subr.bf16.mxu0 %v5296
    %6102 = vmatpush1.bf16.msra.mxu0 %v5295
    %6103 = vmatprep.subr.bf16.mxu0 %v5300
    %6104 = vmatpush1.bf16.msra.mxu0 %v5299
    %6105 = vmatprep.subr.bf16.mxu0 %v5304
    %6106 = vmatpush1.bf16.msra.mxu0 %v5303
    %6107 = vmatprep.subr.bf16.mxu0 %v5308
    %6108 = vmatpush1.bf16.msra.mxu0 %v5307
    %6109 = vmatprep.subr.bf16.mxu0 %v5312
    %6110 = vmatpush1.bf16.msra.mxu0 %v5311
    %6111 = vmatprep.subr.bf16.mxu0 %v5316
    %6112 = vmatpush1.bf16.msra.mxu0 %v5315
    %6113 = vmatprep.subr.bf16.mxu0 %v5320
    %6114 = vmatpush1.bf16.msra.mxu0 %v5319
    %6115 = vmatprep.subr.bf16.mxu0 %v5324
    %6116 = vmatpush1.bf16.msra.mxu0 %v5323
    %6117 = vmatprep.subr.bf16.mxu0 %v5328
    %6118 = vmatpush1.bf16.msra.mxu0 %v5327
    %6119 = vmatprep.mubr.bf16.mxu0 %v4224
    %6120 = vmatmul.mubr.bf16.gmra.mrb[0].mxu0 %v4223
    %v6121 = vpop.f32.mrb[0].mxu0
    %v6122 = vadd.f32 %v6081, %v6121
    %v6123 = vpop.f32.mrb[0].mxu0
    %v6124 = vadd.f32 %v6083, %v6123
    %v6125 = vpop.f32.mrb[0].mxu0
    %v6126 = vpop.f32.mrb[0].mxu0
    %6127 = vdwg.mxu0
    %6128 = vmatprep.subr.bf16.mxu0 %v5332
    %6129 = vmatpush1.bf16.msra.mxu0 %v5331
    %6130 = vmatprep.subr.bf16.mxu0 %v5336
    %6131 = vmatpush1.bf16.msra.mxu0 %v5335
    %6132 = vmatprep.subr.bf16.mxu0 %v5340
    %6133 = vmatpush1.bf16.msra.mxu0 %v5339
    %6134 = vmatprep.subr.bf16.mxu0 %v5344
    %6135 = vmatpush1.bf16.msra.mxu0 %v5343
    %6136 = vmatprep.subr.bf16.mxu0 %v5348
    %6137 = vmatpush1.bf16.msra.mxu0 %v5347
    %6138 = vmatprep.subr.bf16.mxu0 %v5352
    %6139 = vmatpush1.bf16.msra.mxu0 %v5351
    %6140 = vmatprep.subr.bf16.mxu0 %v5356
    %6141 = vmatpush1.bf16.msra.mxu0 %v5355
    %6142 = vmatprep.subr.bf16.mxu0 %v5360
    %6143 = vmatpush1.bf16.msra.mxu0 %v5359
    %6144 = vmatprep.subr.bf16.mxu0 %v5364
    %6145 = vmatpush1.bf16.msra.mxu0 %v5363
    %6146 = vmatprep.subr.bf16.mxu0 %v5368
    %6147 = vmatpush1.bf16.msra.mxu0 %v5367
    %6148 = vmatprep.subr.bf16.mxu0 %v5372
    %6149 = vmatpush1.bf16.msra.mxu0 %v5371
    %6150 = vmatprep.subr.bf16.mxu0 %v5376
    %6151 = vmatpush1.bf16.msra.mxu0 %v5375
    %6152 = vmatprep.subr.bf16.mxu0 %v5380
    %6153 = vmatpush1.bf16.msra.mxu0 %v5379
    %6154 = vmatprep.subr.bf16.mxu0 %v5384
    %6155 = vmatpush1.bf16.msra.mxu0 %v5383
    %6156 = vmatprep.subr.bf16.mxu0 %v5388
    %6157 = vmatpush1.bf16.msra.mxu0 %v5387
    %6158 = vmatprep.subr.bf16.mxu0 %v5392
    %6159 = vmatpush1.bf16.msra.mxu0 %v5391
    %6160 = vmatprep.mubr.bf16.mxu0 %v4226
    %6161 = vmatmul.mubr.bf16.gmra.mrb[0].mxu0 %v4225
    %v6162 = vpop.f32.mrb[0].mxu0
    %v6163 = vadd.f32 %v6122, %v6162
    %v6164 = vpop.f32.mrb[0].mxu0
    %v6165 = vadd.f32 %v6124, %v6164
    %v6166 = vpop.f32.mrb[0].mxu0
    %v6167 = vpop.f32.mrb[0].mxu0
    %6168 = vdwg.mxu0
    %6169 = vmatprep.subr.bf16.mxu0 %v5396
    %6170 = vmatpush1.bf16.msra.mxu0 %v5395
    %6171 = vmatprep.subr.bf16.mxu0 %v5400
    %6172 = vmatpush1.bf16.msra.mxu0 %v5399
    %6173 = vmatprep.subr.bf16.mxu0 %v5404
    %6174 = vmatpush1.bf16.msra.mxu0 %v5403
    %6175 = vmatprep.subr.bf16.mxu0 %v5408
    %6176 = vmatpush1.bf16.msra.mxu0 %v5407
    %6177 = vmatprep.subr.bf16.mxu0 %v5412
    %6178 = vmatpush1.bf16.msra.mxu0 %v5411
    %6179 = vmatprep.subr.bf16.mxu0 %v5416
    %6180 = vmatpush1.bf16.msra.mxu0 %v5415
    %6181 = vmatprep.subr.bf16.mxu0 %v5420
    %6182 = vmatpush1.bf16.msra.mxu0 %v5419
    %6183 = vmatprep.subr.bf16.mxu0 %v5424
    %6184 = vmatpush1.bf16.msra.mxu0 %v5423
    %6185 = vmatprep.subr.bf16.mxu0 %v5428
    %6186 = vmatpush1.bf16.msra.mxu0 %v5427
    %6187 = vmatprep.subr.bf16.mxu0 %v5432
    %6188 = vmatpush1.bf16.msra.mxu0 %v5431
    %6189 = vmatprep.subr.bf16.mxu0 %v5436
    %6190 = vmatpush1.bf16.msra.mxu0 %v5435
    %6191 = vmatprep.subr.bf16.mxu0 %v5440
    %6192 = vmatpush1.bf16.msra.mxu0 %v5439
    %6193 = vmatprep.subr.bf16.mxu0 %v5444
    %6194 = vmatpush1.bf16.msra.mxu0 %v5443
    %6195 = vmatprep.subr.bf16.mxu0 %v5448
    %6196 = vmatpush1.bf16.msra.mxu0 %v5447
    %6197 = vmatprep.subr.bf16.mxu0 %v5452
    %6198 = vmatpush1.bf16.msra.mxu0 %v5451
    %6199 = vmatprep.subr.bf16.mxu0 %v5456
    %6200 = vmatpush1.bf16.msra.mxu0 %v5455
    %6201 = vmatprep.mubr.bf16.mxu0 %v4228
    %6202 = vmatmul.mubr.bf16.gmra.mrb[0].mxu0 %v4227
    %v6203 = vpop.f32.mrb[0].mxu0
    %v6204 = vadd.f32 %v6163, %v6203
    %v6205 = vpop.f32.mrb[0].mxu0
    %v6206 = vadd.f32 %v6165, %v6205
    %v6207 = vpop.f32.mrb[0].mxu0
    %v6208 = vpop.f32.mrb[0].mxu0
    %6209 = vdwg.mxu0
    %6210 = vmatprep.subr.bf16.mxu0 %v5460
    %6211 = vmatpush1.bf16.msra.mxu0 %v5459
    %6212 = vmatprep.subr.bf16.mxu0 %v5464
    %6213 = vmatpush1.bf16.msra.mxu0 %v5463
    %6214 = vmatprep.subr.bf16.mxu0 %v5468
    %6215 = vmatpush1.bf16.msra.mxu0 %v5467
    %6216 = vmatprep.subr.bf16.mxu0 %v5472
    %6217 = vmatpush1.bf16.msra.mxu0 %v5471
    %6218 = vmatprep.subr.bf16.mxu0 %v5476
    %6219 = vmatpush1.bf16.msra.mxu0 %v5475
    %6220 = vmatprep.subr.bf16.mxu0 %v5480
    %6221 = vmatpush1.bf16.msra.mxu0 %v5479
    %6222 = vmatprep.subr.bf16.mxu0 %v5484
    %6223 = vmatpush1.bf16.msra.mxu0 %v5483
    %6224 = vmatprep.subr.bf16.mxu0 %v5488
    %6225 = vmatpush1.bf16.msra.mxu0 %v5487
    %6226 = vmatprep.subr.bf16.mxu0 %v5492
    %6227 = vmatpush1.bf16.msra.mxu0 %v5491
    %6228 = vmatprep.subr.bf16.mxu0 %v5496
    %6229 = vmatpush1.bf16.msra.mxu0 %v5495
    %6230 = vmatprep.subr.bf16.mxu0 %v5500
    %6231 = vmatpush1.bf16.msra.mxu0 %v5499
    %6232 = vmatprep.subr.bf16.mxu0 %v5504
    %6233 = vmatpush1.bf16.msra.mxu0 %v5503
    %6234 = vmatprep.subr.bf16.mxu0 %v5508
    %6235 = vmatpush1.bf16.msra.mxu0 %v5507
    %6236 = vmatprep.subr.bf16.mxu0 %v5512
    %6237 = vmatpush1.bf16.msra.mxu0 %v5511
    %6238 = vmatprep.subr.bf16.mxu0 %v5516
    %6239 = vmatpush1.bf16.msra.mxu0 %v5515
    %6240 = vmatprep.subr.bf16.mxu0 %v5520
    %6241 = vmatpush1.bf16.msra.mxu0 %v5519
    %6242 = vmatprep.mubr.bf16.mxu0 %v4230
    %6243 = vmatmul.mubr.bf16.gmra.mrb[0].mxu0 %v4229
    %v6244 = vpop.f32.mrb[0].mxu0
    %v6245 = vadd.f32 %v6204, %v6244
    %v6246 = vpop.f32.mrb[0].mxu0
    %v6247 = vadd.f32 %v6206, %v6246
    %v6248 = vpop.f32.mrb[0].mxu0
    %v6249 = vpop.f32.mrb[0].mxu0
    %6250 = vdwg.mxu0
    %v6251 = vmax.f32 %v6040, 0.0
    %v6252 = vmax.f32 %v6042, 0.0
    %v6253 = vmax.f32 %v6245, 0.0
    %v6254 = vmax.f32 %v6247, 0.0
    %v6259 = vcombine.low %v6251, %v6252
    %v6260 = vcombine.low %v6253, %v6254
    %v6262 = vunpack.c.l.s4 1983009808
    %v6263 = vunpack.c.0.s8 %v6262
    %v6264 = vlaneseq
    %v6265 = vshrl.u32 %v6264, 7
    %v6266 = vsub.s32 %v6263, %v6265
    %v6267 = vrot.slane %v6259, %v6266
    %v6269 = vunpack.c.l.s4 1983009808
    %v6270 = vunpack.c.0.s8 %v6269
    %v6271 = vlaneseq
    %v6272 = vshrl.u32 %v6271, 7
    %v6273 = vsub.s32 %v6270, %v6272
    %v6274 = vrot.slane %v6260, %v6273
    %v6275 = vcombine.low %v6267, %v6274
    %6277 = vst [vmem:[#allocation2] sm:$0xff] %v6275
    // Predicated region
    $region14: #{tpu_custom_call.1} parent=1 // pred_check
      _
    $region15: #{tpu_custom_call.1} parent=1 // pred_check_branch
      %6279 = sbr.rel (0) target = $region17
    $region16: #{tpu_custom_call.1} parent=1 // pred_region
      %s6281 = ssub.s32 128, 128
      %6282 = vsyncadd [#allocation3], %s6281
      %s6284 = sshll.u32 [#allocation2], 4
      %s6285 = int_to_ptr.vmem [resolvable:$true] %s6284
      %6287 = dma.vmem_to_hbm [thread:$0]  %s6285, 128, %s3, [#allocation3]
    $region17: #{tpu_custom_call.1} parent=1 // pred_fallthru
      _
    // Predicated region
    $region18: #{tpu_custom_call.1} parent=1 // pred_check
      _
    $region19: #{tpu_custom_call.1} parent=1 // pred_check_branch
      %6289 = sbr.rel (0) target = $region21
    $region20: #{tpu_custom_call.1} parent=1 // pred_region
      %6290 = dma.done [#allocation3], 128
    $region21: #{tpu_custom_call.1} parent=1 // pred_fallthru
      _
    %6291 = vsyncpa [#allocation3], 1

</llo_original>
